<compile_context>
chip_gen: v7x
topology: tpu7x:2x2x1
jax: 0.10.0
libtpu: 0.0.40
codegen_flags: <defaults>
</compile_context>

<pallas_src>
import functools

import jax
import jax.numpy as jnp
from jax import lax
from jax.experimental import pallas as pl
from jax.experimental.pallas import tpu as pltpu


# ----------------------------------------------------------------------------
# small helpers
# ----------------------------------------------------------------------------
def _round_up(n, m):
    return ((n + m - 1) // m) * m


@functools.lru_cache(maxsize=None)
def _vmem_limit_bytes():
    # ~80% of per-core VMEM: ~51 MiB on v7x (64 MiB), ~102 MiB on v5e/v6e (128 MiB).
    try:
        cap = int(pltpu.get_tpu_info().vmem_capacity_bytes)
    except Exception:
        cap = 60 * 1024 * 1024          # conservative fallback (48 MiB limit), safe on v7x
    return int(cap * 0.8)


def _layernorm(x, w, b, eps=1e-5):
    """f32 LayerNorm over the last axis; (x - mu) computed once."""
    mu = jnp.mean(x, axis=-1, keepdims=True)
    xc = x - mu
    var = jnp.mean(xc * xc, axis=-1, keepdims=True)
    return xc * lax.rsqrt(var + eps) * w + b


# ----------------------------------------------------------------------------
# Kernel 1: all transformer layers.  grid = (batch_tiles, L)
# ----------------------------------------------------------------------------
def gpt_layers_kernel(x_ref,
                      ln1_w, ln1_b, w_qkv, b_qkv, w_ao, b_ao,
                      ln2_w, ln2_b, w_f1, b_f1, w_f2, b_f2,
                      h_out, h_scr, mask_scr, *, num_heads):
    l = pl.program_id(1)
    bt, S, D = x_ref.shape
    R = bt * S
    H = num_heads
    hd = D // H

    # First layer of each batch tile: load the residual stream into the resident f32 scratch
    # and build the additive causal mask once (identical for every layer).
    @pl.when(l == 0)
    def _():
        h_scr[...] = x_ref[...].reshape(R, D).astype(jnp.float32)
        row = lax.broadcasted_iota(jnp.int32, (S, S), 0)
        col = lax.broadcasted_iota(jnp.int32, (S, S), 1)
        mask_scr[...] = jnp.where(col > row, jnp.float32(-1e30), jnp.float32(0.0))

    h = h_scr[...]                                           # (R, D) f32 residual stream
    mask = mask_scr[...][None]                               # (1, S, S) additive causal mask

    # ---------------- self-attention block (norm_first=True) ----------------
    # 1/sqrt(hd) is folded into the packed Q weights/bias -> no per-layer scaling here.
    xn = _layernorm(h, ln1_w[0], ln1_b[0])
    qkv = jnp.dot(xn.astype(jnp.bfloat16), w_qkv[0],         # (R, 3D), pre-transposed weight
                  preferred_element_type=jnp.float32) + b_qkv[0]

    # TODO(synk): flash-tile over S / batch heads in one contraction at real (S, H) sizes;
    # per-head 3-D einsums keep the single-batch-dim dot lowering path at these toy shapes.
    ctx_heads = []
    for hi in range(H):
        qh = qkv[:, hi * hd:(hi + 1) * hd].reshape(bt, S, hd)
        kh = qkv[:, D + hi * hd:D + (hi + 1) * hd].reshape(bt, S, hd)
        vh = qkv[:, 2 * D + hi * hd:2 * D + (hi + 1) * hd].reshape(bt, S, hd)
        s = jnp.einsum('bqd,bkd->bqk', qh, kh,
                       preferred_element_type=jnp.float32) + mask
        s = s - jnp.max(s, axis=-1, keepdims=True)
        p = jnp.exp(s)
        p = p * pl.reciprocal(jnp.sum(p, axis=-1, keepdims=True), approx=True)
        ctx_heads.append(
            jnp.einsum('bqk,bkd->bqd', p, vh,
                       preferred_element_type=jnp.float32).reshape(R, hd))
    ctx = jnp.concatenate(ctx_heads, axis=-1)                # (R, D)

    attn = jnp.dot(ctx.astype(jnp.bfloat16), w_ao[0],
                   preferred_element_type=jnp.float32) + b_ao[0]
    h = h + attn

    # ---------------- feed-forward block (norm_first=True, ReLU) ----------------
    hn = _layernorm(h, ln2_w[0], ln2_b[0])
    ff = jnp.dot(hn.astype(jnp.bfloat16), w_f1[0],
                 preferred_element_type=jnp.float32) + b_f1[0]
    ff = jnp.maximum(ff, 0.0)
    ff = jnp.dot(ff.astype(jnp.bfloat16), w_f2[0],
                 preferred_element_type=jnp.float32) + b_f2[0]
    h = h + ff
    h_scr[...] = h

    # Emit the final hidden state (bf16) only after the last layer of this batch tile.
    @pl.when(l == pl.num_programs(1) - 1)
    def _():
        h_out[...] = h.reshape(bt, S, D).astype(h_out.dtype)


# ----------------------------------------------------------------------------
# Kernel 2: split output head, tiled over the (padded) vocab axis.
# grid = (batch_tiles, vocab_tiles)
# ----------------------------------------------------------------------------
def gpt_head_kernel(h_ref, mlp_w, mlp_b, cls_w, cls_b, word_w, word_b,
                    cls_o, word_o, m_scr):
    v = pl.program_id(1)
    bt, S, D = h_ref.shape

    # vocab tile 0 of each batch tile: shared head-MLP (+ReLU) and the vocab-independent
    # cls projection on the last token.
    @pl.when(v == 0)
    def _():
        m = jnp.dot(h_ref[...].reshape(bt * S, D), mlp_w[...],
                    preferred_element_type=jnp.float32) + mlp_b[...]
        m = jnp.maximum(m, 0.0)
        m_scr[...] = m.astype(jnp.bfloat16)
        cls_in = m.reshape(bt, S, D)[:, S - 1, :].astype(jnp.bfloat16)     # last token
        cls = jnp.dot(cls_in, cls_w[...],
                      preferred_element_type=jnp.float32) + cls_b[...]
        cls_o[...] = cls.reshape(bt, 1, cls_o.shape[-1]).astype(cls_o.dtype)

    # per-vocab-tile word projection over the first S-1 tokens (lane-dense bf16 store).
    word_in = m_scr[...].reshape(bt, S, D)[:, :S - 1, :].reshape(bt * (S - 1), D)
    word = jnp.dot(word_in, word_w[...],
                   preferred_element_type=jnp.float32) + word_b[...]
    word_o[...] = word.reshape(bt, S - 1, word_o.shape[-1]).astype(word_o.dtype)


# ----------------------------------------------------------------------------
# One-time parameter packing (call ONCE at model-load time, outside jit).
# ----------------------------------------------------------------------------
def pack_params(params, *, num_head, vocab_tile=None):
    layers = params['layers']
    dim = params['out']['mlp_w'].shape[1]
    hd = dim // num_head
    scale = 1.0 / float(hd) ** 0.5
    # Fold 1/sqrt(hd) into the Q third of the fused QKV projection (weight AND bias).
    qkv_scale = jnp.concatenate(
        [jnp.full((dim,), scale, jnp.float32), jnp.ones((2 * dim,), jnp.float32)])

    def stack_wT(name, colscale=None):
        w = jnp.stack([lp[name].T for lp in layers]).astype(jnp.float32)   # (L, in, out)
        if colscale is not None:
            w = w * colscale
        return w.astype(jnp.bfloat16)

    def stack_row(name, colscale=None):
        b = jnp.stack([lp[name].reshape(1, -1) for lp in layers]).astype(jnp.float32)
        if colscale is not None:
            b = b * colscale
        return b

    layer_p = dict(
        ln1_w=stack_row('ln1_w'), ln1_b=stack_row('ln1_b'),
        w_qkv=stack_wT('in_w', qkv_scale), b_qkv=stack_row('in_b', qkv_scale),
        w_ao=stack_wT('out_w'), b_ao=stack_row('out_b'),
        ln2_w=stack_row('ln2_w'), ln2_b=stack_row('ln2_b'),
        w_f1=stack_wT('l1_w'), b_f1=stack_row('l1_b'),
        w_f2=stack_wT('l2_w'), b_f2=stack_row('l2_b'),
    )

    op = params['out']
    num_cls = op['cls_w'].shape[0]
    num_vocab = op['word_w'].shape[0]
    c_pad = _round_up(num_cls, 128)
    v128 = _round_up(num_vocab, 128)
    tv = vocab_tile if vocab_tile is not None else (512 if v128 >= 512 else v128)
    v_pad = _round_up(num_vocab, tv)

    def pad_wT(w, n_pad):
        return jnp.pad(w, ((0, n_pad - w.shape[0]), (0, 0))).T.astype(jnp.bfloat16)

    def pad_b(b, n_pad):
        return jnp.pad(b, (0, n_pad - b.shape[0])).reshape(1, -1).astype(jnp.float32)

    head_p = dict(
        mlp_w=op['mlp_w'].T.astype(jnp.bfloat16),
        mlp_b=op['mlp_b'].reshape(1, -1).astype(jnp.float32),
        cls_w=pad_wT(op['cls_w'], c_pad), cls_b=pad_b(op['cls_b'], c_pad),
        word_w=pad_wT(op['word_w'], v_pad), word_b=pad_b(op['word_b'], v_pad),
    )

    return dict(
        cls_embedding=params['cls_embedding'].astype(jnp.float32),
        word_embedding=params['word_embedding'].astype(jnp.float32),
        position_embedding=params['position_embedding'].astype(jnp.float32),
        layers=layer_p, head=head_p,
    )


# ----------------------------------------------------------------------------
# pallas_call wrappers
# ----------------------------------------------------------------------------
def _layers_call(h0, lp, *, num_head, batch_tile):
    B, S, D = h0.shape
    bt = batch_tile
    nb = B // bt
    L = lp['w_qkv'].shape[0]
    F = lp['w_f1'].shape[-1]
    hd = D // num_head

    def wspec(shape):                      # varies with l -> double-buffered layer prefetch
        nd = len(shape)
        return pl.BlockSpec((1,) + tuple(shape[1:]),
                            lambda b, l: (l,) + (0,) * (nd - 1))

    args = (h0,
            lp['ln1_w'], lp['ln1_b'], lp['w_qkv'], lp['b_qkv'], lp['w_ao'], lp['b_ao'],
            lp['ln2_w'], lp['ln2_b'], lp['w_f1'], lp['b_f1'], lp['w_f2'], lp['b_f2'])
    in_specs = [pl.BlockSpec((bt, S, D), lambda b, l: (b, 0, 0))]
    in_specs += [wspec(a.shape) for a in args[1:]]

    flops = nb * L * (2 * bt * S * D * (3 * D + D + 2 * F)
                      + 4 * bt * num_head * S * S * hd)
    transcendentals = nb * L * bt * num_head * S * S
    bytes_accessed = (int(h0.size) * 4 + B * S * D * 2
                      + nb * sum(int(a.size) * a.dtype.itemsize for a in args[1:]))

    kern = functools.partial(gpt_layers_kernel, num_heads=num_head)
    return pl.pallas_call(
        kern,
        out_shape=jax.ShapeDtypeStruct((B, S, D), jnp.bfloat16),
        grid=(nb, L),
        in_specs=in_specs,
        out_specs=pl.BlockSpec((bt, S, D), lambda b, l: (b, 0, 0)),
        scratch_shapes=[pltpu.VMEM((bt * S, D), jnp.float32),   # resident residual stream
                        pltpu.VMEM((S, S), jnp.float32)],       # additive causal mask
        compiler_params=pltpu.CompilerParams(
            dimension_semantics=("parallel", "arbitrary"),
            vmem_limit_bytes=_vmem_limit_bytes()),
        cost_estimate=pl.CostEstimate(flops=int(flops),
                                      transcendentals=int(transcendentals),
                                      bytes_accessed=int(bytes_accessed)),
    )(*args)


def _head_call(h_final, hp, *, batch_tile):
    B, S, D = h_final.shape
    bt = batch_tile
    nb = B // bt
    Cp = hp['cls_w'].shape[-1]
    Vp = hp['word_w'].shape[-1]
    tv = Vp if Vp < 512 else 512           # matches pack_params' padding (Vp % tv == 0)
    nv = Vp // tv

    in_specs = [
        pl.BlockSpec((bt, S, D), lambda b, v: (b, 0, 0)),
        pl.BlockSpec(hp['mlp_w'].shape, lambda b, v: (0, 0)),
        pl.BlockSpec(hp['mlp_b'].shape, lambda b, v: (0, 0)),
        pl.BlockSpec(hp['cls_w'].shape, lambda b, v: (0, 0)),
        pl.BlockSpec(hp['cls_b'].shape, lambda b, v: (0, 0)),
        pl.BlockSpec((D, tv), lambda b, v: (0, v)),
        pl.BlockSpec((1, tv), lambda b, v: (0, v)),
    ]
    out_specs = (pl.BlockSpec((bt, 1, Cp), lambda b, v: (b, 0, 0)),
                 pl.BlockSpec((bt, S - 1, tv), lambda b, v: (b, 0, v)))
    out_shape = (jax.ShapeDtypeStruct((B, 1, Cp), jnp.float32),
                 jax.ShapeDtypeStruct((B, S - 1, Vp), jnp.bfloat16))

    flops = nb * (2 * bt * S * D * D + 2 * bt * D * Cp) + 2 * B * (S - 1) * D * Vp
    bytes_accessed = (B * S * D * 2 + nb * (D * D + D * Cp) * 2 + nb * D * Vp * 2
                      + B * Cp * 4 + B * (S - 1) * Vp * 2)

    return pl.pallas_call(
        gpt_head_kernel,
        out_shape=out_shape,
        grid=(nb, nv),
        in_specs=in_specs,
        out_specs=out_specs,
        scratch_shapes=[pltpu.VMEM((bt * S, D), jnp.bfloat16)],  # head-MLP activations
        compiler_params=pltpu.CompilerParams(
            dimension_semantics=("parallel", "arbitrary"),
            vmem_limit_bytes=_vmem_limit_bytes()),
        cost_estimate=pl.CostEstimate(flops=int(flops), transcendentals=0,
                                      bytes_accessed=int(bytes_accessed)),
    )(h_final, hp['mlp_w'], hp['mlp_b'], hp['cls_w'], hp['cls_b'],
      hp['word_w'], hp['word_b'])


# ----------------------------------------------------------------------------
# Full GPT forward (embedding gathers stay in plain-JAX glue; weights are pre-packed)
# ----------------------------------------------------------------------------
@functools.partial(jax.jit,
                   static_argnames=('num_head', 'num_cls', 'num_vocab', 'batch_tile'))
def gpt_forward(packed, sen, label, *, num_head, num_cls, num_vocab, batch_tile=None):
    cls_emb = jnp.take(packed['cls_embedding'], label, axis=0)           # (B, D)
    sen_emb = jnp.take(packed['word_embedding'], sen, axis=0)            # (B, L, D)
    h0 = jnp.concatenate([cls_emb[:, None, :], sen_emb], axis=1)         # (B, L+1, D)
    h0 = (h0 + packed['position_embedding'][None, :, :]).astype(jnp.float32)

    B = h0.shape[0]
    if batch_tile is None:
        # two batch tiles -> the "parallel" grid axis feeds both v7x TensorCores
        batch_tile = B // 2 if (B >= 2 and B % 2 == 0) else B
    assert B % batch_tile == 0

    h_final = _layers_call(h0, packed['layers'],
                           num_head=num_head, batch_tile=batch_tile)
    cls_pad, word_pad = _head_call(h_final, packed['head'], batch_tile=batch_tile)

    cls_logit = cls_pad[:, 0, :num_cls]                                   # strip lane padding
    word_logits = word_pad[:, :, :num_vocab].astype(jnp.float32)
    return cls_logit, word_logits


# ----------------------------------------------------------------------------
# Pure-JAX f32 reference (mirrors the PyTorch module, eval mode) for correctness check
# ----------------------------------------------------------------------------
def _ln_ref(x, w, b, eps=1e-5):
    mu = jnp.mean(x, axis=-1, keepdims=True)
    var = jnp.mean((x - mu) ** 2, axis=-1, keepdims=True)
    return (x - mu) / jnp.sqrt(var + eps) * w + b


def reference_forward(params, sen, label, num_head):
    cls_emb = params['cls_embedding'][label]
    sen_emb = params['word_embedding'][sen]
    h = jnp.concatenate([cls_emb[:, None, :], sen_emb], axis=1) + params['position_embedding'][None]
    B, S, D = h.shape
    hd = D // num_head
    mask = jnp.triu(jnp.ones((S, S), bool), k=1)
    for lp in params['layers']:
        xn = _ln_ref(h, lp['ln1_w'], lp['ln1_b'])
        qkv = xn @ lp['in_w'].T + lp['in_b']
        q, k, v = jnp.split(qkv, 3, axis=-1)
        q = q.reshape(B, S, num_head, hd).transpose(0, 2, 1, 3)
        k = k.reshape(B, S, num_head, hd).transpose(0, 2, 1, 3)
        v = v.reshape(B, S, num_head, hd).transpose(0, 2, 1, 3)
        s = (q @ jnp.swapaxes(k, -1, -2)) / jnp.sqrt(jnp.float32(hd))
        s = jnp.where(mask[None, None], -jnp.inf, s)
        p = jax.nn.softmax(s, axis=-1)
        ctx = (p @ v).transpose(0, 2, 1, 3).reshape(B, S, D)
        h = h + ctx @ lp['out_w'].T + lp['out_b']
        hn = _ln_ref(h, lp['ln2_w'], lp['ln2_b'])
        ff = jax.nn.relu(hn @ lp['l1_w'].T + lp['l1_b'])
        h = h + ff @ lp['l2_w'].T + lp['l2_b']
    op = params['out']
    m = jax.nn.relu(h @ op['mlp_w'].T + op['mlp_b'])
    cls = m[:, -1, :] @ op['cls_w'].T + op['cls_b']
    word = m[:, :-1, :] @ op['word_w'].T + op['word_b']
    return cls, word


# ----------------------------------------------------------------------------
# Deterministic parameter init (same shapes as the PyTorch module's __init__)
# ----------------------------------------------------------------------------
def init_params(key, *, num_cls, num_vocab, dim, sen_len, num_layer, num_head):
    keys = iter(jax.random.split(key, 8 + 12 * num_layer + 6))
    nrm = lambda shape: (0.02 * jax.random.normal(next(keys), shape)).astype(jnp.float32)

    params = {
        'cls_embedding': nrm((num_cls, dim)),
        'word_embedding': nrm((num_vocab, dim)),
        'position_embedding': nrm((sen_len + 1, dim)),
        'layers': [],
        'out': {
            'mlp_w': nrm((dim, dim)), 'mlp_b': nrm((dim,)),
            'cls_w': nrm((num_cls, dim)), 'cls_b': nrm((num_cls,)),
            'word_w': nrm((num_vocab, dim)), 'word_b': nrm((num_vocab,)),
        },
    }
    ff = 4 * dim
    for _ in range(num_layer):
        params['layers'].append({
            'ln1_w': jnp.ones((dim,), jnp.float32), 'ln1_b': jnp.zeros((dim,), jnp.float32),
            'in_w': nrm((3 * dim, dim)), 'in_b': nrm((3 * dim,)),
            'out_w': nrm((dim, dim)), 'out_b': nrm((dim,)),
            'ln2_w': jnp.ones((dim,), jnp.float32), 'ln2_b': jnp.zeros((dim,), jnp.float32),
            'l1_w': nrm((ff, dim)), 'l1_b': nrm((ff,)),
            'l2_w': nrm((dim, ff)), 'l2_b': nrm((dim,)),
        })
    return params


if __name__ == "__main__":
    B, sen_len, dim, num_head, num_layer = 2, 8, 32, 4, 2
    num_cls, num_vocab = 4, 16

    key = jax.random.PRNGKey(0)
    kp, ks, kl = jax.random.split(key, 3)
    params = init_params(kp, num_cls=num_cls, num_vocab=num_vocab, dim=dim,
                         sen_len=sen_len, num_layer=num_layer, num_head=num_head)

    # one-time weight packing at "model-load" time (outside the jitted forward)
    packed = pack_params(params, num_head=num_head)

    sen = jax.random.randint(ks, (B, sen_len), 0, num_vocab, dtype=jnp.int32)
    label = jax.random.randint(kl, (B,), 0, num_cls, dtype=jnp.int32)

    cls_logit, word_logits = gpt_forward(packed, sen, label, num_head=num_head,
                                         num_cls=num_cls, num_vocab=num_vocab)
    jax.block_until_ready((cls_logit, word_logits))

    assert cls_logit.shape == (B, num_cls), cls_logit.shape
    assert word_logits.shape == (B, sen_len, num_vocab), word_logits.shape
    assert bool(jnp.all(jnp.isfinite(cls_logit))) and bool(jnp.all(jnp.isfinite(word_logits)))

    # numerical check against the pure-JAX f32 reference (bf16 matmuls/outputs -> loose tol)
    cls_ref, word_ref = reference_forward(params, sen, label, num_head)
    assert bool(jnp.allclose(cls_logit, cls_ref, atol=2e-2, rtol=2e-2))
    assert bool(jnp.allclose(word_logits, word_ref, atol=2e-2, rtol=2e-2))

    print("KERNEL_OK")
</pallas_src>

<mosaic_0001>
module attributes {stable_mosaic.version = 11 : i64} {
  func.func @gpt_head_kernel(%arg0: i32, %arg1: i32, %arg2: memref<1x9x32xbf16, #tpu.memory_space<vmem>>, %arg3: memref<32x32xbf16, #tpu.memory_space<vmem>>, %arg4: memref<1x32xf32, #tpu.memory_space<vmem>>, %arg5: memref<32x128xbf16, #tpu.memory_space<vmem>>, %arg6: memref<1x128xf32, #tpu.memory_space<vmem>>, %arg7: memref<32x128xbf16, #tpu.memory_space<vmem>>, %arg8: memref<1x128xf32, #tpu.memory_space<vmem>>, %arg9: memref<1x1x128xf32, #tpu.memory_space<vmem>>, %arg10: memref<1x8x128xbf16, #tpu.memory_space<vmem>>, %arg11: memref<9x32xbf16, #tpu.memory_space<vmem>>) attributes {dimension_semantics = [#tpu.dimension_semantics<parallel>, #tpu.dimension_semantics<arbitrary>], iteration_bounds = array<i64: 2, 1>, scalar_prefetch = 0 : i64, scratch_operands = 1 : i64, tpu.core_type = #tpu.core_type<tc>, window_params = [{transform_indices = @transform_0, window_bounds = array<i64: 1, 9, 32>}, {pipeline_mode = #tpu.pipeline_mode<synchronous>, transform_indices = @transform_1, window_bounds = array<i64: 32, 32>}, {pipeline_mode = #tpu.pipeline_mode<synchronous>, transform_indices = @transform_2, window_bounds = array<i64: 1, 32>}, {pipeline_mode = #tpu.pipeline_mode<synchronous>, transform_indices = @transform_3, window_bounds = array<i64: 32, 128>}, {pipeline_mode = #tpu.pipeline_mode<synchronous>, transform_indices = @transform_4, window_bounds = array<i64: 1, 128>}, {transform_indices = @transform_5, window_bounds = array<i64: 32, 128>}, {transform_indices = @transform_6, window_bounds = array<i64: 1, 128>}, {transform_indices = @transform_7, window_bounds = array<i64: 1, 1, 128>}, {transform_indices = @transform_8, window_bounds = array<i64: 1, 8, 128>}]} {
    %c0_i32 = arith.constant 0 : i32
    %0 = arith.cmpi eq, %arg1, %c0_i32 : i32
    %1 = arith.extui %0 : i1 to i32
    %c0_i32_0 = arith.constant 0 : i32
    %2 = arith.cmpi ne, %1, %c0_i32_0 : i32
    scf.if %2 {
      %c0_9 = arith.constant 0 : index
      %c0_10 = arith.constant 0 : index
      %c0_11 = arith.constant 0 : index
      %15 = vector.load %arg2[%c0_9, %c0_10, %c0_11] : memref<1x9x32xbf16, #tpu.memory_space<vmem>>, vector<1x9x32xbf16>
      %16 = vector.shape_cast %15 : vector<1x9x32xbf16> to vector<9x32xbf16>
      %c0_12 = arith.constant 0 : index
      %c0_13 = arith.constant 0 : index
      %17 = vector.load %arg3[%c0_12, %c0_13] : memref<32x32xbf16, #tpu.memory_space<vmem>>, vector<32x32xbf16>
      %cst_14 = arith.constant dense<0.000000e+00> : vector<9x32xf32>
      %18 = tpu.matmul %16, %17, %cst_14 {dimension_numbers = #tpu.dot_dimension_numbers<[1], [0], [0], [1], [0, 0, 1, 1], [], []>} : vector<9x32xbf16>, vector<32x32xbf16>, vector<9x32xf32> -> vector<9x32xf32>
      %c0_15 = arith.constant 0 : index
      %c0_16 = arith.constant 0 : index
      %19 = vector.load %arg4[%c0_15, %c0_16] : memref<1x32xf32, #tpu.memory_space<vmem>>, vector<1x32xf32>
      %20 = vector.broadcast %19 : vector<1x32xf32> to vector<9x32xf32>
      %21 = arith.addf %18, %20 : vector<9x32xf32>
      %cst_17 = arith.constant 0.000000e+00 : f32
      %22 = vector.broadcast %cst_17 : f32 to vector<9x32xf32>
      %23 = arith.maximumf %21, %22 : vector<9x32xf32>
      %24 = arith.truncf %23 : vector<9x32xf32> to vector<9x32xbf16>
      %c0_18 = arith.constant 0 : index
      %c0_19 = arith.constant 0 : index
      %25 = vector.load %arg11[%c0_18, %c0_19] : memref<9x32xbf16, #tpu.memory_space<vmem>>, vector<9x32xbf16>
      tpu.vector_store %arg11[%c0_18, %c0_19], %24 {strides = array<i32>} : memref<9x32xbf16, #tpu.memory_space<vmem>>, vector<9x32xbf16>,
      %26 = vector.shape_cast %23 : vector<9x32xf32> to vector<1x9x32xf32>
      %27 = vector.extract_strided_slice %26 {offsets = [0, 8, 0], sizes = [1, 1, 32], strides = [1, 1, 1]} : vector<1x9x32xf32> to vector<1x1x32xf32>
      %28 = vector.shape_cast %27 : vector<1x1x32xf32> to vector<1x32xf32>
      %29 = arith.truncf %28 : vector<1x32xf32> to vector<1x32xbf16>
      %c0_20 = arith.constant 0 : index
      %c0_21 = arith.constant 0 : index
      %30 = vector.load %arg5[%c0_20, %c0_21] : memref<32x128xbf16, #tpu.memory_space<vmem>>, vector<32x128xbf16>
      %cst_22 = arith.constant dense<0.000000e+00> : vector<1x128xf32>
      %31 = tpu.matmul %29, %30, %cst_22 {dimension_numbers = #tpu.dot_dimension_numbers<[1], [0], [0], [1], [0, 0, 1, 1], [], []>} : vector<1x32xbf16>, vector<32x128xbf16>, vector<1x128xf32> -> vector<1x128xf32>
      %c0_23 = arith.constant 0 : index
      %c0_24 = arith.constant 0 : index
      %32 = vector.load %arg6[%c0_23, %c0_24] : memref<1x128xf32, #tpu.memory_space<vmem>>, vector<1x128xf32>
      %33 = arith.addf %31, %32 : vector<1x128xf32>
      %34 = vector.shape_cast %33 : vector<1x128xf32> to vector<1x1x128xf32>
      %c0_25 = arith.constant 0 : index
      %c0_26 = arith.constant 0 : index
      %c0_27 = arith.constant 0 : index
      %35 = vector.load %arg9[%c0_25, %c0_26, %c0_27] : memref<1x1x128xf32, #tpu.memory_space<vmem>>, vector<1x1x128xf32>
      tpu.vector_store %arg9[%c0_25, %c0_26, %c0_27], %34 {strides = array<i32>} : memref<1x1x128xf32, #tpu.memory_space<vmem>>, vector<1x1x128xf32>,
    } else {
    }
    %c0 = arith.constant 0 : index
    %c0_1 = arith.constant 0 : index
    %3 = vector.load %arg11[%c0, %c0_1] : memref<9x32xbf16, #tpu.memory_space<vmem>>, vector<9x32xbf16>
    %4 = vector.shape_cast %3 : vector<9x32xbf16> to vector<1x9x32xbf16>
    %5 = vector.extract_strided_slice %4 {offsets = [0, 0, 0], sizes = [1, 8, 32], strides = [1, 1, 1]} : vector<1x9x32xbf16> to vector<1x8x32xbf16>
    %6 = vector.shape_cast %5 : vector<1x8x32xbf16> to vector<8x32xbf16>
    %c0_2 = arith.constant 0 : index
    %c0_3 = arith.constant 0 : index
    %7 = vector.load %arg7[%c0_2, %c0_3] : memref<32x128xbf16, #tpu.memory_space<vmem>>, vector<32x128xbf16>
    %cst = arith.constant dense<0.000000e+00> : vector<8x128xf32>
    %8 = tpu.matmul %6, %7, %cst {dimension_numbers = #tpu.dot_dimension_numbers<[1], [0], [0], [1], [0, 0, 1, 1], [], []>} : vector<8x32xbf16>, vector<32x128xbf16>, vector<8x128xf32> -> vector<8x128xf32>
    %c0_4 = arith.constant 0 : index
    %c0_5 = arith.constant 0 : index
    %9 = vector.load %arg8[%c0_4, %c0_5] : memref<1x128xf32, #tpu.memory_space<vmem>>, vector<1x128xf32>
    %10 = vector.broadcast %9 : vector<1x128xf32> to vector<8x128xf32>
    %11 = arith.addf %8, %10 : vector<8x128xf32>
    %12 = vector.shape_cast %11 : vector<8x128xf32> to vector<1x8x128xf32>
    %13 = arith.truncf %12 : vector<1x8x128xf32> to vector<1x8x128xbf16>
    %c0_6 = arith.constant 0 : index
    %c0_7 = arith.constant 0 : index
    %c0_8 = arith.constant 0 : index
    %14 = vector.load %arg10[%c0_6, %c0_7, %c0_8] : memref<1x8x128xbf16, #tpu.memory_space<vmem>>, vector<1x8x128xbf16>
    tpu.vector_store %arg10[%c0_6, %c0_7, %c0_8], %13 {strides = array<i32>} : memref<1x8x128xbf16, #tpu.memory_space<vmem>>, vector<1x8x128xbf16>,
    return
  }
  func.func @transform_0(%arg0: i32, %arg1: i32) -> (i32, i32, i32) {
    %c0_i32 = arith.constant 0 : i32
    %c0_i32_0 = arith.constant 0 : i32
    %c0_i32_1 = arith.constant 0 : i32
    return %arg0, %c0_i32, %c0_i32_0 : i32, i32, i32
  }
  func.func @transform_1(%arg0: i32, %arg1: i32) -> (i32, i32) {
    %c0_i32 = arith.constant 0 : i32
    %c0_i32_0 = arith.constant 0 : i32
    %c0_i32_1 = arith.constant 0 : i32
    return %c0_i32, %c0_i32_0 : i32, i32
  }
  func.func @transform_2(%arg0: i32, %arg1: i32) -> (i32, i32) {
    %c0_i32 = arith.constant 0 : i32
    %c0_i32_0 = arith.constant 0 : i32
    %c0_i32_1 = arith.constant 0 : i32
    return %c0_i32, %c0_i32_0 : i32, i32
  }
  func.func @transform_3(%arg0: i32, %arg1: i32) -> (i32, i32) {
    %c0_i32 = arith.constant 0 : i32
    %c0_i32_0 = arith.constant 0 : i32
    %c0_i32_1 = arith.constant 0 : i32
    return %c0_i32, %c0_i32_0 : i32, i32
  }
  func.func @transform_4(%arg0: i32, %arg1: i32) -> (i32, i32) {
    %c0_i32 = arith.constant 0 : i32
    %c0_i32_0 = arith.constant 0 : i32
    %c0_i32_1 = arith.constant 0 : i32
    return %c0_i32, %c0_i32_0 : i32, i32
  }
  func.func @transform_5(%arg0: i32, %arg1: i32) -> (i32, i32) {
    %c0_i32 = arith.constant 0 : i32
    %c0_i32_0 = arith.constant 0 : i32
    return %c0_i32, %arg1 : i32, i32
  }
  func.func @transform_6(%arg0: i32, %arg1: i32) -> (i32, i32) {
    %c0_i32 = arith.constant 0 : i32
    %c0_i32_0 = arith.constant 0 : i32
    return %c0_i32, %arg1 : i32, i32
  }
  func.func @transform_7(%arg0: i32, %arg1: i32) -> (i32, i32, i32) {
    %c0_i32 = arith.constant 0 : i32
    %c0_i32_0 = arith.constant 0 : i32
    %c0_i32_1 = arith.constant 0 : i32
    return %arg0, %c0_i32, %c0_i32_0 : i32, i32, i32
  }
  func.func @transform_8(%arg0: i32, %arg1: i32) -> (i32, i32, i32) {
    %c0_i32 = arith.constant 0 : i32
    %c0_i32_0 = arith.constant 0 : i32
    return %arg0, %c0_i32, %arg1 : i32, i32, i32
  }
}

module attributes {stable_mosaic.version = 11 : i64} {
  func.func @gpt_layers_kernel(%arg0: i32, %arg1: i32, %arg2: memref<1x9x32xf32, #tpu.memory_space<vmem>>, %arg3: memref<1x1x32xf32, #tpu.memory_space<vmem>>, %arg4: memref<1x1x32xf32, #tpu.memory_space<vmem>>, %arg5: memref<1x32x96xbf16, #tpu.memory_space<vmem>>, %arg6: memref<1x1x96xf32, #tpu.memory_space<vmem>>, %arg7: memref<1x32x32xbf16, #tpu.memory_space<vmem>>, %arg8: memref<1x1x32xf32, #tpu.memory_space<vmem>>, %arg9: memref<1x1x32xf32, #tpu.memory_space<vmem>>, %arg10: memref<1x1x32xf32, #tpu.memory_space<vmem>>, %arg11: memref<1x32x128xbf16, #tpu.memory_space<vmem>>, %arg12: memref<1x1x128xf32, #tpu.memory_space<vmem>>, %arg13: memref<1x128x32xbf16, #tpu.memory_space<vmem>>, %arg14: memref<1x1x32xf32, #tpu.memory_space<vmem>>, %arg15: memref<1x9x32xbf16, #tpu.memory_space<vmem>>, %arg16: memref<9x32xf32, #tpu.memory_space<vmem>>, %arg17: memref<9x9xf32, #tpu.memory_space<vmem>>) attributes {dimension_semantics = [#tpu.dimension_semantics<parallel>, #tpu.dimension_semantics<arbitrary>], iteration_bounds = array<i64: 2, 2>, scalar_prefetch = 0 : i64, scratch_operands = 2 : i64, tpu.core_type = #tpu.core_type<tc>, window_params = [{transform_indices = @transform_0, window_bounds = array<i64: 1, 9, 32>}, {transform_indices = @transform_1, window_bounds = array<i64: 1, 1, 32>}, {transform_indices = @transform_2, window_bounds = array<i64: 1, 1, 32>}, {transform_indices = @transform_3, window_bounds = array<i64: 1, 32, 96>}, {transform_indices = @transform_4, window_bounds = array<i64: 1, 1, 96>}, {transform_indices = @transform_5, window_bounds = array<i64: 1, 32, 32>}, {transform_indices = @transform_6, window_bounds = array<i64: 1, 1, 32>}, {transform_indices = @transform_7, window_bounds = array<i64: 1, 1, 32>}, {transform_indices = @transform_8, window_bounds = array<i64: 1, 1, 32>}, {transform_indices = @transform_9, window_bounds = array<i64: 1, 32, 128>}, {transform_indices = @transform_10, window_bounds = array<i64: 1, 1, 128>}, {transform_indices = @transform_11, window_bounds = array<i64: 1, 128, 32>}, {transform_indices = @transform_12, window_bounds = array<i64: 1, 1, 32>}, {transform_indices = @transform_13, window_bounds = array<i64: 1, 9, 32>}]} {
    %c0_i32 = arith.constant 0 : i32
    %0 = arith.cmpi eq, %arg1, %c0_i32 : i32
    %1 = arith.extui %0 : i1 to i32
    %c0_i32_0 = arith.constant 0 : i32
    %2 = arith.cmpi ne, %1, %c0_i32_0 : i32
    scf.if %2 {
      %c0_73 = arith.constant 0 : index
      %c0_74 = arith.constant 0 : index
      %c0_75 = arith.constant 0 : index
      %175 = vector.load %arg2[%c0_73, %c0_74, %c0_75] : memref<1x9x32xf32, #tpu.memory_space<vmem>>, vector<1x9x32xf32>
      %176 = vector.shape_cast %175 : vector<1x9x32xf32> to vector<9x32xf32>
      %c0_76 = arith.constant 0 : index
      %c0_77 = arith.constant 0 : index
      %177 = vector.load %arg16[%c0_76, %c0_77] : memref<9x32xf32, #tpu.memory_space<vmem>>, vector<9x32xf32>
      tpu.vector_store %arg16[%c0_76, %c0_77], %176 {strides = array<i32>} : memref<9x32xf32, #tpu.memory_space<vmem>>, vector<9x32xf32>,
      %178 = tpu.iota {dimensions = array<i32: 0>} : vector<9x9xi32>
      %179 = tpu.iota {dimensions = array<i32: 1>} : vector<9x9xi32>
      %180 = arith.cmpi sgt, %179, %178 : vector<9x9xi32>
      %cst_78 = arith.constant -1.000000e+30 : f32
      %cst_79 = arith.constant 0.000000e+00 : f32
      %181 = vector.broadcast %cst_78 : f32 to vector<9x9xf32>
      %182 = vector.broadcast %cst_79 : f32 to vector<9x9xf32>
      %183 = arith.select %180, %181, %182 : vector<9x9xi1>, vector<9x9xf32>
      %c0_80 = arith.constant 0 : index
      %c0_81 = arith.constant 0 : index
      %184 = vector.load %arg17[%c0_80, %c0_81] : memref<9x9xf32, #tpu.memory_space<vmem>>, vector<9x9xf32>
      tpu.vector_store %arg17[%c0_80, %c0_81], %183 {strides = array<i32>} : memref<9x9xf32, #tpu.memory_space<vmem>>, vector<9x9xf32>,
    } else {
    }
    %c0 = arith.constant 0 : index
    %c0_1 = arith.constant 0 : index
    %3 = vector.load %arg16[%c0, %c0_1] : memref<9x32xf32, #tpu.memory_space<vmem>>, vector<9x32xf32>
    %c0_2 = arith.constant 0 : index
    %c0_3 = arith.constant 0 : index
    %4 = vector.load %arg17[%c0_2, %c0_3] : memref<9x9xf32, #tpu.memory_space<vmem>>, vector<9x9xf32>
    %5 = vector.shape_cast %4 : vector<9x9xf32> to vector<1x9x9xf32>
    %c0_4 = arith.constant 0 : index
    %c0_5 = arith.constant 0 : index
    %c0_6 = arith.constant 0 : index
    %6 = vector.load %arg3[%c0_4, %c0_5, %c0_6] : memref<1x1x32xf32, #tpu.memory_space<vmem>>, vector<1x1x32xf32>
    %7 = vector.shape_cast %6 : vector<1x1x32xf32> to vector<1x32xf32>
    %c0_7 = arith.constant 0 : index
    %c0_8 = arith.constant 0 : index
    %c0_9 = arith.constant 0 : index
    %8 = vector.load %arg4[%c0_7, %c0_8, %c0_9] : memref<1x1x32xf32, #tpu.memory_space<vmem>>, vector<1x1x32xf32>
    %9 = vector.shape_cast %8 : vector<1x1x32xf32> to vector<1x32xf32>
    %cst = arith.constant dense<0.000000e+00> : vector<9xf32>
    %10 = vector.multi_reduction <add>, %3, %cst [1] : vector<9x32xf32> to vector<9xf32>
    %11 = vector.shape_cast %10 : vector<9xf32> to vector<9x1xf32>
    %cst_10 = arith.constant 3.200000e+01 : f32
    %12 = vector.broadcast %cst_10 : f32 to vector<9x1xf32>
    %13 = arith.divf %11, %12 : vector<9x1xf32>
    %14 = vector.broadcast %13 : vector<9x1xf32> to vector<9x32xf32>
    %15 = arith.subf %3, %14 : vector<9x32xf32>
    %16 = arith.mulf %15, %15 : vector<9x32xf32>
    %cst_11 = arith.constant dense<0.000000e+00> : vector<9xf32>
    %17 = vector.multi_reduction <add>, %16, %cst_11 [1] : vector<9x32xf32> to vector<9xf32>
    %18 = vector.shape_cast %17 : vector<9xf32> to vector<9x1xf32>
    %cst_12 = arith.constant 3.200000e+01 : f32
    %19 = vector.broadcast %cst_12 : f32 to vector<9x1xf32>
    %20 = arith.divf %18, %19 : vector<9x1xf32>
    %cst_13 = arith.constant 9.99999974E-6 : f32
    %21 = vector.broadcast %cst_13 : f32 to vector<9x1xf32>
    %22 = arith.addf %20, %21 : vector<9x1xf32>
    %23 = math.rsqrt %22 : vector<9x1xf32>
    %24 = vector.broadcast %23 : vector<9x1xf32> to vector<9x32xf32>
    %25 = arith.mulf %15, %24 : vector<9x32xf32>
    %26 = vector.broadcast %7 : vector<1x32xf32> to vector<9x32xf32>
    %27 = arith.mulf %25, %26 : vector<9x32xf32>
    %28 = vector.broadcast %9 : vector<1x32xf32> to vector<9x32xf32>
    %29 = arith.addf %27, %28 : vector<9x32xf32>
    %30 = arith.truncf %29 : vector<9x32xf32> to vector<9x32xbf16>
    %c0_14 = arith.constant 0 : index
    %c0_15 = arith.constant 0 : index
    %c0_16 = arith.constant 0 : index
    %31 = vector.load %arg5[%c0_14, %c0_15, %c0_16] : memref<1x32x96xbf16, #tpu.memory_space<vmem>>, vector<1x32x96xbf16>
    %32 = vector.shape_cast %31 : vector<1x32x96xbf16> to vector<32x96xbf16>
    %cst_17 = arith.constant dense<0.000000e+00> : vector<9x96xf32>
    %33 = tpu.matmul %30, %32, %cst_17 {dimension_numbers = #tpu.dot_dimension_numbers<[1], [0], [0], [1], [0, 0, 1, 1], [], []>} : vector<9x32xbf16>, vector<32x96xbf16>, vector<9x96xf32> -> vector<9x96xf32>
    %c0_18 = arith.constant 0 : index
    %c0_19 = arith.constant 0 : index
    %c0_20 = arith.constant 0 : index
    %34 = vector.load %arg6[%c0_18, %c0_19, %c0_20] : memref<1x1x96xf32, #tpu.memory_space<vmem>>, vector<1x1x96xf32>
    %35 = vector.shape_cast %34 : vector<1x1x96xf32> to vector<1x96xf32>
    %36 = vector.broadcast %35 : vector<1x96xf32> to vector<9x96xf32>
    %37 = arith.addf %33, %36 : vector<9x96xf32>
    %38 = vector.extract_strided_slice %37 {offsets = [0, 0], sizes = [9, 8], strides = [1, 1]} : vector<9x96xf32> to vector<9x8xf32>
    %39 = vector.shape_cast %38 : vector<9x8xf32> to vector<1x9x8xf32>
    %40 = vector.extract_strided_slice %37 {offsets = [0, 32], sizes = [9, 8], strides = [1, 1]} : vector<9x96xf32> to vector<9x8xf32>
    %41 = vector.shape_cast %40 : vector<9x8xf32> to vector<1x9x8xf32>
    %42 = vector.extract_strided_slice %37 {offsets = [0, 64], sizes = [9, 8], strides = [1, 1]} : vector<9x96xf32> to vector<9x8xf32>
    %43 = vector.shape_cast %42 : vector<9x8xf32> to vector<1x9x8xf32>
    "tpu.trace_start"() <{level = 10 : i32, message = "bqd,bkd->bqk"}> : () -> ()
    %cst_21 = arith.constant dense<0.000000e+00> : vector<1x9x9xf32>
    %44 = tpu.matmul %39, %41, %cst_21 {dimension_numbers = #tpu.dot_dimension_numbers<[2], [2], [1], [1], [0, 0, 0, 1, 1, 1], [0], [0]>} : vector<1x9x8xf32>, vector<1x9x8xf32>, vector<1x9x9xf32> -> vector<1x9x9xf32>
    "tpu.trace_stop"() : () -> ()
    %45 = arith.addf %44, %5 : vector<1x9x9xf32>
    %cst_22 = arith.constant dense<0xFF800000> : vector<1x9xf32>
    %46 = vector.multi_reduction <maximumf>, %45, %cst_22 [2] : vector<1x9x9xf32> to vector<1x9xf32>
    %47 = vector.shape_cast %46 : vector<1x9xf32> to vector<1x9x1xf32>
    %48 = vector.broadcast %47 : vector<1x9x1xf32> to vector<1x9x9xf32>
    %49 = arith.subf %45, %48 : vector<1x9x9xf32>
    %50 = math.exp %49 : vector<1x9x9xf32>
    %cst_23 = arith.constant dense<0.000000e+00> : vector<1x9xf32>
    %51 = vector.multi_reduction <add>, %50, %cst_23 [2] : vector<1x9x9xf32> to vector<1x9xf32>
    %52 = vector.shape_cast %51 : vector<1x9xf32> to vector<1x9x1xf32>
    %53 = tpu.reciprocal %52 {approx = true} : vector<1x9x1xf32> -> vector<1x9x1xf32>
    %54 = vector.broadcast %53 : vector<1x9x1xf32> to vector<1x9x9xf32>
    %55 = arith.mulf %50, %54 : vector<1x9x9xf32>
    "tpu.trace_start"() <{level = 10 : i32, message = "bqk,bkd->bqd"}> : () -> ()
    %cst_24 = arith.constant dense<0.000000e+00> : vector<1x9x8xf32>
    %56 = tpu.matmul %55, %43, %cst_24 {dimension_numbers = #tpu.dot_dimension_numbers<[2], [1], [1], [2], [0, 0, 0, 1, 1, 2], [0], [0]>} : vector<1x9x9xf32>, vector<1x9x8xf32>, vector<1x9x8xf32> -> vector<1x9x8xf32>
    "tpu.trace_stop"() : () -> ()
    %57 = vector.shape_cast %56 : vector<1x9x8xf32> to vector<9x8xf32>
    %58 = vector.extract_strided_slice %37 {offsets = [0, 8], sizes = [9, 8], strides = [1, 1]} : vector<9x96xf32> to vector<9x8xf32>
    %59 = vector.shape_cast %58 : vector<9x8xf32> to vector<1x9x8xf32>
    %60 = vector.extract_strided_slice %37 {offsets = [0, 40], sizes = [9, 8], strides = [1, 1]} : vector<9x96xf32> to vector<9x8xf32>
    %61 = vector.shape_cast %60 : vector<9x8xf32> to vector<1x9x8xf32>
    %62 = vector.extract_strided_slice %37 {offsets = [0, 72], sizes = [9, 8], strides = [1, 1]} : vector<9x96xf32> to vector<9x8xf32>
    %63 = vector.shape_cast %62 : vector<9x8xf32> to vector<1x9x8xf32>
    "tpu.trace_start"() <{level = 10 : i32, message = "bqd,bkd->bqk"}> : () -> ()
    %cst_25 = arith.constant dense<0.000000e+00> : vector<1x9x9xf32>
    %64 = tpu.matmul %59, %61, %cst_25 {dimension_numbers = #tpu.dot_dimension_numbers<[2], [2], [1], [1], [0, 0, 0, 1, 1, 1], [0], [0]>} : vector<1x9x8xf32>, vector<1x9x8xf32>, vector<1x9x9xf32> -> vector<1x9x9xf32>
    "tpu.trace_stop"() : () -> ()
    %65 = arith.addf %64, %5 : vector<1x9x9xf32>
    %cst_26 = arith.constant dense<0xFF800000> : vector<1x9xf32>
    %66 = vector.multi_reduction <maximumf>, %65, %cst_26 [2] : vector<1x9x9xf32> to vector<1x9xf32>
    %67 = vector.shape_cast %66 : vector<1x9xf32> to vector<1x9x1xf32>
    %68 = vector.broadcast %67 : vector<1x9x1xf32> to vector<1x9x9xf32>
    %69 = arith.subf %65, %68 : vector<1x9x9xf32>
    %70 = math.exp %69 : vector<1x9x9xf32>
    %cst_27 = arith.constant dense<0.000000e+00> : vector<1x9xf32>
    %71 = vector.multi_reduction <add>, %70, %cst_27 [2] : vector<1x9x9xf32> to vector<1x9xf32>
    %72 = vector.shape_cast %71 : vector<1x9xf32> to vector<1x9x1xf32>
    %73 = tpu.reciprocal %72 {approx = true} : vector<1x9x1xf32> -> vector<1x9x1xf32>
    %74 = vector.broadcast %73 : vector<1x9x1xf32> to vector<1x9x9xf32>
    %75 = arith.mulf %70, %74 : vector<1x9x9xf32>
    "tpu.trace_start"() <{level = 10 : i32, message = "bqk,bkd->bqd"}> : () -> ()
    %cst_28 = arith.constant dense<0.000000e+00> : vector<1x9x8xf32>
    %76 = tpu.matmul %75, %63, %cst_28 {dimension_numbers = #tpu.dot_dimension_numbers<[2], [1], [1], [2], [0, 0, 0, 1, 1, 2], [0], [0]>} : vector<1x9x9xf32>, vector<1x9x8xf32>, vector<1x9x8xf32> -> vector<1x9x8xf32>
    "tpu.trace_stop"() : () -> ()
    %77 = vector.shape_cast %76 : vector<1x9x8xf32> to vector<9x8xf32>
    %78 = vector.extract_strided_slice %37 {offsets = [0, 16], sizes = [9, 8], strides = [1, 1]} : vector<9x96xf32> to vector<9x8xf32>
    %79 = vector.shape_cast %78 : vector<9x8xf32> to vector<1x9x8xf32>
    %80 = vector.extract_strided_slice %37 {offsets = [0, 48], sizes = [9, 8], strides = [1, 1]} : vector<9x96xf32> to vector<9x8xf32>
    %81 = vector.shape_cast %80 : vector<9x8xf32> to vector<1x9x8xf32>
    %82 = vector.extract_strided_slice %37 {offsets = [0, 80], sizes = [9, 8], strides = [1, 1]} : vector<9x96xf32> to vector<9x8xf32>
    %83 = vector.shape_cast %82 : vector<9x8xf32> to vector<1x9x8xf32>
    "tpu.trace_start"() <{level = 10 : i32, message = "bqd,bkd->bqk"}> : () -> ()
    %cst_29 = arith.constant dense<0.000000e+00> : vector<1x9x9xf32>
    %84 = tpu.matmul %79, %81, %cst_29 {dimension_numbers = #tpu.dot_dimension_numbers<[2], [2], [1], [1], [0, 0, 0, 1, 1, 1], [0], [0]>} : vector<1x9x8xf32>, vector<1x9x8xf32>, vector<1x9x9xf32> -> vector<1x9x9xf32>
    "tpu.trace_stop"() : () -> ()
    %85 = arith.addf %84, %5 : vector<1x9x9xf32>
    %cst_30 = arith.constant dense<0xFF800000> : vector<1x9xf32>
    %86 = vector.multi_reduction <maximumf>, %85, %cst_30 [2] : vector<1x9x9xf32> to vector<1x9xf32>
    %87 = vector.shape_cast %86 : vector<1x9xf32> to vector<1x9x1xf32>
    %88 = vector.broadcast %87 : vector<1x9x1xf32> to vector<1x9x9xf32>
    %89 = arith.subf %85, %88 : vector<1x9x9xf32>
    %90 = math.exp %89 : vector<1x9x9xf32>
    %cst_31 = arith.constant dense<0.000000e+00> : vector<1x9xf32>
    %91 = vector.multi_reduction <add>, %90, %cst_31 [2] : vector<1x9x9xf32> to vector<1x9xf32>
    %92 = vector.shape_cast %91 : vector<1x9xf32> to vector<1x9x1xf32>
    %93 = tpu.reciprocal %92 {approx = true} : vector<1x9x1xf32> -> vector<1x9x1xf32>
    %94 = vector.broadcast %93 : vector<1x9x1xf32> to vector<1x9x9xf32>
    %95 = arith.mulf %90, %94 : vector<1x9x9xf32>
    "tpu.trace_start"() <{level = 10 : i32, message = "bqk,bkd->bqd"}> : () -> ()
    %cst_32 = arith.constant dense<0.000000e+00> : vector<1x9x8xf32>
    %96 = tpu.matmul %95, %83, %cst_32 {dimension_numbers = #tpu.dot_dimension_numbers<[2], [1], [1], [2], [0, 0, 0, 1, 1, 2], [0], [0]>} : vector<1x9x9xf32>, vector<1x9x8xf32>, vector<1x9x8xf32> -> vector<1x9x8xf32>
    "tpu.trace_stop"() : () -> ()
    %97 = vector.shape_cast %96 : vector<1x9x8xf32> to vector<9x8xf32>
    %98 = vector.extract_strided_slice %37 {offsets = [0, 24], sizes = [9, 8], strides = [1, 1]} : vector<9x96xf32> to vector<9x8xf32>
    %99 = vector.shape_cast %98 : vector<9x8xf32> to vector<1x9x8xf32>
    %100 = vector.extract_strided_slice %37 {offsets = [0, 56], sizes = [9, 8], strides = [1, 1]} : vector<9x96xf32> to vector<9x8xf32>
    %101 = vector.shape_cast %100 : vector<9x8xf32> to vector<1x9x8xf32>
    %102 = vector.extract_strided_slice %37 {offsets = [0, 88], sizes = [9, 8], strides = [1, 1]} : vector<9x96xf32> to vector<9x8xf32>
    %103 = vector.shape_cast %102 : vector<9x8xf32> to vector<1x9x8xf32>
    "tpu.trace_start"() <{level = 10 : i32, message = "bqd,bkd->bqk"}> : () -> ()
    %cst_33 = arith.constant dense<0.000000e+00> : vector<1x9x9xf32>
    %104 = tpu.matmul %99, %101, %cst_33 {dimension_numbers = #tpu.dot_dimension_numbers<[2], [2], [1], [1], [0, 0, 0, 1, 1, 1], [0], [0]>} : vector<1x9x8xf32>, vector<1x9x8xf32>, vector<1x9x9xf32> -> vector<1x9x9xf32>
    "tpu.trace_stop"() : () -> ()
    %105 = arith.addf %104, %5 : vector<1x9x9xf32>
    %cst_34 = arith.constant dense<0xFF800000> : vector<1x9xf32>
    %106 = vector.multi_reduction <maximumf>, %105, %cst_34 [2] : vector<1x9x9xf32> to vector<1x9xf32>
    %107 = vector.shape_cast %106 : vector<1x9xf32> to vector<1x9x1xf32>
    %108 = vector.broadcast %107 : vector<1x9x1xf32> to vector<1x9x9xf32>
    %109 = arith.subf %105, %108 : vector<1x9x9xf32>
    %110 = math.exp %109 : vector<1x9x9xf32>
    %cst_35 = arith.constant dense<0.000000e+00> : vector<1x9xf32>
    %111 = vector.multi_reduction <add>, %110, %cst_35 [2] : vector<1x9x9xf32> to vector<1x9xf32>
    %112 = vector.shape_cast %111 : vector<1x9xf32> to vector<1x9x1xf32>
    %113 = tpu.reciprocal %112 {approx = true} : vector<1x9x1xf32> -> vector<1x9x1xf32>
    %114 = vector.broadcast %113 : vector<1x9x1xf32> to vector<1x9x9xf32>
    %115 = arith.mulf %110, %114 : vector<1x9x9xf32>
    "tpu.trace_start"() <{level = 10 : i32, message = "bqk,bkd->bqd"}> : () -> ()
    %cst_36 = arith.constant dense<0.000000e+00> : vector<1x9x8xf32>
    %116 = tpu.matmul %115, %103, %cst_36 {dimension_numbers = #tpu.dot_dimension_numbers<[2], [1], [1], [2], [0, 0, 0, 1, 1, 2], [0], [0]>} : vector<1x9x9xf32>, vector<1x9x8xf32>, vector<1x9x8xf32> -> vector<1x9x8xf32>
    "tpu.trace_stop"() : () -> ()
    %117 = vector.shape_cast %116 : vector<1x9x8xf32> to vector<9x8xf32>
    %118 = tpu.concatenate %57, %77, %97, %117 in 1 : vector<9x8xf32>, vector<9x8xf32>, vector<9x8xf32>, vector<9x8xf32> -> vector<9x32xf32>
    %119 = arith.truncf %118 : vector<9x32xf32> to vector<9x32xbf16>
    %c0_37 = arith.constant 0 : index
    %c0_38 = arith.constant 0 : index
    %c0_39 = arith.constant 0 : index
    %120 = vector.load %arg7[%c0_37, %c0_38, %c0_39] : memref<1x32x32xbf16, #tpu.memory_space<vmem>>, vector<1x32x32xbf16>
    %121 = vector.shape_cast %120 : vector<1x32x32xbf16> to vector<32x32xbf16>
    %cst_40 = arith.constant dense<0.000000e+00> : vector<9x32xf32>
    %122 = tpu.matmul %119, %121, %cst_40 {dimension_numbers = #tpu.dot_dimension_numbers<[1], [0], [0], [1], [0, 0, 1, 1], [], []>} : vector<9x32xbf16>, vector<32x32xbf16>, vector<9x32xf32> -> vector<9x32xf32>
    %c0_41 = arith.constant 0 : index
    %c0_42 = arith.constant 0 : index
    %c0_43 = arith.constant 0 : index
    %123 = vector.load %arg8[%c0_41, %c0_42, %c0_43] : memref<1x1x32xf32, #tpu.memory_space<vmem>>, vector<1x1x32xf32>
    %124 = vector.shape_cast %123 : vector<1x1x32xf32> to vector<1x32xf32>
    %125 = vector.broadcast %124 : vector<1x32xf32> to vector<9x32xf32>
    %126 = arith.addf %122, %125 : vector<9x32xf32>
    %127 = arith.addf %3, %126 : vector<9x32xf32>
    %c0_44 = arith.constant 0 : index
    %c0_45 = arith.constant 0 : index
    %c0_46 = arith.constant 0 : index
    %128 = vector.load %arg9[%c0_44, %c0_45, %c0_46] : memref<1x1x32xf32, #tpu.memory_space<vmem>>, vector<1x1x32xf32>
    %129 = vector.shape_cast %128 : vector<1x1x32xf32> to vector<1x32xf32>
    %c0_47 = arith.constant 0 : index
    %c0_48 = arith.constant 0 : index
    %c0_49 = arith.constant 0 : index
    %130 = vector.load %arg10[%c0_47, %c0_48, %c0_49] : memref<1x1x32xf32, #tpu.memory_space<vmem>>, vector<1x1x32xf32>
    %131 = vector.shape_cast %130 : vector<1x1x32xf32> to vector<1x32xf32>
    %cst_50 = arith.constant dense<0.000000e+00> : vector<9xf32>
    %132 = vector.multi_reduction <add>, %127, %cst_50 [1] : vector<9x32xf32> to vector<9xf32>
    %133 = vector.shape_cast %132 : vector<9xf32> to vector<9x1xf32>
    %cst_51 = arith.constant 3.200000e+01 : f32
    %134 = vector.broadcast %cst_51 : f32 to vector<9x1xf32>
    %135 = arith.divf %133, %134 : vector<9x1xf32>
    %136 = vector.broadcast %135 : vector<9x1xf32> to vector<9x32xf32>
    %137 = arith.subf %127, %136 : vector<9x32xf32>
    %138 = arith.mulf %137, %137 : vector<9x32xf32>
    %cst_52 = arith.constant dense<0.000000e+00> : vector<9xf32>
    %139 = vector.multi_reduction <add>, %138, %cst_52 [1] : vector<9x32xf32> to vector<9xf32>
    %140 = vector.shape_cast %139 : vector<9xf32> to vector<9x1xf32>
    %cst_53 = arith.constant 3.200000e+01 : f32
    %141 = vector.broadcast %cst_53 : f32 to vector<9x1xf32>
    %142 = arith.divf %140, %141 : vector<9x1xf32>
    %cst_54 = arith.constant 9.99999974E-6 : f32
    %143 = vector.broadcast %cst_54 : f32 to vector<9x1xf32>
    %144 = arith.addf %142, %143 : vector<9x1xf32>
    %145 = math.rsqrt %144 : vector<9x1xf32>
    %146 = vector.broadcast %145 : vector<9x1xf32> to vector<9x32xf32>
    %147 = arith.mulf %137, %146 : vector<9x32xf32>
    %148 = vector.broadcast %129 : vector<1x32xf32> to vector<9x32xf32>
    %149 = arith.mulf %147, %148 : vector<9x32xf32>
    %150 = vector.broadcast %131 : vector<1x32xf32> to vector<9x32xf32>
    %151 = arith.addf %149, %150 : vector<9x32xf32>
    %152 = arith.truncf %151 : vector<9x32xf32> to vector<9x32xbf16>
    %c0_55 = arith.constant 0 : index
    %c0_56 = arith.constant 0 : index
    %c0_57 = arith.constant 0 : index
    %153 = vector.load %arg11[%c0_55, %c0_56, %c0_57] : memref<1x32x128xbf16, #tpu.memory_space<vmem>>, vector<1x32x128xbf16>
    %154 = vector.shape_cast %153 : vector<1x32x128xbf16> to vector<32x128xbf16>
    %cst_58 = arith.constant dense<0.000000e+00> : vector<9x128xf32>
    %155 = tpu.matmul %152, %154, %cst_58 {dimension_numbers = #tpu.dot_dimension_numbers<[1], [0], [0], [1], [0, 0, 1, 1], [], []>} : vector<9x32xbf16>, vector<32x128xbf16>, vector<9x128xf32> -> vector<9x128xf32>
    %c0_59 = arith.constant 0 : index
    %c0_60 = arith.constant 0 : index
    %c0_61 = arith.constant 0 : index
    %156 = vector.load %arg12[%c0_59, %c0_60, %c0_61] : memref<1x1x128xf32, #tpu.memory_space<vmem>>, vector<1x1x128xf32>
    %157 = vector.shape_cast %156 : vector<1x1x128xf32> to vector<1x128xf32>
    %158 = vector.broadcast %157 : vector<1x128xf32> to vector<9x128xf32>
    %159 = arith.addf %155, %158 : vector<9x128xf32>
    %cst_62 = arith.constant 0.000000e+00 : f32
    %160 = vector.broadcast %cst_62 : f32 to vector<9x128xf32>
    %161 = arith.maximumf %159, %160 : vector<9x128xf32>
    %162 = arith.truncf %161 : vector<9x128xf32> to vector<9x128xbf16>
    %c0_63 = arith.constant 0 : index
    %c0_64 = arith.constant 0 : index
    %c0_65 = arith.constant 0 : index
    %163 = vector.load %arg13[%c0_63, %c0_64, %c0_65] : memref<1x128x32xbf16, #tpu.memory_space<vmem>>, vector<1x128x32xbf16>
    %164 = vector.shape_cast %163 : vector<1x128x32xbf16> to vector<128x32xbf16>
    %cst_66 = arith.constant dense<0.000000e+00> : vector<9x32xf32>
    %165 = tpu.matmul %162, %164, %cst_66 {dimension_numbers = #tpu.dot_dimension_numbers<[1], [0], [0], [1], [0, 0, 1, 1], [], []>} : vector<9x128xbf16>, vector<128x32xbf16>, vector<9x32xf32> -> vector<9x32xf32>
    %c0_67 = arith.constant 0 : index
    %c0_68 = arith.constant 0 : index
    %c0_69 = arith.constant 0 : index
    %166 = vector.load %arg14[%c0_67, %c0_68, %c0_69] : memref<1x1x32xf32, #tpu.memory_space<vmem>>, vector<1x1x32xf32>
    %167 = vector.shape_cast %166 : vector<1x1x32xf32> to vector<1x32xf32>
    %168 = vector.broadcast %167 : vector<1x32xf32> to vector<9x32xf32>
    %169 = arith.addf %165, %168 : vector<9x32xf32>
    %170 = arith.addf %127, %169 : vector<9x32xf32>
    %c0_70 = arith.constant 0 : index
    %c0_71 = arith.constant 0 : index
    %171 = vector.load %arg16[%c0_70, %c0_71] : memref<9x32xf32, #tpu.memory_space<vmem>>, vector<9x32xf32>
    tpu.vector_store %arg16[%c0_70, %c0_71], %170 {strides = array<i32>} : memref<9x32xf32, #tpu.memory_space<vmem>>, vector<9x32xf32>,
    %c1_i32 = arith.constant 1 : i32
    %172 = arith.cmpi eq, %arg1, %c1_i32 : i32
    %173 = arith.extui %172 : i1 to i32
    %c0_i32_72 = arith.constant 0 : i32
    %174 = arith.cmpi ne, %173, %c0_i32_72 : i32
    scf.if %174 {
      %175 = vector.shape_cast %170 : vector<9x32xf32> to vector<1x9x32xf32>
      %176 = arith.truncf %175 : vector<1x9x32xf32> to vector<1x9x32xbf16>
      %c0_73 = arith.constant 0 : index
      %c0_74 = arith.constant 0 : index
      %c0_75 = arith.constant 0 : index
      %177 = vector.load %arg15[%c0_73, %c0_74, %c0_75] : memref<1x9x32xbf16, #tpu.memory_space<vmem>>, vector<1x9x32xbf16>
      tpu.vector_store %arg15[%c0_73, %c0_74, %c0_75], %176 {strides = array<i32>} : memref<1x9x32xbf16, #tpu.memory_space<vmem>>, vector<1x9x32xbf16>,
    } else {
    }
    return
  }
  func.func @transform_0(%arg0: i32, %arg1: i32) -> (i32, i32, i32) {
    %c0_i32 = arith.constant 0 : i32
    %c0_i32_0 = arith.constant 0 : i32
    %c0_i32_1 = arith.constant 0 : i32
    return %arg0, %c0_i32, %c0_i32_0 : i32, i32, i32
  }
  func.func @transform_1(%arg0: i32, %arg1: i32) -> (i32, i32, i32) {
    %c0_i32 = arith.constant 0 : i32
    %c0_i32_0 = arith.constant 0 : i32
    %c0_i32_1 = arith.constant 0 : i32
    return %arg1, %c0_i32, %c0_i32_0 : i32, i32, i32
  }
  func.func @transform_2(%arg0: i32, %arg1: i32) -> (i32, i32, i32) {
    %c0_i32 = arith.constant 0 : i32
    %c0_i32_0 = arith.constant 0 : i32
    %c0_i32_1 = arith.constant 0 : i32
    return %arg1, %c0_i32, %c0_i32_0 : i32, i32, i32
  }
  func.func @transform_3(%arg0: i32, %arg1: i32) -> (i32, i32, i32) {
    %c0_i32 = arith.constant 0 : i32
    %c0_i32_0 = arith.constant 0 : i32
    %c0_i32_1 = arith.constant 0 : i32
    return %arg1, %c0_i32, %c0_i32_0 : i32, i32, i32
  }
  func.func @transform_4(%arg0: i32, %arg1: i32) -> (i32, i32, i32) {
    %c0_i32 = arith.constant 0 : i32
    %c0_i32_0 = arith.constant 0 : i32
    %c0_i32_1 = arith.constant 0 : i32
    return %arg1, %c0_i32, %c0_i32_0 : i32, i32, i32
  }
  func.func @transform_5(%arg0: i32, %arg1: i32) -> (i32, i32, i32) {
    %c0_i32 = arith.constant 0 : i32
    %c0_i32_0 = arith.constant 0 : i32
    %c0_i32_1 = arith.constant 0 : i32
    return %arg1, %c0_i32, %c0_i32_0 : i32, i32, i32
  }
  func.func @transform_6(%arg0: i32, %arg1: i32) -> (i32, i32, i32) {
    %c0_i32 = arith.constant 0 : i32
    %c0_i32_0 = arith.constant 0 : i32
    %c0_i32_1 = arith.constant 0 : i32
    return %arg1, %c0_i32, %c0_i32_0 : i32, i32, i32
  }
  func.func @transform_7(%arg0: i32, %arg1: i32) -> (i32, i32, i32) {
    %c0_i32 = arith.constant 0 : i32
    %c0_i32_0 = arith.constant 0 : i32
    %c0_i32_1 = arith.constant 0 : i32
    return %arg1, %c0_i32, %c0_i32_0 : i32, i32, i32
  }
  func.func @transform_8(%arg0: i32, %arg1: i32) -> (i32, i32, i32) {
    %c0_i32 = arith.constant 0 : i32
    %c0_i32_0 = arith.constant 0 : i32
    %c0_i32_1 = arith.constant 0 : i32
    return %arg1, %c0_i32, %c0_i32_0 : i32, i32, i32
  }
  func.func @transform_9(%arg0: i32, %arg1: i32) -> (i32, i32, i32) {
    %c0_i32 = arith.constant 0 : i32
    %c0_i32_0 = arith.constant 0 : i32
    %c0_i32_1 = arith.constant 0 : i32
    return %arg1, %c0_i32, %c0_i32_0 : i32, i32, i32
  }
  func.func @transform_10(%arg0: i32, %arg1: i32) -> (i32, i32, i32) {
    %c0_i32 = arith.constant 0 : i32
    %c0_i32_0 = arith.constant 0 : i32
    %c0_i32_1 = arith.constant 0 : i32
    return %arg1, %c0_i32, %c0_i32_0 : i32, i32, i32
  }
  func.func @transform_11(%arg0: i32, %arg1: i32) -> (i32, i32, i32) {
    %c0_i32 = arith.constant 0 : i32
    %c0_i32_0 = arith.constant 0 : i32
    %c0_i32_1 = arith.constant 0 : i32
    return %arg1, %c0_i32, %c0_i32_0 : i32, i32, i32
  }
  func.func @transform_12(%arg0: i32, %arg1: i32) -> (i32, i32, i32) {
    %c0_i32 = arith.constant 0 : i32
    %c0_i32_0 = arith.constant 0 : i32
    %c0_i32_1 = arith.constant 0 : i32
    return %arg1, %c0_i32, %c0_i32_0 : i32, i32, i32
  }
  func.func @transform_13(%arg0: i32, %arg1: i32) -> (i32, i32, i32) {
    %c0_i32 = arith.constant 0 : i32
    %c0_i32_0 = arith.constant 0 : i32
    %c0_i32_1 = arith.constant 0 : i32
    return %arg0, %c0_i32, %c0_i32_0 : i32, i32, i32
  }
}

</mosaic_0001>

<llo_original>
// kernel: gpt_forward.3
$region0: #{gpt_forward.3}
  #allocation0 [shape = 'u32[]', space=smem, size = 0x4, offset = 0x4, fixed_abs, tag = 'smem constant byte address 0x4 - core index']
  #allocation1 [shape = 'u32[144,128]{1,0:T(1,128)}', space=vmem, size = 0x12000, scoped, tag = 'internal scratch']
  #allocation2 [shape = 'bf16[9,32]{1,0:T(8,128)(2,1)}', space=vmem, size = 0x1000, scoped, tag = 'scratch operand']
  %s0 = inlined_call_operand.vmem [shape: bf16[2,9,32], index: 0, kind: input, shape index: {}]
  %s1 = inlined_call_operand.vmem [shape: bf16[32,32], index: 1, kind: input, shape index: {}]
  %s2 = inlined_call_operand.vmem [shape: f32[1,32], index: 2, kind: input, shape index: {}]
  %s3 = inlined_call_operand.vmem [shape: bf16[32,128], index: 3, kind: input, shape index: {}]
  %s4 = inlined_call_operand.vmem [shape: f32[1,128], index: 4, kind: input, shape index: {}]
  %s5 = inlined_call_operand.vmem [shape: bf16[32,128], index: 5, kind: input, shape index: {}]
  %s6 = inlined_call_operand.vmem [shape: f32[1,128], index: 6, kind: input, shape index: {}]
  %s7 = inlined_call_operand.hbm [shape: f32[2,1,128], index: 7, kind: output, shape index: {0}]
  %s8 = inlined_call_operand.vmem [shape: bf16[2,8,128], index: 8, kind: output, shape index: {1}]
  %9 = xla_tuple %s7, %s8
  %s10 = sld [smem:[#allocation0]]
  $region73: #{gpt_forward.3} parent=0
    _
  %s12 = ssub.s32 1, %s10
  %s13 = scalar_select 0, %s12, %s10
  $region1: #{gpt_forward.3} parent=0
    #allocation3 [shape = 'u8[1024]{0}', space=vmem, size = 0x400, scoped, tag = 'output window, operand 0']
    #allocation4 [shape = 's32[2]{0}', space=sflag, size = 0x8, scoped, tag = 'scoped memory for gpt_forward.3']
    %14 = vsyncpa [#allocation4], 0
    %s15 = scalar_lea.sflag [#allocation4], 1
    %16 = vsyncpa %s15, 0
    loop: start=0, step=1, limit=4
    $region2: #{gpt_forward.3} parent=1 // loop_pre_header
      _
    $region3: #{gpt_forward.3} parent=1 // loop_header
      %s18 = sphi 0, %s22
      %p19 = scmp.ge.s32.totalorder %s18, 4
      %s25 = sphi 0, %s37
      %s26 = sphi 0, %s33
      %s27 = sphi 0, %s25
      %s28 = sphi 0, %s26
      %s29 = sphi 0, %s27
      %s30 = sphi 0, %s28
      %s40 = sphi 0, %s42
      %s43 = sphi 0, %s40
      %s44 = sphi 0, %s43
      %s60 = sphi 0, %s44
      %s64 = sphi 0, %s64
      %s66 = sphi 0, %s64
      %s67 = sphi 0, %s66
      %s81 = sphi 0, %s67
      %s85 = sphi 0, %s85
      %s87 = sphi 0, %s85
      %s88 = sphi 0, %s87
      %s102 = sphi 0, %s88
      %s106 = sphi 0, %s106
      %s108 = sphi 0, %s106
      %s109 = sphi 0, %s108
      %s123 = sphi 0, %s109
      %s127 = sphi 0, %s127
      %s129 = sphi 0, %s127
      %s130 = sphi 0, %s129
      %s144 = sphi 0, %s130
      %s150 = sphi 0, %s152
      %s153 = sphi 0, %s150
      %s154 = sphi 0, %s153
      %s170 = sphi 0, %s154
      %s176 = sphi 0, %s178
      %s179 = sphi 0, %s176
      %s180 = sphi 0, %s179
      %s196 = sphi 0, %s180
      %s202 = sphi 0, %s204
      %s205 = sphi 0, %s202
      %s206 = sphi 0, %s205
      %s222 = sphi 0, %s206
      %s230 = sphi 0, %s232
      %s233 = sphi 0, %s230
      %s234 = sphi 0, %s233
      %s250 = sphi 0, %s234
    $region4: #{gpt_forward.3} parent=1 // loop_header_branch
      %21 = sbr.rel (%p19) target = $region8
    $region5: #{gpt_forward.3} parent=1 // loop_body
      %s23 = ssub.s32 %s18, 1
      %s24 = ssub.s32 %s18, 2
      %s31 = sadd.s32 1, %s26
      %p32 = scmp.ge.s32.totalorder %s31, 1
      %s33 = scalar_select %p32, 0, %s31
      %s34 = sadd.s32 1, %s25
      %s35 = scalar_select %p32, %s34, %s25
      %p36 = scmp.ge.s32.totalorder %s35, 2
      %s37 = scalar_select %p36, 0, %s35
      %s38 = ssub.s32 %s25, %s37
      %p39 = scmp.eq.s32.totalorder %s38, 0
      %s41 = sadd.s32 %s40, 1
      %s42 = scalar_select %p39, %s40, %s41
      %p45 = pneg %p39
      %p46 = scmp.eq.s32.totalorder %s18, 1
      %p47 = por %p45, %p46
      %p48 = scmp.ne.s32.totalorder %s40, %s43
      %p49 = scmp.eq.s32.totalorder %s18, 0
      %p50 = por %p48, %p49
      %p51 = scmp.ne.s32.totalorder %s40, %s43
      %p52 = scmp.eq.s32.totalorder %s23, 1
      %p53 = por %p51, %p52
      %p54 = scmp.ne.s32.totalorder %s43, %s44
      %p55 = scmp.eq.s32.totalorder %s23, 0
      %p56 = por %p54, %p55
      %p57 = scmp.ne.s32.totalorder %s43, %s44
      %p58 = scmp.eq.s32.totalorder %s24, 1
      %p59 = por %p57, %p58
      %p61 = scmp.ne.s32.totalorder %s44, %s60
      %p62 = scmp.eq.s32.totalorder %s24, 0
      %p63 = por %p61, %p62
      %s65 = sadd.s32 %s64, 1
      %p68 = scmp.eq.s32.totalorder %s18, 1
      %p69 = scmp.ne.s32.totalorder %s64, %s66
      %p70 = scmp.eq.s32.totalorder %s18, 0
      %p71 = por %p69, %p70
      %p72 = scmp.ne.s32.totalorder %s64, %s66
      %p73 = scmp.eq.s32.totalorder %s23, 1
      %p74 = por %p72, %p73
      %p75 = scmp.ne.s32.totalorder %s66, %s67
      %p76 = scmp.eq.s32.totalorder %s23, 0
      %p77 = por %p75, %p76
      %p78 = scmp.ne.s32.totalorder %s66, %s67
      %p79 = scmp.eq.s32.totalorder %s24, 1
      %p80 = por %p78, %p79
      %p82 = scmp.ne.s32.totalorder %s67, %s81
      %p83 = scmp.eq.s32.totalorder %s24, 0
      %p84 = por %p82, %p83
      %s86 = sadd.s32 %s85, 1
      %p89 = scmp.eq.s32.totalorder %s18, 1
      %p90 = scmp.ne.s32.totalorder %s85, %s87
      %p91 = scmp.eq.s32.totalorder %s18, 0
      %p92 = por %p90, %p91
      %p93 = scmp.ne.s32.totalorder %s85, %s87
      %p94 = scmp.eq.s32.totalorder %s23, 1
      %p95 = por %p93, %p94
      %p96 = scmp.ne.s32.totalorder %s87, %s88
      %p97 = scmp.eq.s32.totalorder %s23, 0
      %p98 = por %p96, %p97
      %p99 = scmp.ne.s32.totalorder %s87, %s88
      %p100 = scmp.eq.s32.totalorder %s24, 1
      %p101 = por %p99, %p100
      %p103 = scmp.ne.s32.totalorder %s88, %s102
      %p104 = scmp.eq.s32.totalorder %s24, 0
      %p105 = por %p103, %p104
      %s107 = sadd.s32 %s106, 1
      %p110 = scmp.eq.s32.totalorder %s18, 1
      %p111 = scmp.ne.s32.totalorder %s106, %s108
      %p112 = scmp.eq.s32.totalorder %s18, 0
      %p113 = por %p111, %p112
      %p114 = scmp.ne.s32.totalorder %s106, %s108
      %p115 = scmp.eq.s32.totalorder %s23, 1
      %p116 = por %p114, %p115
      %p117 = scmp.ne.s32.totalorder %s108, %s109
      %p118 = scmp.eq.s32.totalorder %s23, 0
      %p119 = por %p117, %p118
      %p120 = scmp.ne.s32.totalorder %s108, %s109
      %p121 = scmp.eq.s32.totalorder %s24, 1
      %p122 = por %p120, %p121
      %p124 = scmp.ne.s32.totalorder %s109, %s123
      %p125 = scmp.eq.s32.totalorder %s24, 0
      %p126 = por %p124, %p125
      %s128 = sadd.s32 %s127, 1
      %p131 = scmp.eq.s32.totalorder %s18, 1
      %p132 = scmp.ne.s32.totalorder %s127, %s129
      %p133 = scmp.eq.s32.totalorder %s18, 0
      %p134 = por %p132, %p133
      %p135 = scmp.ne.s32.totalorder %s127, %s129
      %p136 = scmp.eq.s32.totalorder %s23, 1
      %p137 = por %p135, %p136
      %p138 = scmp.ne.s32.totalorder %s129, %s130
      %p139 = scmp.eq.s32.totalorder %s23, 0
      %p140 = por %p138, %p139
      %p141 = scmp.ne.s32.totalorder %s129, %s130
      %p142 = scmp.eq.s32.totalorder %s24, 1
      %p143 = por %p141, %p142
      %p145 = scmp.ne.s32.totalorder %s130, %s144
      %p146 = scmp.eq.s32.totalorder %s24, 0
      %p147 = por %p145, %p146
      %s148 = ssub.s32 %s26, %s33
      %p149 = scmp.eq.s32.totalorder %s148, 0
      %s151 = sadd.s32 %s150, 1
      %s152 = scalar_select %p149, %s150, %s151
      %p155 = pneg %p149
      %p156 = scmp.eq.s32.totalorder %s18, 1
      %p157 = por %p155, %p156
      %p158 = scmp.ne.s32.totalorder %s150, %s153
      %p159 = scmp.eq.s32.totalorder %s18, 0
      %p160 = por %p158, %p159
      %p161 = scmp.ne.s32.totalorder %s150, %s153
      %p162 = scmp.eq.s32.totalorder %s23, 1
      %p163 = por %p161, %p162
      %p164 = scmp.ne.s32.totalorder %s153, %s154
      %p165 = scmp.eq.s32.totalorder %s23, 0
      %p166 = por %p164, %p165
      %p167 = scmp.ne.s32.totalorder %s153, %s154
      %p168 = scmp.eq.s32.totalorder %s24, 1
      %p169 = por %p167, %p168
      %p171 = scmp.ne.s32.totalorder %s154, %s170
      %p172 = scmp.eq.s32.totalorder %s24, 0
      %p173 = por %p171, %p172
      %s174 = ssub.s32 %s26, %s33
      %p175 = scmp.eq.s32.totalorder %s174, 0
      %s177 = sadd.s32 %s176, 1
      %s178 = scalar_select %p175, %s176, %s177
      %p181 = pneg %p175
      %p182 = scmp.eq.s32.totalorder %s18, 1
      %p183 = por %p181, %p182
      %p184 = scmp.ne.s32.totalorder %s176, %s179
      %p185 = scmp.eq.s32.totalorder %s18, 0
      %p186 = por %p184, %p185
      %p187 = scmp.ne.s32.totalorder %s176, %s179
      %p188 = scmp.eq.s32.totalorder %s23, 1
      %p189 = por %p187, %p188
      %p190 = scmp.ne.s32.totalorder %s179, %s180
      %p191 = scmp.eq.s32.totalorder %s23, 0
      %p192 = por %p190, %p191
      %p193 = scmp.ne.s32.totalorder %s179, %s180
      %p194 = scmp.eq.s32.totalorder %s24, 1
      %p195 = por %p193, %p194
      %p197 = scmp.ne.s32.totalorder %s180, %s196
      %p198 = scmp.eq.s32.totalorder %s24, 0
      %p199 = por %p197, %p198
      %s200 = ssub.s32 %s25, %s37
      %p201 = scmp.eq.s32.totalorder %s200, 0
      %s203 = sadd.s32 %s202, 1
      %s204 = scalar_select %p201, %s202, %s203
      %p207 = pneg %p201
      %p208 = scmp.eq.s32.totalorder %s18, 1
      %p209 = por %p207, %p208
      %p210 = scmp.ne.s32.totalorder %s202, %s205
      %p211 = scmp.eq.s32.totalorder %s18, 0
      %p212 = por %p210, %p211
      %p213 = scmp.ne.s32.totalorder %s202, %s205
      %p214 = scmp.eq.s32.totalorder %s23, 1
      %p215 = por %p213, %p214
      %p216 = scmp.ne.s32.totalorder %s205, %s206
      %p217 = scmp.eq.s32.totalorder %s23, 0
      %p218 = por %p216, %p217
      %p219 = scmp.ne.s32.totalorder %s205, %s206
      %p220 = scmp.eq.s32.totalorder %s24, 1
      %p221 = por %p219, %p220
      %p223 = scmp.ne.s32.totalorder %s206, %s222
      %p224 = scmp.eq.s32.totalorder %s24, 0
      %p225 = por %p223, %p224
      %s226 = ssub.s32 %s25, %s37
      %s227 = ssub.s32 %s26, %s33
      %s228 = sor.u32 %s226, %s227
      %p229 = scmp.eq.s32.totalorder %s228, 0
      %s231 = sadd.s32 %s230, 1
      %s232 = scalar_select %p229, %s230, %s231
      %p235 = pneg %p229
      %p236 = scmp.eq.s32.totalorder %s18, 1
      %p237 = por %p235, %p236
      %p238 = scmp.ne.s32.totalorder %s230, %s233
      %p239 = scmp.eq.s32.totalorder %s18, 0
      %p240 = por %p238, %p239
      %p241 = scmp.ne.s32.totalorder %s230, %s233
      %p242 = scmp.eq.s32.totalorder %s23, 1
      %p243 = por %p241, %p242
      %p244 = scmp.ne.s32.totalorder %s233, %s234
      %p245 = scmp.eq.s32.totalorder %s23, 0
      %p246 = por %p244, %p245
      %p247 = scmp.ne.s32.totalorder %s233, %s234
      %p248 = scmp.eq.s32.totalorder %s24, 1
      %p249 = por %p247, %p248
      %p251 = scmp.ne.s32.totalorder %s234, %s250
      %p252 = scmp.eq.s32.totalorder %s24, 0
      %p253 = por %p251, %p252
      %p254 = scmp.le.s32.totalorder 1, %s18
      %p255 = scmp.lt.s32.totalorder %s18, 3
      %p256 = pnand %p254, %p255
      %p257 = pneg %p256
      // Predicated region
      $region9: #{gpt_forward.3} parent=5 // pred_check
        _
      $region10: #{gpt_forward.3} parent=5 // pred_check_branch
        %259 = sbr.rel (%p256) target = $region12
      $region11: #{gpt_forward.3} parent=5 // pred_region
        %s260 = ssub.s32 %s18, 1
        // Predicated region
        $region13: #{gpt_forward.3} parent=11 // pred_check
          %p261 = pneg %p77
        $region14: #{gpt_forward.3} parent=11 // pred_check_branch
          %263 = sbr.rel (%p261) target = $region16
        $region15: #{gpt_forward.3} parent=11 // pred_region
          _
        $region16: #{gpt_forward.3} parent=11 // pred_fallthru
          _
        // Predicated region
        $region17: #{gpt_forward.3} parent=11 // pred_check
          %p264 = pneg %p98
        $region18: #{gpt_forward.3} parent=11 // pred_check_branch
          %266 = sbr.rel (%p264) target = $region20
        $region19: #{gpt_forward.3} parent=11 // pred_region
          _
        $region20: #{gpt_forward.3} parent=11 // pred_fallthru
          _
        // Predicated region
        $region21: #{gpt_forward.3} parent=11 // pred_check
          %p267 = pneg %p119
        $region22: #{gpt_forward.3} parent=11 // pred_check_branch
          %269 = sbr.rel (%p267) target = $region24
        $region23: #{gpt_forward.3} parent=11 // pred_region
          _
        $region24: #{gpt_forward.3} parent=11 // pred_fallthru
          _
        // Predicated region
        $region25: #{gpt_forward.3} parent=11 // pred_check
          %p270 = pneg %p140
        $region26: #{gpt_forward.3} parent=11 // pred_check_branch
          %272 = sbr.rel (%p270) target = $region28
        $region27: #{gpt_forward.3} parent=11 // pred_region
          _
        $region28: #{gpt_forward.3} parent=11 // pred_fallthru
          _
        // Predicated region
        $region29: #{gpt_forward.3} parent=11 // pred_check
          %p273 = pneg %p166
        $region30: #{gpt_forward.3} parent=11 // pred_check_branch
          %275 = sbr.rel (%p273) target = $region32
        $region31: #{gpt_forward.3} parent=11 // pred_region
          %p276 = scmp.lt.s32.totalorder %s28, 0
          %s277 = scalar_select %p276, %s28, 0
          %s278 = smul.addr %s277, 4
          %s279 = scalar_lea.vmem %s5, %s278
        $region32: #{gpt_forward.3} parent=11 // pred_fallthru
          _
        // Predicated region
        $region33: #{gpt_forward.3} parent=11 // pred_check
          %p280 = pneg %p192
        $region34: #{gpt_forward.3} parent=11 // pred_check_branch
          %282 = sbr.rel (%p280) target = $region36
        $region35: #{gpt_forward.3} parent=11 // pred_region
          %p283 = scmp.lt.s32.totalorder %s28, 0
          %s284 = scalar_select %p283, %s28, 0
          %s285 = scalar_lea.vmem %s6, %s284
        $region36: #{gpt_forward.3} parent=11 // pred_fallthru
          _
      $region12: #{gpt_forward.3} parent=5 // pred_fallthru
        _
      %p286 = scmp.lt.s32.totalorder %s18, 2
      // Predicated region
      $region37: #{gpt_forward.3} parent=5 // pred_check
        %p287 = pneg %p286
      $region38: #{gpt_forward.3} parent=5 // pred_check_branch
        %289 = sbr.rel (%p287) target = $region40
      $region39: #{gpt_forward.3} parent=5 // pred_region
        // Predicated region
        $region41: #{gpt_forward.3} parent=39 // pred_check
          %p290 = pneg %p50
        $region42: #{gpt_forward.3} parent=39 // pred_check_branch
          %292 = sbr.rel (%p290) target = $region44
        $region43: #{gpt_forward.3} parent=39 // pred_region
          %p293 = scmp.lt.s32.totalorder %s25, 1
          %s294 = scalar_select %p293, %s25, 1
          %s295 = smul.addr %s294, 2
          %s296 = smul.addr %s295, 4
          %s297 = scalar_lea.vmem %s0, %s296
        $region44: #{gpt_forward.3} parent=39 // pred_fallthru
          _
      $region40: #{gpt_forward.3} parent=5 // pred_fallthru
        _
      %p298 = scmp.le.s32.totalorder 1, %s18
      %p299 = scmp.lt.s32.totalorder %s18, 3
      %p300 = pnand %p298, %p299
      %p301 = pneg %p300
      // Predicated region
      $region45: #{gpt_forward.3} parent=5 // pred_check
        _
      $region46: #{gpt_forward.3} parent=5 // pred_check_branch
        %303 = sbr.rel (%p300) target = $region48
      $region47: #{gpt_forward.3} parent=5 // pred_region
        %s304 = ssub.s32 %s18, 1
        %p305 = scmp.lt.s32.totalorder %s27, 1
        %s306 = scalar_select %p305, %s27, 1
        %s307 = smul.addr %s306, 2
        %s308 = smul.addr %s307, 4
        %s309 = scalar_lea.vmem %s0, %s308
        %p310 = pneg %p56
        %p311 = pneg %p53
        %p312 = pneg %p77
        %p313 = pneg %p74
        %p314 = pneg %p98
        %p315 = pneg %p95
        %p316 = pneg %p119
        %p317 = pneg %p116
        %p318 = pneg %p140
        %p319 = pneg %p137
        %p320 = scmp.lt.s32.totalorder %s28, 0
        %s321 = scalar_select %p320, %s28, 0
        %s322 = smul.addr %s321, 4
        %s323 = scalar_lea.vmem %s5, %s322
        %p324 = pneg %p166
        %p325 = pneg %p163
        %p326 = scmp.lt.s32.totalorder %s28, 0
        %s327 = scalar_select %p326, %s28, 0
        %s328 = scalar_lea.vmem %s6, %s327
        %p329 = pneg %p192
        %p330 = pneg %p189
        %p331 = pneg %p218
        %p332 = pneg %p215
        %s333 = sand.u32 %s205, 1
        %s334 = scalar_lea.sflag [#allocation4], %s333
        %s335 = sand.u32 %s205, 1
        %s336 = scalar_lea.vmem [#allocation3], %s335
        %p337 = pneg %p246
        %p338 = pneg %p243
        %p339 = scmp.lt.s32.totalorder %s27, 1
        %s340 = scalar_select %p339, %s27, 1
        %p341 = scmp.lt.s32.totalorder %s28, 0
        %s342 = scalar_select %p341, %s28, 0
        %s343 = sadd.s32 %s342, %s340
        %s344 = smul.addr %s343, 4
        %s345 = scalar_lea.vmem %s8, %s344
        %p346 = scmp.lt.s32.totalorder %s27, 1
        %s347 = scalar_select %p346, %s27, 1
        %s348 = smul.addr %s347, 2
        %s349 = smul.addr %s348, 4
        %s350 = scalar_lea.vmem %s0, %s349
        %p351 = scmp.lt.s32.totalorder %s28, 0
        %s352 = scalar_select %p351, %s28, 0
        %s353 = smul.addr %s352, 4
        %s354 = scalar_lea.vmem %s5, %s353
        %p355 = scmp.lt.s32.totalorder %s28, 0
        %s356 = scalar_select %p355, %s28, 0
        %s357 = scalar_lea.vmem %s6, %s356
        %p358 = scmp.lt.s32.totalorder %s27, 1
        %s359 = scalar_select %p358, %s27, 1
        %p360 = scmp.lt.s32.totalorder %s28, 0
        %s361 = scalar_select %p360, %s28, 0
        %s362 = sadd.s32 %s361, %s359
        %s363 = smul.addr %s362, 4
        %s364 = scalar_lea.vmem %s8, %s363
        %p366 = scmp.eq.s32.totalorder %s28, 0
        // Predicated region
        $region49: #{gpt_forward.3} parent=47 // pred_check
          %p367 = pneg %p366
        $region50: #{gpt_forward.3} parent=47 // pred_check_branch
          %369 = sbr.rel (%p367) target = $region52
        $region51: #{gpt_forward.3} parent=47 // pred_region
          %v370 = vld [vmem:[%s350] sm:$0xf]
          %v371 = vld [vmem:[%s350 + $0x4] sm:$0x1]
          %v372 = vld [vmem:[%s1] sm:$0xf]
          %v373 = vld [vmem:[%s1 + $0x4] sm:$0xf]
          %v374 = vld [vmem:[%s1 + $0x8] sm:$0xf]
          %v375 = vld [vmem:[%s1 + $0xc] sm:$0xf]
          %v376 = vld [vmem:[%s2] sm:$0x1]
          %v378 = vlaneseq
          %v379 = vshrl.u32 %v378, 7
          %v380 = vsub.s32 0, %v379
          %v381 = vrot.slane %v376, %v380
          %v385 = vunpack.c.l.b16 %v370
          %v386 = vunpack.c.l.b16 %v371
          %v387 = vpack.c.b16 %v386, %v385
          %v392 = vunpack.c.l.b16 %v372
          %v393 = vunpack.c.l.b16 %v373
          %v394 = vunpack.c.l.b16 %v374
          %v395 = vunpack.c.l.b16 %v375
          %v396 = vpack.c.b16 %v393, %v392
          %v397 = vpack.c.b16 %v395, %v394
          %vm400 = vcmask 261120
          %v402 = vsel %vm400, %v387, 0
          %404 = vmatprep.subr.bf16.mxu0 0
          %405 = vmatpush1.bf16.msra.mxu0 %v396
          %406 = vmatprep.subr.bf16.mxu0 0
          %407 = vmatpush1.bf16.msra.mxu0 %v397
          %408 = vmatprep.subr.bf16.mxu0 0
          %409 = vmatpush1.bf16.msra.mxu0 0
          %410 = vmatprep.subr.bf16.mxu0 0
          %411 = vmatpush1.bf16.msra.mxu0 0
          %412 = vmatprep.subr.bf16.mxu0 0
          %413 = vmatpush1.bf16.msra.mxu0 0
          %414 = vmatprep.subr.bf16.mxu0 0
          %415 = vmatpush1.bf16.msra.mxu0 0
          %416 = vmatprep.subr.bf16.mxu0 0
          %417 = vmatpush1.bf16.msra.mxu0 0
          %418 = vmatprep.subr.bf16.mxu0 0
          %419 = vmatpush1.bf16.msra.mxu0 0
          %420 = vmatprep.subr.bf16.mxu0 0
          %421 = vmatpush1.bf16.msra.mxu0 0
          %422 = vmatprep.subr.bf16.mxu0 0
          %423 = vmatpush1.bf16.msra.mxu0 0
          %424 = vmatprep.subr.bf16.mxu0 0
          %425 = vmatpush1.bf16.msra.mxu0 0
          %426 = vmatprep.subr.bf16.mxu0 0
          %427 = vmatpush1.bf16.msra.mxu0 0
          %428 = vmatprep.subr.bf16.mxu0 0
          %429 = vmatpush1.bf16.msra.mxu0 0
          %430 = vmatprep.subr.bf16.mxu0 0
          %431 = vmatpush1.bf16.msra.mxu0 0
          %432 = vmatprep.subr.bf16.mxu0 0
          %433 = vmatpush1.bf16.msra.mxu0 0
          %434 = vmatprep.subr.bf16.mxu0 0
          %435 = vmatpush1.bf16.msra.mxu0 0
          %436 = vmatprep.mubr.bf16.mxu0 0
          %437 = vmatmul.mubr.bf16.gmra.mrb[0].mxu0 %v402
          %v438 = vpop.f32.mrb[0].mxu0
          %v439 = vadd.f32 %v381, %v438
          %v440 = vpop.f32.mrb[0].mxu0
          %v441 = vpop.f32.mrb[0].mxu0
          %v442 = vadd.f32 %v381, %v441
          %v443 = vpop.f32.mrb[0].mxu0
          %444 = vdwg.mxu0
          %v445 = vmax.f32 %v439, 0.0
          %v446 = vmax.f32 %v442, 0.0
          %v447 = vpack.c.bf16 %v446, %v445
          %v449 = vunpack.c.l.b16 %v447
          %v450 = vunpack.c.h.b16 %v447
          %v451 = vpack.c.b16 %v449, %v449
          %v452 = vpack.c.b16 %v450, %v450
          %vm455 = vcmask 257024
          %456 = vst.msk [vmem:[#allocation2] sm:$0xf] %vm455, %v451
          %vm457 = vcmask 253952
          %vm458 = vsmask.f32 256
          %vm459 = vmand %vm457, %vm458
          %v460 = vld [vmem:[#allocation2 + $0x4] sm:$0x1]
          %v461 = vsel %vm459, %v452, %v460
          %462 = vst [vmem:[#allocation2 + $0x4] sm:$0x1] %v461
          %v463 = vpack.c.bf16 %v446, %v446
          %v464 = vld [vmem:[%s3] sm:$0xf]
          %v465 = vld [vmem:[%s3 + $0x4] sm:$0xf]
          %v466 = vld [vmem:[%s3 + $0x8] sm:$0xf]
          %v467 = vld [vmem:[%s3 + $0xc] sm:$0xf]
          %v468 = vld [vmem:[%s4] sm:$0x1]
          %v473 = vunpack.c.l.b16 %v464
          %v474 = vunpack.c.l.b16 %v465
          %v475 = vunpack.c.l.b16 %v466
          %v476 = vunpack.c.l.b16 %v467
          %v477 = vpack.c.b16 %v474, %v473
          %v478 = vpack.c.b16 %v476, %v475
          %v482 = vsel %vm400, %v463, 0
          %484 = vmatprep.subr.bf16.mxu0 0
          %485 = vmatpush1.bf16.msra.mxu0 %v477
          %486 = vmatprep.subr.bf16.mxu0 0
          %487 = vmatpush1.bf16.msra.mxu0 %v478
          %488 = vmatprep.subr.bf16.mxu0 0
          %489 = vmatpush1.bf16.msra.mxu0 0
          %490 = vmatprep.subr.bf16.mxu0 0
          %491 = vmatpush1.bf16.msra.mxu0 0
          %492 = vmatprep.subr.bf16.mxu0 0
          %493 = vmatpush1.bf16.msra.mxu0 0
          %494 = vmatprep.subr.bf16.mxu0 0
          %495 = vmatpush1.bf16.msra.mxu0 0
          %496 = vmatprep.subr.bf16.mxu0 0
          %497 = vmatpush1.bf16.msra.mxu0 0
          %498 = vmatprep.subr.bf16.mxu0 0
          %499 = vmatpush1.bf16.msra.mxu0 0
          %500 = vmatprep.subr.bf16.mxu0 0
          %501 = vmatpush1.bf16.msra.mxu0 0
          %502 = vmatprep.subr.bf16.mxu0 0
          %503 = vmatpush1.bf16.msra.mxu0 0
          %504 = vmatprep.subr.bf16.mxu0 0
          %505 = vmatpush1.bf16.msra.mxu0 0
          %506 = vmatprep.subr.bf16.mxu0 0
          %507 = vmatpush1.bf16.msra.mxu0 0
          %508 = vmatprep.subr.bf16.mxu0 0
          %509 = vmatpush1.bf16.msra.mxu0 0
          %510 = vmatprep.subr.bf16.mxu0 0
          %511 = vmatpush1.bf16.msra.mxu0 0
          %512 = vmatprep.subr.bf16.mxu0 0
          %513 = vmatpush1.bf16.msra.mxu0 0
          %514 = vmatprep.subr.bf16.mxu0 0
          %515 = vmatpush1.bf16.msra.mxu0 0
          %516 = vmatprep.mubr.bf16.mxu0 0
          %517 = vmatmul.mubr.bf16.gmra.mrb[0].mxu0 %v482
          %v518 = vpop.f32.mrb[0].mxu0
          %v519 = vadd.f32 %v468, %v518
          %v520 = vpop.f32.mrb[0].mxu0
          %v521 = vpop.f32.mrb[0].mxu0
          %v522 = vpop.f32.mrb[0].mxu0
          %523 = vdwg.mxu0
          %524 = vst [vmem:[%s336] sm:$0x1] %v519
        $region52: #{gpt_forward.3} parent=47 // pred_fallthru
          _
        %v525 = vld [vmem:[#allocation2] sm:$0xf]
        %v526 = vld [vmem:[%s354] sm:$0xf]
        %v527 = vld [vmem:[%s354 + $0x4] sm:$0xf]
        %v528 = vld [vmem:[%s354 + $0x8] sm:$0xf]
        %v529 = vld [vmem:[%s354 + $0xc] sm:$0xf]
        %v530 = vld [vmem:[%s357] sm:$0x1]
        %v532 = vlaneseq
        %v533 = vshrl.u32 %v532, 7
        %v534 = vsub.s32 0, %v533
        %v535 = vrot.slane %v530, %v534
        %v541 = vunpack.c.l.b16 %v526
        %v542 = vunpack.c.l.b16 %v527
        %v543 = vunpack.c.l.b16 %v528
        %v544 = vunpack.c.l.b16 %v529
        %v545 = vpack.c.b16 %v542, %v541
        %v546 = vpack.c.b16 %v544, %v543
        %vm549 = vcmask 261120
        %v551 = vsel %vm549, %v525, 0
        %553 = vmatprep.subr.bf16.mxu0 0
        %554 = vmatpush1.bf16.msra.mxu0 %v545
        %555 = vmatprep.subr.bf16.mxu0 0
        %556 = vmatpush1.bf16.msra.mxu0 %v546
        %557 = vmatprep.subr.bf16.mxu0 0
        %558 = vmatpush1.bf16.msra.mxu0 0
        %559 = vmatprep.subr.bf16.mxu0 0
        %560 = vmatpush1.bf16.msra.mxu0 0
        %561 = vmatprep.subr.bf16.mxu0 0
        %562 = vmatpush1.bf16.msra.mxu0 0
        %563 = vmatprep.subr.bf16.mxu0 0
        %564 = vmatpush1.bf16.msra.mxu0 0
        %565 = vmatprep.subr.bf16.mxu0 0
        %566 = vmatpush1.bf16.msra.mxu0 0
        %567 = vmatprep.subr.bf16.mxu0 0
        %568 = vmatpush1.bf16.msra.mxu0 0
        %569 = vmatprep.subr.bf16.mxu0 0
        %570 = vmatpush1.bf16.msra.mxu0 0
        %571 = vmatprep.subr.bf16.mxu0 0
        %572 = vmatpush1.bf16.msra.mxu0 0
        %573 = vmatprep.subr.bf16.mxu0 0
        %574 = vmatpush1.bf16.msra.mxu0 0
        %575 = vmatprep.subr.bf16.mxu0 0
        %576 = vmatpush1.bf16.msra.mxu0 0
        %577 = vmatprep.subr.bf16.mxu0 0
        %578 = vmatpush1.bf16.msra.mxu0 0
        %579 = vmatprep.subr.bf16.mxu0 0
        %580 = vmatpush1.bf16.msra.mxu0 0
        %581 = vmatprep.subr.bf16.mxu0 0
        %582 = vmatpush1.bf16.msra.mxu0 0
        %583 = vmatprep.subr.bf16.mxu0 0
        %584 = vmatpush1.bf16.msra.mxu0 0
        %585 = vmatprep.mubr.bf16.mxu0 0
        %586 = vmatmul.mubr.bf16.gmra.mrb[0].mxu0 %v551
        %v587 = vpop.f32.mrb[0].mxu0
        %v588 = vadd.f32 %v535, %v587
        %v589 = vpop.f32.mrb[0].mxu0
        %v590 = vpop.f32.mrb[0].mxu0
        %v591 = vpop.f32.mrb[0].mxu0
        %592 = vdwg.mxu0
        %v593 = vpack.c.bf16 %v588, %v588
        %594 = vst [vmem:[%s364] sm:$0xf] %v593
        %s595 = sand.u32 %s205, 1
        %s596 = scalar_lea.sflag [#allocation4], %s595
        %s597 = sand.u32 %s205, 1
        %s598 = scalar_lea.vmem [#allocation3], %s597
        %p599 = scmp.lt.s32.totalorder %s27, 1
        %s600 = scalar_select %p599, %s27, 1
        %p601 = scmp.lt.s32.totalorder %s28, 0
        %s602 = scalar_select %p601, %s28, 0
        %s603 = sadd.s32 %s602, %s600
        %s604 = smul.addr %s603, 4
        %s605 = scalar_lea.vmem %s8, %s604
        // Predicated region
        $region53: #{gpt_forward.3} parent=47 // pred_check
          %p606 = pneg %p215
        $region54: #{gpt_forward.3} parent=47 // pred_check_branch
          %608 = sbr.rel (%p606) target = $region56
        $region55: #{gpt_forward.3} parent=47 // pred_region
          %s610 = ssub.s32 16, 16
          %611 = vsyncadd %s596, %s610
          %s612 = smul.addr %s27, 16
          %s613 = scalar_lea.hbm %s7, %s612
          %s615 = sshll.u32 %s598, 4
          %s616 = int_to_ptr.vmem [resolvable:$true] %s615
          %618 = dma.vmem_to_hbm [thread:$0]  %s616, 16, %s613, %s596
        $region56: #{gpt_forward.3} parent=47 // pred_fallthru
          _
        // Predicated region
        $region57: #{gpt_forward.3} parent=47 // pred_check
          %p619 = pneg %p243
        $region58: #{gpt_forward.3} parent=47 // pred_check_branch
          %621 = sbr.rel (%p619) target = $region60
        $region59: #{gpt_forward.3} parent=47 // pred_region
          _
        $region60: #{gpt_forward.3} parent=47 // pred_fallthru
          _
      $region48: #{gpt_forward.3} parent=5 // pred_fallthru
        _
      %p622 = scmp.le.s32.totalorder 2, %s18
      // Predicated region
      $region61: #{gpt_forward.3} parent=5 // pred_check
        %p623 = pneg %p622
      $region62: #{gpt_forward.3} parent=5 // pred_check_branch
        %625 = sbr.rel (%p623) target = $region64
      $region63: #{gpt_forward.3} parent=5 // pred_region
        %s626 = ssub.s32 %s18, 2
        // Predicated region
        $region65: #{gpt_forward.3} parent=63 // pred_check
          %p627 = pneg %p221
        $region66: #{gpt_forward.3} parent=63 // pred_check_branch
          %629 = sbr.rel (%p627) target = $region68
        $region67: #{gpt_forward.3} parent=63 // pred_region
          %s630 = sand.u32 %s206, 1
          %s631 = scalar_lea.sflag [#allocation4], %s630
          %s632 = sand.u32 %s206, 1
          %s633 = scalar_lea.vmem [#allocation3], %s632
          %634 = dma.done %s631, 16
        $region68: #{gpt_forward.3} parent=63 // pred_fallthru
          _
        // Predicated region
        $region69: #{gpt_forward.3} parent=63 // pred_check
          %p635 = pneg %p249
        $region70: #{gpt_forward.3} parent=63 // pred_check_branch
          %637 = sbr.rel (%p635) target = $region72
        $region71: #{gpt_forward.3} parent=63 // pred_region
          %p638 = scmp.lt.s32.totalorder %s29, 1
          %s639 = scalar_select %p638, %s29, 1
          %p640 = scmp.lt.s32.totalorder %s30, 0
          %s641 = scalar_select %p640, %s30, 0
          %s642 = sadd.s32 %s641, %s639
          %s643 = smul.addr %s642, 4
          %s644 = scalar_lea.vmem %s8, %s643
        $region72: #{gpt_forward.3} parent=63 // pred_fallthru
          _
      $region64: #{gpt_forward.3} parent=5 // pred_fallthru
        _
    $region6: #{gpt_forward.3} parent=1 // loop_footer
      %s22 = sadd.s32 1, %s18
    $region7: #{gpt_forward.3} parent=1 // loop_footer_branch
      %17 = sbr.rel target = $region3
    $region8: #{gpt_forward.3} parent=1 // loop_exit
      _
    %645 = vsyncpa [#allocation4], 1
    %s646 = scalar_lea.sflag [#allocation4], 1
    %647 = vsyncpa %s646, 1

// kernel: gpt_forward.2
$region0: #{gpt_forward.2}
  #allocation0 [shape = 'u32[]', space=smem, size = 0x4, offset = 0x4, fixed_abs, tag = 'smem constant byte address 0x4 - core index']
  #allocation1 [shape = 'u32[144,128]{1,0:T(1,128)}', space=vmem, size = 0x12000, scoped, tag = 'internal scratch']
  #allocation2 [shape = 'f32[9,32]{1,0:T(8,128)}', space=vmem, size = 0x2000, scoped, tag = 'scratch operand']
  #allocation3 [shape = 'f32[9,9]{1,0:T(8,128)}', space=vmem, size = 0x2000, scoped, tag = 'scratch operand']
  %s0 = inlined_call_operand.vmem [shape: f32[2,9,32], index: 0, kind: input, shape index: {}]
  %s1 = inlined_call_operand.vmem [shape: f32[2,1,32], index: 1, kind: input, shape index: {}]
  %s2 = inlined_call_operand.vmem [shape: f32[2,1,32], index: 2, kind: input, shape index: {}]
  %s3 = inlined_call_operand.vmem [shape: bf16[2,32,96], index: 3, kind: input, shape index: {}]
  %s4 = inlined_call_operand.vmem [shape: f32[2,1,96], index: 4, kind: input, shape index: {}]
  %s5 = inlined_call_operand.vmem [shape: bf16[2,32,32], index: 5, kind: input, shape index: {}]
  %s6 = inlined_call_operand.vmem [shape: f32[2,1,32], index: 6, kind: input, shape index: {}]
  %s7 = inlined_call_operand.vmem [shape: f32[2,1,32], index: 7, kind: input, shape index: {}]
  %s8 = inlined_call_operand.vmem [shape: f32[2,1,32], index: 8, kind: input, shape index: {}]
  %s9 = inlined_call_operand.vmem [shape: bf16[2,32,128], index: 9, kind: input, shape index: {}]
  %s10 = inlined_call_operand.vmem [shape: f32[2,1,128], index: 10, kind: input, shape index: {}]
  %s11 = inlined_call_operand.vmem [shape: bf16[2,128,32], index: 11, kind: input, shape index: {}]
  %s12 = inlined_call_operand.vmem [shape: f32[2,1,32], index: 12, kind: input, shape index: {}]
  %s13 = inlined_call_operand.vmem [shape: bf16[2,9,32], index: 13, kind: output, shape index: {}]
  %s14 = sld [smem:[#allocation0]]
  $region93: #{gpt_forward.2} parent=0
    _
  %s16 = ssub.s32 1, %s14
  %s17 = scalar_select 0, %s16, %s14
  loop: start=0, step=1, limit=6
  $region2: #{gpt_forward.2} parent=0 // loop_pre_header
    _
  $region3: #{gpt_forward.2} parent=0 // loop_header
    %s19 = sphi 0, %s23
    %p20 = scmp.ge.s32.totalorder %s19, 6
    %s26 = sphi 0, %s38
    %s27 = sphi 0, %s34
    %s28 = sphi 0, %s26
    %s29 = sphi 0, %s27
    %s30 = sphi 0, %s28
    %s31 = sphi 0, %s29
    %s41 = sphi 0, %s43
    %s44 = sphi 0, %s41
    %s45 = sphi 0, %s44
    %s61 = sphi 0, %s45
    %s67 = sphi 0, %s69
    %s70 = sphi 0, %s67
    %s71 = sphi 0, %s70
    %s87 = sphi 0, %s71
    %s93 = sphi 0, %s95
    %s96 = sphi 0, %s93
    %s97 = sphi 0, %s96
    %s113 = sphi 0, %s97
    %s119 = sphi 0, %s121
    %s122 = sphi 0, %s119
    %s123 = sphi 0, %s122
    %s139 = sphi 0, %s123
    %s145 = sphi 0, %s147
    %s148 = sphi 0, %s145
    %s149 = sphi 0, %s148
    %s165 = sphi 0, %s149
    %s171 = sphi 0, %s173
    %s174 = sphi 0, %s171
    %s175 = sphi 0, %s174
    %s191 = sphi 0, %s175
    %s197 = sphi 0, %s199
    %s200 = sphi 0, %s197
    %s201 = sphi 0, %s200
    %s217 = sphi 0, %s201
    %s223 = sphi 0, %s225
    %s226 = sphi 0, %s223
    %s227 = sphi 0, %s226
    %s243 = sphi 0, %s227
    %s249 = sphi 0, %s251
    %s252 = sphi 0, %s249
    %s253 = sphi 0, %s252
    %s269 = sphi 0, %s253
    %s275 = sphi 0, %s277
    %s278 = sphi 0, %s275
    %s279 = sphi 0, %s278
    %s295 = sphi 0, %s279
    %s301 = sphi 0, %s303
    %s304 = sphi 0, %s301
    %s305 = sphi 0, %s304
    %s321 = sphi 0, %s305
    %s327 = sphi 0, %s329
    %s330 = sphi 0, %s327
    %s331 = sphi 0, %s330
    %s347 = sphi 0, %s331
    %s353 = sphi 0, %s355
    %s356 = sphi 0, %s353
    %s357 = sphi 0, %s356
    %s373 = sphi 0, %s357
    %s379 = sphi 0, %s381
    %s382 = sphi 0, %s379
    %s383 = sphi 0, %s382
    %s399 = sphi 0, %s383
  $region4: #{gpt_forward.2} parent=0 // loop_header_branch
    %22 = sbr.rel (%p20) target = $region8
  $region5: #{gpt_forward.2} parent=0 // loop_body
    %s24 = ssub.s32 %s19, 1
    %s25 = ssub.s32 %s19, 2
    %s32 = sadd.s32 1, %s27
    %p33 = scmp.ge.s32.totalorder %s32, 2
    %s34 = scalar_select %p33, 0, %s32
    %s35 = sadd.s32 1, %s26
    %s36 = scalar_select %p33, %s35, %s26
    %p37 = scmp.ge.s32.totalorder %s36, 2
    %s38 = scalar_select %p37, 0, %s36
    %s39 = ssub.s32 %s26, %s38
    %p40 = scmp.eq.s32.totalorder %s39, 0
    %s42 = sadd.s32 %s41, 1
    %s43 = scalar_select %p40, %s41, %s42
    %p46 = pneg %p40
    %p47 = scmp.eq.s32.totalorder %s19, 3
    %p48 = por %p46, %p47
    %p49 = scmp.ne.s32.totalorder %s41, %s44
    %p50 = scmp.eq.s32.totalorder %s19, 0
    %p51 = por %p49, %p50
    %p52 = scmp.ne.s32.totalorder %s41, %s44
    %p53 = scmp.eq.s32.totalorder %s24, 3
    %p54 = por %p52, %p53
    %p55 = scmp.ne.s32.totalorder %s44, %s45
    %p56 = scmp.eq.s32.totalorder %s24, 0
    %p57 = por %p55, %p56
    %p58 = scmp.ne.s32.totalorder %s44, %s45
    %p59 = scmp.eq.s32.totalorder %s25, 3
    %p60 = por %p58, %p59
    %p62 = scmp.ne.s32.totalorder %s45, %s61
    %p63 = scmp.eq.s32.totalorder %s25, 0
    %p64 = por %p62, %p63
    %s65 = ssub.s32 %s27, %s34
    %p66 = scmp.eq.s32.totalorder %s65, 0
    %s68 = sadd.s32 %s67, 1
    %s69 = scalar_select %p66, %s67, %s68
    %p72 = pneg %p66
    %p73 = scmp.eq.s32.totalorder %s19, 3
    %p74 = por %p72, %p73
    %p75 = scmp.ne.s32.totalorder %s67, %s70
    %p76 = scmp.eq.s32.totalorder %s19, 0
    %p77 = por %p75, %p76
    %p78 = scmp.ne.s32.totalorder %s67, %s70
    %p79 = scmp.eq.s32.totalorder %s24, 3
    %p80 = por %p78, %p79
    %p81 = scmp.ne.s32.totalorder %s70, %s71
    %p82 = scmp.eq.s32.totalorder %s24, 0
    %p83 = por %p81, %p82
    %p84 = scmp.ne.s32.totalorder %s70, %s71
    %p85 = scmp.eq.s32.totalorder %s25, 3
    %p86 = por %p84, %p85
    %p88 = scmp.ne.s32.totalorder %s71, %s87
    %p89 = scmp.eq.s32.totalorder %s25, 0
    %p90 = por %p88, %p89
    %s91 = ssub.s32 %s27, %s34
    %p92 = scmp.eq.s32.totalorder %s91, 0
    %s94 = sadd.s32 %s93, 1
    %s95 = scalar_select %p92, %s93, %s94
    %p98 = pneg %p92
    %p99 = scmp.eq.s32.totalorder %s19, 3
    %p100 = por %p98, %p99
    %p101 = scmp.ne.s32.totalorder %s93, %s96
    %p102 = scmp.eq.s32.totalorder %s19, 0
    %p103 = por %p101, %p102
    %p104 = scmp.ne.s32.totalorder %s93, %s96
    %p105 = scmp.eq.s32.totalorder %s24, 3
    %p106 = por %p104, %p105
    %p107 = scmp.ne.s32.totalorder %s96, %s97
    %p108 = scmp.eq.s32.totalorder %s24, 0
    %p109 = por %p107, %p108
    %p110 = scmp.ne.s32.totalorder %s96, %s97
    %p111 = scmp.eq.s32.totalorder %s25, 3
    %p112 = por %p110, %p111
    %p114 = scmp.ne.s32.totalorder %s97, %s113
    %p115 = scmp.eq.s32.totalorder %s25, 0
    %p116 = por %p114, %p115
    %s117 = ssub.s32 %s27, %s34
    %p118 = scmp.eq.s32.totalorder %s117, 0
    %s120 = sadd.s32 %s119, 1
    %s121 = scalar_select %p118, %s119, %s120
    %p124 = pneg %p118
    %p125 = scmp.eq.s32.totalorder %s19, 3
    %p126 = por %p124, %p125
    %p127 = scmp.ne.s32.totalorder %s119, %s122
    %p128 = scmp.eq.s32.totalorder %s19, 0
    %p129 = por %p127, %p128
    %p130 = scmp.ne.s32.totalorder %s119, %s122
    %p131 = scmp.eq.s32.totalorder %s24, 3
    %p132 = por %p130, %p131
    %p133 = scmp.ne.s32.totalorder %s122, %s123
    %p134 = scmp.eq.s32.totalorder %s24, 0
    %p135 = por %p133, %p134
    %p136 = scmp.ne.s32.totalorder %s122, %s123
    %p137 = scmp.eq.s32.totalorder %s25, 3
    %p138 = por %p136, %p137
    %p140 = scmp.ne.s32.totalorder %s123, %s139
    %p141 = scmp.eq.s32.totalorder %s25, 0
    %p142 = por %p140, %p141
    %s143 = ssub.s32 %s27, %s34
    %p144 = scmp.eq.s32.totalorder %s143, 0
    %s146 = sadd.s32 %s145, 1
    %s147 = scalar_select %p144, %s145, %s146
    %p150 = pneg %p144
    %p151 = scmp.eq.s32.totalorder %s19, 3
    %p152 = por %p150, %p151
    %p153 = scmp.ne.s32.totalorder %s145, %s148
    %p154 = scmp.eq.s32.totalorder %s19, 0
    %p155 = por %p153, %p154
    %p156 = scmp.ne.s32.totalorder %s145, %s148
    %p157 = scmp.eq.s32.totalorder %s24, 3
    %p158 = por %p156, %p157
    %p159 = scmp.ne.s32.totalorder %s148, %s149
    %p160 = scmp.eq.s32.totalorder %s24, 0
    %p161 = por %p159, %p160
    %p162 = scmp.ne.s32.totalorder %s148, %s149
    %p163 = scmp.eq.s32.totalorder %s25, 3
    %p164 = por %p162, %p163
    %p166 = scmp.ne.s32.totalorder %s149, %s165
    %p167 = scmp.eq.s32.totalorder %s25, 0
    %p168 = por %p166, %p167
    %s169 = ssub.s32 %s27, %s34
    %p170 = scmp.eq.s32.totalorder %s169, 0
    %s172 = sadd.s32 %s171, 1
    %s173 = scalar_select %p170, %s171, %s172
    %p176 = pneg %p170
    %p177 = scmp.eq.s32.totalorder %s19, 3
    %p178 = por %p176, %p177
    %p179 = scmp.ne.s32.totalorder %s171, %s174
    %p180 = scmp.eq.s32.totalorder %s19, 0
    %p181 = por %p179, %p180
    %p182 = scmp.ne.s32.totalorder %s171, %s174
    %p183 = scmp.eq.s32.totalorder %s24, 3
    %p184 = por %p182, %p183
    %p185 = scmp.ne.s32.totalorder %s174, %s175
    %p186 = scmp.eq.s32.totalorder %s24, 0
    %p187 = por %p185, %p186
    %p188 = scmp.ne.s32.totalorder %s174, %s175
    %p189 = scmp.eq.s32.totalorder %s25, 3
    %p190 = por %p188, %p189
    %p192 = scmp.ne.s32.totalorder %s175, %s191
    %p193 = scmp.eq.s32.totalorder %s25, 0
    %p194 = por %p192, %p193
    %s195 = ssub.s32 %s27, %s34
    %p196 = scmp.eq.s32.totalorder %s195, 0
    %s198 = sadd.s32 %s197, 1
    %s199 = scalar_select %p196, %s197, %s198
    %p202 = pneg %p196
    %p203 = scmp.eq.s32.totalorder %s19, 3
    %p204 = por %p202, %p203
    %p205 = scmp.ne.s32.totalorder %s197, %s200
    %p206 = scmp.eq.s32.totalorder %s19, 0
    %p207 = por %p205, %p206
    %p208 = scmp.ne.s32.totalorder %s197, %s200
    %p209 = scmp.eq.s32.totalorder %s24, 3
    %p210 = por %p208, %p209
    %p211 = scmp.ne.s32.totalorder %s200, %s201
    %p212 = scmp.eq.s32.totalorder %s24, 0
    %p213 = por %p211, %p212
    %p214 = scmp.ne.s32.totalorder %s200, %s201
    %p215 = scmp.eq.s32.totalorder %s25, 3
    %p216 = por %p214, %p215
    %p218 = scmp.ne.s32.totalorder %s201, %s217
    %p219 = scmp.eq.s32.totalorder %s25, 0
    %p220 = por %p218, %p219
    %s221 = ssub.s32 %s27, %s34
    %p222 = scmp.eq.s32.totalorder %s221, 0
    %s224 = sadd.s32 %s223, 1
    %s225 = scalar_select %p222, %s223, %s224
    %p228 = pneg %p222
    %p229 = scmp.eq.s32.totalorder %s19, 3
    %p230 = por %p228, %p229
    %p231 = scmp.ne.s32.totalorder %s223, %s226
    %p232 = scmp.eq.s32.totalorder %s19, 0
    %p233 = por %p231, %p232
    %p234 = scmp.ne.s32.totalorder %s223, %s226
    %p235 = scmp.eq.s32.totalorder %s24, 3
    %p236 = por %p234, %p235
    %p237 = scmp.ne.s32.totalorder %s226, %s227
    %p238 = scmp.eq.s32.totalorder %s24, 0
    %p239 = por %p237, %p238
    %p240 = scmp.ne.s32.totalorder %s226, %s227
    %p241 = scmp.eq.s32.totalorder %s25, 3
    %p242 = por %p240, %p241
    %p244 = scmp.ne.s32.totalorder %s227, %s243
    %p245 = scmp.eq.s32.totalorder %s25, 0
    %p246 = por %p244, %p245
    %s247 = ssub.s32 %s27, %s34
    %p248 = scmp.eq.s32.totalorder %s247, 0
    %s250 = sadd.s32 %s249, 1
    %s251 = scalar_select %p248, %s249, %s250
    %p254 = pneg %p248
    %p255 = scmp.eq.s32.totalorder %s19, 3
    %p256 = por %p254, %p255
    %p257 = scmp.ne.s32.totalorder %s249, %s252
    %p258 = scmp.eq.s32.totalorder %s19, 0
    %p259 = por %p257, %p258
    %p260 = scmp.ne.s32.totalorder %s249, %s252
    %p261 = scmp.eq.s32.totalorder %s24, 3
    %p262 = por %p260, %p261
    %p263 = scmp.ne.s32.totalorder %s252, %s253
    %p264 = scmp.eq.s32.totalorder %s24, 0
    %p265 = por %p263, %p264
    %p266 = scmp.ne.s32.totalorder %s252, %s253
    %p267 = scmp.eq.s32.totalorder %s25, 3
    %p268 = por %p266, %p267
    %p270 = scmp.ne.s32.totalorder %s253, %s269
    %p271 = scmp.eq.s32.totalorder %s25, 0
    %p272 = por %p270, %p271
    %s273 = ssub.s32 %s27, %s34
    %p274 = scmp.eq.s32.totalorder %s273, 0
    %s276 = sadd.s32 %s275, 1
    %s277 = scalar_select %p274, %s275, %s276
    %p280 = pneg %p274
    %p281 = scmp.eq.s32.totalorder %s19, 3
    %p282 = por %p280, %p281
    %p283 = scmp.ne.s32.totalorder %s275, %s278
    %p284 = scmp.eq.s32.totalorder %s19, 0
    %p285 = por %p283, %p284
    %p286 = scmp.ne.s32.totalorder %s275, %s278
    %p287 = scmp.eq.s32.totalorder %s24, 3
    %p288 = por %p286, %p287
    %p289 = scmp.ne.s32.totalorder %s278, %s279
    %p290 = scmp.eq.s32.totalorder %s24, 0
    %p291 = por %p289, %p290
    %p292 = scmp.ne.s32.totalorder %s278, %s279
    %p293 = scmp.eq.s32.totalorder %s25, 3
    %p294 = por %p292, %p293
    %p296 = scmp.ne.s32.totalorder %s279, %s295
    %p297 = scmp.eq.s32.totalorder %s25, 0
    %p298 = por %p296, %p297
    %s299 = ssub.s32 %s27, %s34
    %p300 = scmp.eq.s32.totalorder %s299, 0
    %s302 = sadd.s32 %s301, 1
    %s303 = scalar_select %p300, %s301, %s302
    %p306 = pneg %p300
    %p307 = scmp.eq.s32.totalorder %s19, 3
    %p308 = por %p306, %p307
    %p309 = scmp.ne.s32.totalorder %s301, %s304
    %p310 = scmp.eq.s32.totalorder %s19, 0
    %p311 = por %p309, %p310
    %p312 = scmp.ne.s32.totalorder %s301, %s304
    %p313 = scmp.eq.s32.totalorder %s24, 3
    %p314 = por %p312, %p313
    %p315 = scmp.ne.s32.totalorder %s304, %s305
    %p316 = scmp.eq.s32.totalorder %s24, 0
    %p317 = por %p315, %p316
    %p318 = scmp.ne.s32.totalorder %s304, %s305
    %p319 = scmp.eq.s32.totalorder %s25, 3
    %p320 = por %p318, %p319
    %p322 = scmp.ne.s32.totalorder %s305, %s321
    %p323 = scmp.eq.s32.totalorder %s25, 0
    %p324 = por %p322, %p323
    %s325 = ssub.s32 %s27, %s34
    %p326 = scmp.eq.s32.totalorder %s325, 0
    %s328 = sadd.s32 %s327, 1
    %s329 = scalar_select %p326, %s327, %s328
    %p332 = pneg %p326
    %p333 = scmp.eq.s32.totalorder %s19, 3
    %p334 = por %p332, %p333
    %p335 = scmp.ne.s32.totalorder %s327, %s330
    %p336 = scmp.eq.s32.totalorder %s19, 0
    %p337 = por %p335, %p336
    %p338 = scmp.ne.s32.totalorder %s327, %s330
    %p339 = scmp.eq.s32.totalorder %s24, 3
    %p340 = por %p338, %p339
    %p341 = scmp.ne.s32.totalorder %s330, %s331
    %p342 = scmp.eq.s32.totalorder %s24, 0
    %p343 = por %p341, %p342
    %p344 = scmp.ne.s32.totalorder %s330, %s331
    %p345 = scmp.eq.s32.totalorder %s25, 3
    %p346 = por %p344, %p345
    %p348 = scmp.ne.s32.totalorder %s331, %s347
    %p349 = scmp.eq.s32.totalorder %s25, 0
    %p350 = por %p348, %p349
    %s351 = ssub.s32 %s27, %s34
    %p352 = scmp.eq.s32.totalorder %s351, 0
    %s354 = sadd.s32 %s353, 1
    %s355 = scalar_select %p352, %s353, %s354
    %p358 = pneg %p352
    %p359 = scmp.eq.s32.totalorder %s19, 3
    %p360 = por %p358, %p359
    %p361 = scmp.ne.s32.totalorder %s353, %s356
    %p362 = scmp.eq.s32.totalorder %s19, 0
    %p363 = por %p361, %p362
    %p364 = scmp.ne.s32.totalorder %s353, %s356
    %p365 = scmp.eq.s32.totalorder %s24, 3
    %p366 = por %p364, %p365
    %p367 = scmp.ne.s32.totalorder %s356, %s357
    %p368 = scmp.eq.s32.totalorder %s24, 0
    %p369 = por %p367, %p368
    %p370 = scmp.ne.s32.totalorder %s356, %s357
    %p371 = scmp.eq.s32.totalorder %s25, 3
    %p372 = por %p370, %p371
    %p374 = scmp.ne.s32.totalorder %s357, %s373
    %p375 = scmp.eq.s32.totalorder %s25, 0
    %p376 = por %p374, %p375
    %s377 = ssub.s32 %s26, %s38
    %p378 = scmp.eq.s32.totalorder %s377, 0
    %s380 = sadd.s32 %s379, 1
    %s381 = scalar_select %p378, %s379, %s380
    %p384 = pneg %p378
    %p385 = scmp.eq.s32.totalorder %s19, 3
    %p386 = por %p384, %p385
    %p387 = scmp.ne.s32.totalorder %s379, %s382
    %p388 = scmp.eq.s32.totalorder %s19, 0
    %p389 = por %p387, %p388
    %p390 = scmp.ne.s32.totalorder %s379, %s382
    %p391 = scmp.eq.s32.totalorder %s24, 3
    %p392 = por %p390, %p391
    %p393 = scmp.ne.s32.totalorder %s382, %s383
    %p394 = scmp.eq.s32.totalorder %s24, 0
    %p395 = por %p393, %p394
    %p396 = scmp.ne.s32.totalorder %s382, %s383
    %p397 = scmp.eq.s32.totalorder %s25, 3
    %p398 = por %p396, %p397
    %p400 = scmp.ne.s32.totalorder %s383, %s399
    %p401 = scmp.eq.s32.totalorder %s25, 0
    %p402 = por %p400, %p401
    %p403 = scmp.le.s32.totalorder 1, %s19
    %p404 = scmp.lt.s32.totalorder %s19, 5
    %p405 = pnand %p403, %p404
    %p406 = pneg %p405
    // Predicated region
    $region9: #{gpt_forward.2} parent=5 // pred_check
      _
    $region10: #{gpt_forward.2} parent=5 // pred_check_branch
      %408 = sbr.rel (%p405) target = $region12
    $region11: #{gpt_forward.2} parent=5 // pred_region
      %s409 = ssub.s32 %s19, 1
    $region12: #{gpt_forward.2} parent=5 // pred_fallthru
      _
    %p410 = scmp.lt.s32.totalorder %s19, 4
    // Predicated region
    $region13: #{gpt_forward.2} parent=5 // pred_check
      %p411 = pneg %p410
    $region14: #{gpt_forward.2} parent=5 // pred_check_branch
      %413 = sbr.rel (%p411) target = $region16
    $region15: #{gpt_forward.2} parent=5 // pred_region
      // Predicated region
      $region17: #{gpt_forward.2} parent=15 // pred_check
        %p414 = pneg %p51
      $region18: #{gpt_forward.2} parent=15 // pred_check_branch
        %416 = sbr.rel (%p414) target = $region20
      $region19: #{gpt_forward.2} parent=15 // pred_region
        %p417 = scmp.lt.s32.totalorder %s26, 1
        %s418 = scalar_select %p417, %s26, 1
        %s419 = smul.addr %s418, 2
        %s420 = smul.addr %s419, 8
        %s421 = scalar_lea.vmem %s0, %s420
      $region20: #{gpt_forward.2} parent=15 // pred_fallthru
        _
      // Predicated region
      $region21: #{gpt_forward.2} parent=15 // pred_check
        %p422 = pneg %p77
      $region22: #{gpt_forward.2} parent=15 // pred_check_branch
        %424 = sbr.rel (%p422) target = $region24
      $region23: #{gpt_forward.2} parent=15 // pred_region
        %p425 = scmp.lt.s32.totalorder %s27, 1
        %s426 = scalar_select %p425, %s27, 1
        %s427 = scalar_lea.vmem %s1, %s426
      $region24: #{gpt_forward.2} parent=15 // pred_fallthru
        _
      // Predicated region
      $region25: #{gpt_forward.2} parent=15 // pred_check
        %p428 = pneg %p103
      $region26: #{gpt_forward.2} parent=15 // pred_check_branch
        %430 = sbr.rel (%p428) target = $region28
      $region27: #{gpt_forward.2} parent=15 // pred_region
        %p431 = scmp.lt.s32.totalorder %s27, 1
        %s432 = scalar_select %p431, %s27, 1
        %s433 = scalar_lea.vmem %s2, %s432
      $region28: #{gpt_forward.2} parent=15 // pred_fallthru
        _
      // Predicated region
      $region29: #{gpt_forward.2} parent=15 // pred_check
        %p434 = pneg %p129
      $region30: #{gpt_forward.2} parent=15 // pred_check_branch
        %436 = sbr.rel (%p434) target = $region32
      $region31: #{gpt_forward.2} parent=15 // pred_region
        %p437 = scmp.lt.s32.totalorder %s27, 1
        %s438 = scalar_select %p437, %s27, 1
        %s439 = smul.addr %s438, 4
        %s440 = smul.addr %s439, 4
        %s441 = scalar_lea.vmem %s3, %s440
      $region32: #{gpt_forward.2} parent=15 // pred_fallthru
        _
      // Predicated region
      $region33: #{gpt_forward.2} parent=15 // pred_check
        %p442 = pneg %p155
      $region34: #{gpt_forward.2} parent=15 // pred_check_branch
        %444 = sbr.rel (%p442) target = $region36
      $region35: #{gpt_forward.2} parent=15 // pred_region
        %p445 = scmp.lt.s32.totalorder %s27, 1
        %s446 = scalar_select %p445, %s27, 1
        %s447 = scalar_lea.vmem %s4, %s446
      $region36: #{gpt_forward.2} parent=15 // pred_fallthru
        _
      // Predicated region
      $region37: #{gpt_forward.2} parent=15 // pred_check
        %p448 = pneg %p181
      $region38: #{gpt_forward.2} parent=15 // pred_check_branch
        %450 = sbr.rel (%p448) target = $region40
      $region39: #{gpt_forward.2} parent=15 // pred_region
        %p451 = scmp.lt.s32.totalorder %s27, 1
        %s452 = scalar_select %p451, %s27, 1
        %s453 = smul.addr %s452, 4
        %s454 = smul.addr %s453, 4
        %s455 = scalar_lea.vmem %s5, %s454
      $region40: #{gpt_forward.2} parent=15 // pred_fallthru
        _
      // Predicated region
      $region41: #{gpt_forward.2} parent=15 // pred_check
        %p456 = pneg %p207
      $region42: #{gpt_forward.2} parent=15 // pred_check_branch
        %458 = sbr.rel (%p456) target = $region44
      $region43: #{gpt_forward.2} parent=15 // pred_region
        %p459 = scmp.lt.s32.totalorder %s27, 1
        %s460 = scalar_select %p459, %s27, 1
        %s461 = scalar_lea.vmem %s6, %s460
      $region44: #{gpt_forward.2} parent=15 // pred_fallthru
        _
      // Predicated region
      $region45: #{gpt_forward.2} parent=15 // pred_check
        %p462 = pneg %p233
      $region46: #{gpt_forward.2} parent=15 // pred_check_branch
        %464 = sbr.rel (%p462) target = $region48
      $region47: #{gpt_forward.2} parent=15 // pred_region
        %p465 = scmp.lt.s32.totalorder %s27, 1
        %s466 = scalar_select %p465, %s27, 1
        %s467 = scalar_lea.vmem %s7, %s466
      $region48: #{gpt_forward.2} parent=15 // pred_fallthru
        _
      // Predicated region
      $region49: #{gpt_forward.2} parent=15 // pred_check
        %p468 = pneg %p259
      $region50: #{gpt_forward.2} parent=15 // pred_check_branch
        %470 = sbr.rel (%p468) target = $region52
      $region51: #{gpt_forward.2} parent=15 // pred_region
        %p471 = scmp.lt.s32.totalorder %s27, 1
        %s472 = scalar_select %p471, %s27, 1
        %s473 = scalar_lea.vmem %s8, %s472
      $region52: #{gpt_forward.2} parent=15 // pred_fallthru
        _
      // Predicated region
      $region53: #{gpt_forward.2} parent=15 // pred_check
        %p474 = pneg %p285
      $region54: #{gpt_forward.2} parent=15 // pred_check_branch
        %476 = sbr.rel (%p474) target = $region56
      $region55: #{gpt_forward.2} parent=15 // pred_region
        %p477 = scmp.lt.s32.totalorder %s27, 1
        %s478 = scalar_select %p477, %s27, 1
        %s479 = smul.addr %s478, 4
        %s480 = smul.addr %s479, 4
        %s481 = scalar_lea.vmem %s9, %s480
      $region56: #{gpt_forward.2} parent=15 // pred_fallthru
        _
      // Predicated region
      $region57: #{gpt_forward.2} parent=15 // pred_check
        %p482 = pneg %p311
      $region58: #{gpt_forward.2} parent=15 // pred_check_branch
        %484 = sbr.rel (%p482) target = $region60
      $region59: #{gpt_forward.2} parent=15 // pred_region
        %p485 = scmp.lt.s32.totalorder %s27, 1
        %s486 = scalar_select %p485, %s27, 1
        %s487 = scalar_lea.vmem %s10, %s486
      $region60: #{gpt_forward.2} parent=15 // pred_fallthru
        _
      // Predicated region
      $region61: #{gpt_forward.2} parent=15 // pred_check
        %p488 = pneg %p337
      $region62: #{gpt_forward.2} parent=15 // pred_check_branch
        %490 = sbr.rel (%p488) target = $region64
      $region63: #{gpt_forward.2} parent=15 // pred_region
        %p491 = scmp.lt.s32.totalorder %s27, 1
        %s492 = scalar_select %p491, %s27, 1
        %s493 = smul.addr %s492, 16
        %s494 = smul.addr %s493, 4
        %s495 = scalar_lea.vmem %s11, %s494
      $region64: #{gpt_forward.2} parent=15 // pred_fallthru
        _
      // Predicated region
      $region65: #{gpt_forward.2} parent=15 // pred_check
        %p496 = pneg %p363
      $region66: #{gpt_forward.2} parent=15 // pred_check_branch
        %498 = sbr.rel (%p496) target = $region68
      $region67: #{gpt_forward.2} parent=15 // pred_region
        %p499 = scmp.lt.s32.totalorder %s27, 1
        %s500 = scalar_select %p499, %s27, 1
        %s501 = scalar_lea.vmem %s12, %s500
      $region68: #{gpt_forward.2} parent=15 // pred_fallthru
        _
    $region16: #{gpt_forward.2} parent=5 // pred_fallthru
      _
    %p502 = scmp.le.s32.totalorder 1, %s19
    %p503 = scmp.lt.s32.totalorder %s19, 5
    %p504 = pnand %p502, %p503
    %p505 = pneg %p504
    // Predicated region
    $region69: #{gpt_forward.2} parent=5 // pred_check
      _
    $region70: #{gpt_forward.2} parent=5 // pred_check_branch
      %507 = sbr.rel (%p504) target = $region72
    $region71: #{gpt_forward.2} parent=5 // pred_region
      %s508 = ssub.s32 %s19, 1
      %p509 = scmp.lt.s32.totalorder %s28, 1
      %s510 = scalar_select %p509, %s28, 1
      %s511 = smul.addr %s510, 2
      %s512 = smul.addr %s511, 8
      %s513 = scalar_lea.vmem %s0, %s512
      %p514 = pneg %p57
      %p515 = pneg %p54
      %p516 = scmp.lt.s32.totalorder %s29, 1
      %s517 = scalar_select %p516, %s29, 1
      %s518 = scalar_lea.vmem %s1, %s517
      %p519 = pneg %p83
      %p520 = pneg %p80
      %p521 = scmp.lt.s32.totalorder %s29, 1
      %s522 = scalar_select %p521, %s29, 1
      %s523 = scalar_lea.vmem %s2, %s522
      %p524 = pneg %p109
      %p525 = pneg %p106
      %p526 = scmp.lt.s32.totalorder %s29, 1
      %s527 = scalar_select %p526, %s29, 1
      %s528 = smul.addr %s527, 4
      %s529 = smul.addr %s528, 4
      %s530 = scalar_lea.vmem %s3, %s529
      %p531 = pneg %p135
      %p532 = pneg %p132
      %p533 = scmp.lt.s32.totalorder %s29, 1
      %s534 = scalar_select %p533, %s29, 1
      %s535 = scalar_lea.vmem %s4, %s534
      %p536 = pneg %p161
      %p537 = pneg %p158
      %p538 = scmp.lt.s32.totalorder %s29, 1
      %s539 = scalar_select %p538, %s29, 1
      %s540 = smul.addr %s539, 4
      %s541 = smul.addr %s540, 4
      %s542 = scalar_lea.vmem %s5, %s541
      %p543 = pneg %p187
      %p544 = pneg %p184
      %p545 = scmp.lt.s32.totalorder %s29, 1
      %s546 = scalar_select %p545, %s29, 1
      %s547 = scalar_lea.vmem %s6, %s546
      %p548 = pneg %p213
      %p549 = pneg %p210
      %p550 = scmp.lt.s32.totalorder %s29, 1
      %s551 = scalar_select %p550, %s29, 1
      %s552 = scalar_lea.vmem %s7, %s551
      %p553 = pneg %p239
      %p554 = pneg %p236
      %p555 = scmp.lt.s32.totalorder %s29, 1
      %s556 = scalar_select %p555, %s29, 1
      %s557 = scalar_lea.vmem %s8, %s556
      %p558 = pneg %p265
      %p559 = pneg %p262
      %p560 = scmp.lt.s32.totalorder %s29, 1
      %s561 = scalar_select %p560, %s29, 1
      %s562 = smul.addr %s561, 4
      %s563 = smul.addr %s562, 4
      %s564 = scalar_lea.vmem %s9, %s563
      %p565 = pneg %p291
      %p566 = pneg %p288
      %p567 = scmp.lt.s32.totalorder %s29, 1
      %s568 = scalar_select %p567, %s29, 1
      %s569 = scalar_lea.vmem %s10, %s568
      %p570 = pneg %p317
      %p571 = pneg %p314
      %p572 = scmp.lt.s32.totalorder %s29, 1
      %s573 = scalar_select %p572, %s29, 1
      %s574 = smul.addr %s573, 16
      %s575 = smul.addr %s574, 4
      %s576 = scalar_lea.vmem %s11, %s575
      %p577 = pneg %p343
      %p578 = pneg %p340
      %p579 = scmp.lt.s32.totalorder %s29, 1
      %s580 = scalar_select %p579, %s29, 1
      %s581 = scalar_lea.vmem %s12, %s580
      %p582 = pneg %p369
      %p583 = pneg %p366
      %p584 = pneg %p395
      %p585 = pneg %p392
      %p586 = scmp.lt.s32.totalorder %s28, 1
      %s587 = scalar_select %p586, %s28, 1
      %s588 = smul.addr %s587, 2
      %s589 = smul.addr %s588, 4
      %s590 = scalar_lea.vmem %s13, %s589
      %p591 = scmp.lt.s32.totalorder %s28, 1
      %s592 = scalar_select %p591, %s28, 1
      %s593 = smul.addr %s592, 2
      %s594 = smul.addr %s593, 8
      %s595 = scalar_lea.vmem %s0, %s594
      %p596 = scmp.lt.s32.totalorder %s29, 1
      %s597 = scalar_select %p596, %s29, 1
      %s598 = scalar_lea.vmem %s1, %s597
      %p599 = scmp.lt.s32.totalorder %s29, 1
      %s600 = scalar_select %p599, %s29, 1
      %s601 = scalar_lea.vmem %s2, %s600
      %p602 = scmp.lt.s32.totalorder %s29, 1
      %s603 = scalar_select %p602, %s29, 1
      %s604 = smul.addr %s603, 4
      %s605 = smul.addr %s604, 4
      %s606 = scalar_lea.vmem %s3, %s605
      %p607 = scmp.lt.s32.totalorder %s29, 1
      %s608 = scalar_select %p607, %s29, 1
      %s609 = scalar_lea.vmem %s4, %s608
      %p610 = scmp.lt.s32.totalorder %s29, 1
      %s611 = scalar_select %p610, %s29, 1
      %s612 = smul.addr %s611, 4
      %s613 = smul.addr %s612, 4
      %s614 = scalar_lea.vmem %s5, %s613
      %p615 = scmp.lt.s32.totalorder %s29, 1
      %s616 = scalar_select %p615, %s29, 1
      %s617 = scalar_lea.vmem %s6, %s616
      %p618 = scmp.lt.s32.totalorder %s29, 1
      %s619 = scalar_select %p618, %s29, 1
      %s620 = scalar_lea.vmem %s7, %s619
      %p621 = scmp.lt.s32.totalorder %s29, 1
      %s622 = scalar_select %p621, %s29, 1
      %s623 = scalar_lea.vmem %s8, %s622
      %p624 = scmp.lt.s32.totalorder %s29, 1
      %s625 = scalar_select %p624, %s29, 1
      %s626 = smul.addr %s625, 4
      %s627 = smul.addr %s626, 4
      %s628 = scalar_lea.vmem %s9, %s627
      %p629 = scmp.lt.s32.totalorder %s29, 1
      %s630 = scalar_select %p629, %s29, 1
      %s631 = scalar_lea.vmem %s10, %s630
      %p632 = scmp.lt.s32.totalorder %s29, 1
      %s633 = scalar_select %p632, %s29, 1
      %s634 = smul.addr %s633, 16
      %s635 = smul.addr %s634, 4
      %s636 = scalar_lea.vmem %s11, %s635
      %p637 = scmp.lt.s32.totalorder %s29, 1
      %s638 = scalar_select %p637, %s29, 1
      %s639 = scalar_lea.vmem %s12, %s638
      %p640 = scmp.lt.s32.totalorder %s28, 1
      %s641 = scalar_select %p640, %s28, 1
      %s642 = smul.addr %s641, 2
      %s643 = smul.addr %s642, 4
      %s644 = scalar_lea.vmem %s13, %s643
      %p646 = scmp.eq.s32.totalorder %s29, 0
      // Predicated region
      $region73: #{gpt_forward.2} parent=71 // pred_check
        %p647 = pneg %p646
      $region74: #{gpt_forward.2} parent=71 // pred_check_branch
        %649 = sbr.rel (%p647) target = $region76
      $region75: #{gpt_forward.2} parent=71 // pred_region
        %v650 = vld [vmem:[%s595] sm:$0xff]
        %v651 = vld [vmem:[%s595 + $0x8] sm:$0x1]
        %vm652 = vcmask 261120
        %653 = vst.msk [vmem:[#allocation2] sm:$0xff] %vm652, %v650
        %vm654 = vcmask 253952
        %655 = vst.msk [vmem:[#allocation2 + $0x8] sm:$0x1] %vm654, %v651
        %v656 = vlaneseq
        %v657 = vshrl.u32 %v656, 7
        %v658 = vadd.s32 %v657, 8
        %v659 = vlaneseq
        %v660 = vand.u32 %v659, 127
        %vm661 = vcmp.gt.s32.totalorder %v660, %v657
        %vm662 = vcmp.gt.s32.totalorder %v660, %v658
        %v663 = vsel %vm661, -1e+30, 0.0
        %v664 = vsel %vm662, -1e+30, 0.0
        %vm665 = vcmask 72704
        %666 = vst.msk [vmem:[#allocation3] sm:$0xff] %vm665, %v663
        %vm667 = vcmask 65536
        %668 = vst.msk [vmem:[#allocation3 + $0x8] sm:$0x1] %vm667, %v664
      $region76: #{gpt_forward.2} parent=71 // pred_fallthru
        _
      %v669 = vld [vmem:[#allocation2] sm:$0xff]
      %v670 = vld [vmem:[#allocation2 + $0x8] sm:$0x1]
      %v671 = vld [vmem:[#allocation3] sm:$0xff]
      %v672 = vld [vmem:[#allocation3 + $0x8] sm:$0x1]
      %v673 = vld [vmem:[%s598] sm:$0x1]
      %v674 = vld [vmem:[%s601] sm:$0x1]
      %vm675 = vcmask 261120
      %v676 = vsel %vm675, %v669, 0.0
      %677 = vadd.xlane.f32.xlu0 %v676
      %v678 = vpop.xlane.xlu0 %677
      %vm679 = vcmask 253952
      %v680 = vsel %vm679, %v670, 0.0
      %681 = vadd.xlane.f32.xlu0 %v680
      %v682 = vpop.xlane.xlu0 %681
      %v683 = vrcp.pop 32.0
      %v684 = vmul.f32 %v678, %v683
      %v685 = vmul.f32 %v682, %v683
      %v686 = vsub.f32 %v669, %v684
      %v687 = vsub.f32 %v670, %v685
      %v688 = vmul.f32 %v686, %v686
      %v689 = vmul.f32 %v687, %v687
      %v690 = vsel %vm675, %v688, 0.0
      %691 = vadd.xlane.f32.xlu0 %v690
      %v692 = vpop.xlane.xlu0 %691
      %v693 = vsel %vm679, %v689, 0.0
      %694 = vadd.xlane.f32.xlu0 %v693
      %v695 = vpop.xlane.xlu0 %694
      %v696 = vmul.f32 %v692, %v683
      %v697 = vmul.f32 %v695, %v683
      %v698 = vadd.f32 %v696, 1e-05
      %v699 = vadd.f32 %v697, 1e-05
      %v700 = vrsqrt.pop %v698
      %v701 = vrsqrt.pop %v699
      %v702 = vmul.f32 %v686, %v700
      %v703 = vmul.f32 %v687, %v701
      %v705 = vlaneseq
      %v706 = vshrl.u32 %v705, 7
      %v707 = vsub.s32 0, %v706
      %v708 = vrot.slane %v673, %v707
      %v710 = vmul.f32 %v702, %v708
      %v711 = vmul.f32 %v703, %v708
      %v713 = vlaneseq
      %v714 = vshrl.u32 %v713, 7
      %v715 = vsub.s32 0, %v714
      %v716 = vrot.slane %v674, %v715
      %v718 = vadd.f32 %v710, %v716
      %v719 = vadd.f32 %v711, %v716
      %v720 = vpack.c.bf16 %v719, %v718
      %v721 = vld [vmem:[%s606] sm:$0xf]
      %v722 = vld [vmem:[%s606 + $0x4] sm:$0xf]
      %v723 = vld [vmem:[%s606 + $0x8] sm:$0xf]
      %v724 = vld [vmem:[%s606 + $0xc] sm:$0xf]
      %v725 = vld [vmem:[%s609] sm:$0x1]
      %v727 = vlaneseq
      %v728 = vshrl.u32 %v727, 7
      %v729 = vsub.s32 0, %v728
      %v730 = vrot.slane %v725, %v729
      %v736 = vunpack.c.l.b16 %v721
      %v737 = vunpack.c.l.b16 %v722
      %v738 = vunpack.c.l.b16 %v723
      %v739 = vunpack.c.l.b16 %v724
      %v740 = vpack.c.b16 %v737, %v736
      %v741 = vpack.c.b16 %v739, %v738
      %v745 = vsel %vm675, %v720, 0
      %747 = vmatprep.subr.bf16.mxu0 0
      %748 = vmatpush1.bf16.msra.mxu0 %v740
      %749 = vmatprep.subr.bf16.mxu0 0
      %750 = vmatpush1.bf16.msra.mxu0 %v741
      %751 = vmatprep.subr.bf16.mxu0 0
      %752 = vmatpush1.bf16.msra.mxu0 0
      %753 = vmatprep.subr.bf16.mxu0 0
      %754 = vmatpush1.bf16.msra.mxu0 0
      %755 = vmatprep.subr.bf16.mxu0 0
      %756 = vmatpush1.bf16.msra.mxu0 0
      %757 = vmatprep.subr.bf16.mxu0 0
      %758 = vmatpush1.bf16.msra.mxu0 0
      %759 = vmatprep.subr.bf16.mxu0 0
      %760 = vmatpush1.bf16.msra.mxu0 0
      %761 = vmatprep.subr.bf16.mxu0 0
      %762 = vmatpush1.bf16.msra.mxu0 0
      %763 = vmatprep.subr.bf16.mxu0 0
      %764 = vmatpush1.bf16.msra.mxu0 0
      %765 = vmatprep.subr.bf16.mxu0 0
      %766 = vmatpush1.bf16.msra.mxu0 0
      %767 = vmatprep.subr.bf16.mxu0 0
      %768 = vmatpush1.bf16.msra.mxu0 0
      %769 = vmatprep.subr.bf16.mxu0 0
      %770 = vmatpush1.bf16.msra.mxu0 0
      %771 = vmatprep.subr.bf16.mxu0 0
      %772 = vmatpush1.bf16.msra.mxu0 0
      %773 = vmatprep.subr.bf16.mxu0 0
      %774 = vmatpush1.bf16.msra.mxu0 0
      %775 = vmatprep.subr.bf16.mxu0 0
      %776 = vmatpush1.bf16.msra.mxu0 0
      %777 = vmatprep.subr.bf16.mxu0 0
      %778 = vmatpush1.bf16.msra.mxu0 0
      %779 = vmatprep.mubr.bf16.mxu0 0
      %780 = vmatmul.mubr.bf16.gmra.mrb[0].mxu0 %v745
      %v781 = vpop.f32.mrb[0].mxu0
      %v782 = vadd.f32 %v730, %v781
      %v783 = vpop.f32.mrb[0].mxu0
      %v784 = vpop.f32.mrb[0].mxu0
      %v785 = vadd.f32 %v730, %v784
      %v786 = vpop.f32.mrb[0].mxu0
      %787 = vdwg.mxu0
      %790 = vrot.lane.b32.xlu0 %v782, 96
      %v791 = vpop.permute.xlu0 %790
      %792 = vrot.lane.b32.xlu0 %v785, 96
      %v793 = vpop.permute.xlu0 %792
      %vm794 = vcmask 64512
      %v795 = vsel %vm794, %v782, 0
      %v797 = vsel %vm794, %v785, 0
      %v799 = vsel %vm794, %v791, 0
      %v801 = vsel %vm794, %v793, 0
      %803 = vmatprep.subr.mxu0 0.0
      %804 = vmatpush1.xpose.msra.mxu0 %v799
      %805 = vmatprep.subr.mxu0 0.0
      %806 = vmatpush1.xpose.msra.mxu0 %v801
      %807 = vmatprep.subr.mxu0 0.0
      %808 = vmatpush1.xpose.msra.mxu0 0.0
      %809 = vmatprep.subr.mxu0 0.0
      %810 = vmatpush1.xpose.msra.mxu0 0.0
      %811 = vmatprep.subr.mxu0 0.0
      %812 = vmatpush1.xpose.msra.mxu0 0.0
      %813 = vmatprep.subr.mxu0 0.0
      %814 = vmatpush1.xpose.msra.mxu0 0.0
      %815 = vmatprep.subr.mxu0 0.0
      %816 = vmatpush1.xpose.msra.mxu0 0.0
      %817 = vmatprep.subr.mxu0 0.0
      %818 = vmatpush1.xpose.msra.mxu0 0.0
      %819 = vmatprep.subr.mxu0 0.0
      %820 = vmatpush1.xpose.msra.mxu0 0.0
      %821 = vmatprep.subr.mxu0 0.0
      %822 = vmatpush1.xpose.msra.mxu0 0.0
      %823 = vmatprep.subr.mxu0 0.0
      %824 = vmatpush1.xpose.msra.mxu0 0.0
      %825 = vmatprep.subr.mxu0 0.0
      %826 = vmatpush1.xpose.msra.mxu0 0.0
      %827 = vmatprep.subr.mxu0 0.0
      %828 = vmatpush1.xpose.msra.mxu0 0.0
      %829 = vmatprep.subr.mxu0 0.0
      %830 = vmatpush1.xpose.msra.mxu0 0.0
      %831 = vmatprep.subr.mxu0 0.0
      %832 = vmatpush1.xpose.msra.mxu0 0.0
      %833 = vmatprep.subr.mxu0 0.0
      %834 = vmatpush1.xpose.msra.mxu0 0.0
      %835 = vmatprep.subr.mxu0 0.0
      %836 = vmatpush1.xpose.msra.mxu0 0.0
      %837 = vmatprep.subr.mxu0 0.0
      %838 = vmatpush1.xpose.msra.mxu0 0.0
      %839 = vmatprep.subr.mxu0 0.0
      %840 = vmatpush1.xpose.msra.mxu0 0.0
      %841 = vmatprep.subr.mxu0 0.0
      %842 = vmatpush1.xpose.msra.mxu0 0.0
      %843 = vmatprep.subr.mxu0 0.0
      %844 = vmatpush1.xpose.msra.mxu0 0.0
      %845 = vmatprep.subr.mxu0 0.0
      %846 = vmatpush1.xpose.msra.mxu0 0.0
      %847 = vmatprep.subr.mxu0 0.0
      %848 = vmatpush1.xpose.msra.mxu0 0.0
      %849 = vmatprep.subr.mxu0 0.0
      %850 = vmatpush1.xpose.msra.mxu0 0.0
      %851 = vmatprep.subr.mxu0 0.0
      %852 = vmatpush1.xpose.msra.mxu0 0.0
      %853 = vmatprep.subr.mxu0 0.0
      %854 = vmatpush1.xpose.msra.mxu0 0.0
      %855 = vmatprep.subr.mxu0 0.0
      %856 = vmatpush1.xpose.msra.mxu0 0.0
      %857 = vmatprep.subr.mxu0 0.0
      %858 = vmatpush1.xpose.msra.mxu0 0.0
      %859 = vmatprep.subr.mxu0 0.0
      %860 = vmatpush1.xpose.msra.mxu0 0.0
      %861 = vmatprep.subr.mxu0 0.0
      %862 = vmatpush1.xpose.msra.mxu0 0.0
      %863 = vmatprep.subr.mxu0 0.0
      %864 = vmatpush1.xpose.msra.mxu0 0.0
      %865 = vmatprep.subr.mxu0 0.0
      %866 = vmatpush1.xpose.msra.mxu0 0.0
      %867 = vmatprep.mubr.f32.mxu0 0.0
      %868 = vmatmul.mubr.f32.gmra.mrb[0].mxu0 %v795
      %v869 = vpop.f32.mrb[0].mxu0
      %v870 = vadd.f32 %v671, %v869
      %v871 = vpop.f32.mrb[0].mxu0
      %872 = vmatprep.mubr.f32.mxu0 0.0
      %873 = vmatmul.mubr.f32.gmra.mrb[0].mxu0 %v797
      %v874 = vpop.f32.mrb[0].mxu0
      %v875 = vadd.f32 %v672, %v874
      %v876 = vpop.f32.mrb[0].mxu0
      %877 = vdwg.mxu0
      %vm878 = vcmask 72704
      %v879 = vsel %vm878, %v870, -inf
      %880 = vmax.xlane.f32.xlu0 %v879
      %v881 = vpop.xlane.xlu0 %880
      %vm882 = vcmask 65536
      %v883 = vsel %vm882, %v875, -inf
      %884 = vmax.xlane.f32.xlu0 %v883
      %v885 = vpop.xlane.xlu0 %884
      %v886 = vsub.f32 %v870, %v881
      %v887 = vsub.f32 %v875, %v885
      %v888 = vmul.f32 %v886, 1.442695
      %v889 = vpow.pop %v888
      %v890 = vmul.f32 %v887, 1.442695
      %v891 = vpow.pop %v890
      %v892 = vsel %vm878, %v889, 0.0
      %893 = vadd.xlane.f32.xlu0 %v892
      %v894 = vpop.xlane.xlu0 %893
      %v895 = vsel %vm882, %v891, 0.0
      %896 = vadd.xlane.f32.xlu0 %v895
      %v897 = vpop.xlane.xlu0 %896
      %v898 = vrcp.pop %v894
      %v899 = vrcp.pop %v897
      %v900 = vmul.f32 %v889, %v898
      %v901 = vmul.f32 %v891, %v899
      %902 = vrot.lane.b32.xlu0 %v782, 64
      %v903 = vpop.permute.xlu0 %902
      %904 = vrot.lane.b32.xlu0 %v785, 64
      %v905 = vpop.permute.xlu0 %904
      %v908 = vsel %vm878, %v900, 0
      %v911 = vsel %vm878, %v901, 0
      %vm913 = vcmask 1040384
      %v914 = vsel %vm913, %v905, 0
      %916 = vmatprep.subr.mxu0 0.0
      %917 = vmatpush1.msra.mxu0 %v903
      %918 = vmatprep.subr.mxu0 0.0
      %919 = vmatpush1.msra.mxu0 %v914
      %920 = vmatprep.subr.mxu0 0.0
      %921 = vmatpush1.msra.mxu0 0.0
      %922 = vmatprep.subr.mxu0 0.0
      %923 = vmatpush1.msra.mxu0 0.0
      %924 = vmatprep.subr.mxu0 0.0
      %925 = vmatpush1.msra.mxu0 0.0
      %926 = vmatprep.subr.mxu0 0.0
      %927 = vmatpush1.msra.mxu0 0.0
      %928 = vmatprep.subr.mxu0 0.0
      %929 = vmatpush1.msra.mxu0 0.0
      %930 = vmatprep.subr.mxu0 0.0
      %931 = vmatpush1.msra.mxu0 0.0
      %932 = vmatprep.subr.mxu0 0.0
      %933 = vmatpush1.msra.mxu0 0.0
      %934 = vmatprep.subr.mxu0 0.0
      %935 = vmatpush1.msra.mxu0 0.0
      %936 = vmatprep.subr.mxu0 0.0
      %937 = vmatpush1.msra.mxu0 0.0
      %938 = vmatprep.subr.mxu0 0.0
      %939 = vmatpush1.msra.mxu0 0.0
      %940 = vmatprep.subr.mxu0 0.0
      %941 = vmatpush1.msra.mxu0 0.0
      %942 = vmatprep.subr.mxu0 0.0
      %943 = vmatpush1.msra.mxu0 0.0
      %944 = vmatprep.subr.mxu0 0.0
      %945 = vmatpush1.msra.mxu0 0.0
      %946 = vmatprep.subr.mxu0 0.0
      %947 = vmatpush1.msra.mxu0 0.0
      %948 = vmatprep.subr.mxu0 0.0
      %949 = vmatpush1.msra.mxu0 0.0
      %950 = vmatprep.subr.mxu0 0.0
      %951 = vmatpush1.msra.mxu0 0.0
      %952 = vmatprep.subr.mxu0 0.0
      %953 = vmatpush1.msra.mxu0 0.0
      %954 = vmatprep.subr.mxu0 0.0
      %955 = vmatpush1.msra.mxu0 0.0
      %956 = vmatprep.subr.mxu0 0.0
      %957 = vmatpush1.msra.mxu0 0.0
      %958 = vmatprep.subr.mxu0 0.0
      %959 = vmatpush1.msra.mxu0 0.0
      %960 = vmatprep.subr.mxu0 0.0
      %961 = vmatpush1.msra.mxu0 0.0
      %962 = vmatprep.subr.mxu0 0.0
      %963 = vmatpush1.msra.mxu0 0.0
      %964 = vmatprep.subr.mxu0 0.0
      %965 = vmatpush1.msra.mxu0 0.0
      %966 = vmatprep.subr.mxu0 0.0
      %967 = vmatpush1.msra.mxu0 0.0
      %968 = vmatprep.subr.mxu0 0.0
      %969 = vmatpush1.msra.mxu0 0.0
      %970 = vmatprep.subr.mxu0 0.0
      %971 = vmatpush1.msra.mxu0 0.0
      %972 = vmatprep.subr.mxu0 0.0
      %973 = vmatpush1.msra.mxu0 0.0
      %974 = vmatprep.subr.mxu0 0.0
      %975 = vmatpush1.msra.mxu0 0.0
      %976 = vmatprep.subr.mxu0 0.0
      %977 = vmatpush1.msra.mxu0 0.0
      %978 = vmatprep.subr.mxu0 0.0
      %979 = vmatpush1.msra.mxu0 0.0
      %980 = vmatprep.mubr.f32.mxu0 0.0
      %981 = vmatmul.mubr.f32.gmra.mrb[0].mxu0 %v908
      %v982 = vpop.f32.mrb[0].mxu0
      %v983 = vadd.f32 0.0, %v982
      %v984 = vpop.f32.mrb[0].mxu0
      %985 = vmatprep.mubr.f32.mxu0 0.0
      %986 = vmatmul.mubr.f32.gmra.mrb[0].mxu0 %v911
      %v987 = vpop.f32.mrb[0].mxu0
      %v988 = vadd.f32 0.0, %v987
      %v989 = vpop.f32.mrb[0].mxu0
      %990 = vdwg.mxu0
      %991 = vrot.lane.b32.xlu0 %v782, 120
      %v992 = vpop.permute.xlu0 %991
      %993 = vrot.lane.b32.xlu0 %v785, 120
      %v994 = vpop.permute.xlu0 %993
      %995 = vrot.lane.b32.xlu0 %v782, 88
      %v996 = vpop.permute.xlu0 %995
      %997 = vrot.lane.b32.xlu0 %v785, 88
      %v998 = vpop.permute.xlu0 %997
      %v999 = vsel %vm794, %v992, 0
      %v1001 = vsel %vm794, %v994, 0
      %v1003 = vsel %vm794, %v996, 0
      %v1005 = vsel %vm794, %v998, 0
      %1007 = vmatprep.subr.mxu0 0.0
      %1008 = vmatpush1.xpose.msra.mxu0 %v1003
      %1009 = vmatprep.subr.mxu0 0.0
      %1010 = vmatpush1.xpose.msra.mxu0 %v1005
      %1011 = vmatprep.subr.mxu0 0.0
      %1012 = vmatpush1.xpose.msra.mxu0 0.0
      %1013 = vmatprep.subr.mxu0 0.0
      %1014 = vmatpush1.xpose.msra.mxu0 0.0
      %1015 = vmatprep.subr.mxu0 0.0
      %1016 = vmatpush1.xpose.msra.mxu0 0.0
      %1017 = vmatprep.subr.mxu0 0.0
      %1018 = vmatpush1.xpose.msra.mxu0 0.0
      %1019 = vmatprep.subr.mxu0 0.0
      %1020 = vmatpush1.xpose.msra.mxu0 0.0
      %1021 = vmatprep.subr.mxu0 0.0
      %1022 = vmatpush1.xpose.msra.mxu0 0.0
      %1023 = vmatprep.subr.mxu0 0.0
      %1024 = vmatpush1.xpose.msra.mxu0 0.0
      %1025 = vmatprep.subr.mxu0 0.0
      %1026 = vmatpush1.xpose.msra.mxu0 0.0
      %1027 = vmatprep.subr.mxu0 0.0
      %1028 = vmatpush1.xpose.msra.mxu0 0.0
      %1029 = vmatprep.subr.mxu0 0.0
      %1030 = vmatpush1.xpose.msra.mxu0 0.0
      %1031 = vmatprep.subr.mxu0 0.0
      %1032 = vmatpush1.xpose.msra.mxu0 0.0
      %1033 = vmatprep.subr.mxu0 0.0
      %1034 = vmatpush1.xpose.msra.mxu0 0.0
      %1035 = vmatprep.subr.mxu0 0.0
      %1036 = vmatpush1.xpose.msra.mxu0 0.0
      %1037 = vmatprep.subr.mxu0 0.0
      %1038 = vmatpush1.xpose.msra.mxu0 0.0
      %1039 = vmatprep.subr.mxu0 0.0
      %1040 = vmatpush1.xpose.msra.mxu0 0.0
      %1041 = vmatprep.subr.mxu0 0.0
      %1042 = vmatpush1.xpose.msra.mxu0 0.0
      %1043 = vmatprep.subr.mxu0 0.0
      %1044 = vmatpush1.xpose.msra.mxu0 0.0
      %1045 = vmatprep.subr.mxu0 0.0
      %1046 = vmatpush1.xpose.msra.mxu0 0.0
      %1047 = vmatprep.subr.mxu0 0.0
      %1048 = vmatpush1.xpose.msra.mxu0 0.0
      %1049 = vmatprep.subr.mxu0 0.0
      %1050 = vmatpush1.xpose.msra.mxu0 0.0
      %1051 = vmatprep.subr.mxu0 0.0
      %1052 = vmatpush1.xpose.msra.mxu0 0.0
      %1053 = vmatprep.subr.mxu0 0.0
      %1054 = vmatpush1.xpose.msra.mxu0 0.0
      %1055 = vmatprep.subr.mxu0 0.0
      %1056 = vmatpush1.xpose.msra.mxu0 0.0
      %1057 = vmatprep.subr.mxu0 0.0
      %1058 = vmatpush1.xpose.msra.mxu0 0.0
      %1059 = vmatprep.subr.mxu0 0.0
      %1060 = vmatpush1.xpose.msra.mxu0 0.0
      %1061 = vmatprep.subr.mxu0 0.0
      %1062 = vmatpush1.xpose.msra.mxu0 0.0
      %1063 = vmatprep.subr.mxu0 0.0
      %1064 = vmatpush1.xpose.msra.mxu0 0.0
      %1065 = vmatprep.subr.mxu0 0.0
      %1066 = vmatpush1.xpose.msra.mxu0 0.0
      %1067 = vmatprep.subr.mxu0 0.0
      %1068 = vmatpush1.xpose.msra.mxu0 0.0
      %1069 = vmatprep.subr.mxu0 0.0
      %1070 = vmatpush1.xpose.msra.mxu0 0.0
      %1071 = vmatprep.mubr.f32.mxu0 0.0
      %1072 = vmatmul.mubr.f32.gmra.mrb[0].mxu0 %v999
      %v1073 = vpop.f32.mrb[0].mxu0
      %v1074 = vadd.f32 %v671, %v1073
      %v1075 = vpop.f32.mrb[0].mxu0
      %1076 = vmatprep.mubr.f32.mxu0 0.0
      %1077 = vmatmul.mubr.f32.gmra.mrb[0].mxu0 %v1001
      %v1078 = vpop.f32.mrb[0].mxu0
      %v1079 = vadd.f32 %v672, %v1078
      %v1080 = vpop.f32.mrb[0].mxu0
      %1081 = vdwg.mxu0
      %v1082 = vsel %vm878, %v1074, -inf
      %1083 = vmax.xlane.f32.xlu0 %v1082
      %v1084 = vpop.xlane.xlu0 %1083
      %v1085 = vsel %vm882, %v1079, -inf
      %1086 = vmax.xlane.f32.xlu0 %v1085
      %v1087 = vpop.xlane.xlu0 %1086
      %v1088 = vsub.f32 %v1074, %v1084
      %v1089 = vsub.f32 %v1079, %v1087
      %v1090 = vmul.f32 %v1088, 1.442695
      %v1091 = vpow.pop %v1090
      %v1092 = vmul.f32 %v1089, 1.442695
      %v1093 = vpow.pop %v1092
      %v1094 = vsel %vm878, %v1091, 0.0
      %1095 = vadd.xlane.f32.xlu0 %v1094
      %v1096 = vpop.xlane.xlu0 %1095
      %v1097 = vsel %vm882, %v1093, 0.0
      %1098 = vadd.xlane.f32.xlu0 %v1097
      %v1099 = vpop.xlane.xlu0 %1098
      %v1100 = vrcp.pop %v1096
      %v1101 = vrcp.pop %v1099
      %v1102 = vmul.f32 %v1091, %v1100
      %v1103 = vmul.f32 %v1093, %v1101
      %1104 = vrot.lane.b32.xlu0 %v782, 56
      %v1105 = vpop.permute.xlu0 %1104
      %1106 = vrot.lane.b32.xlu0 %v785, 56
      %v1107 = vpop.permute.xlu0 %1106
      %v1110 = vsel %vm878, %v1102, 0
      %v1113 = vsel %vm878, %v1103, 0
      %v1115 = vsel %vm913, %v1107, 0
      %1117 = vmatprep.subr.mxu0 0.0
      %1118 = vmatpush1.msra.mxu0 %v1105
      %1119 = vmatprep.subr.mxu0 0.0
      %1120 = vmatpush1.msra.mxu0 %v1115
      %1121 = vmatprep.subr.mxu0 0.0
      %1122 = vmatpush1.msra.mxu0 0.0
      %1123 = vmatprep.subr.mxu0 0.0
      %1124 = vmatpush1.msra.mxu0 0.0
      %1125 = vmatprep.subr.mxu0 0.0
      %1126 = vmatpush1.msra.mxu0 0.0
      %1127 = vmatprep.subr.mxu0 0.0
      %1128 = vmatpush1.msra.mxu0 0.0
      %1129 = vmatprep.subr.mxu0 0.0
      %1130 = vmatpush1.msra.mxu0 0.0
      %1131 = vmatprep.subr.mxu0 0.0
      %1132 = vmatpush1.msra.mxu0 0.0
      %1133 = vmatprep.subr.mxu0 0.0
      %1134 = vmatpush1.msra.mxu0 0.0
      %1135 = vmatprep.subr.mxu0 0.0
      %1136 = vmatpush1.msra.mxu0 0.0
      %1137 = vmatprep.subr.mxu0 0.0
      %1138 = vmatpush1.msra.mxu0 0.0
      %1139 = vmatprep.subr.mxu0 0.0
      %1140 = vmatpush1.msra.mxu0 0.0
      %1141 = vmatprep.subr.mxu0 0.0
      %1142 = vmatpush1.msra.mxu0 0.0
      %1143 = vmatprep.subr.mxu0 0.0
      %1144 = vmatpush1.msra.mxu0 0.0
      %1145 = vmatprep.subr.mxu0 0.0
      %1146 = vmatpush1.msra.mxu0 0.0
      %1147 = vmatprep.subr.mxu0 0.0
      %1148 = vmatpush1.msra.mxu0 0.0
      %1149 = vmatprep.subr.mxu0 0.0
      %1150 = vmatpush1.msra.mxu0 0.0
      %1151 = vmatprep.subr.mxu0 0.0
      %1152 = vmatpush1.msra.mxu0 0.0
      %1153 = vmatprep.subr.mxu0 0.0
      %1154 = vmatpush1.msra.mxu0 0.0
      %1155 = vmatprep.subr.mxu0 0.0
      %1156 = vmatpush1.msra.mxu0 0.0
      %1157 = vmatprep.subr.mxu0 0.0
      %1158 = vmatpush1.msra.mxu0 0.0
      %1159 = vmatprep.subr.mxu0 0.0
      %1160 = vmatpush1.msra.mxu0 0.0
      %1161 = vmatprep.subr.mxu0 0.0
      %1162 = vmatpush1.msra.mxu0 0.0
      %1163 = vmatprep.subr.mxu0 0.0
      %1164 = vmatpush1.msra.mxu0 0.0
      %1165 = vmatprep.subr.mxu0 0.0
      %1166 = vmatpush1.msra.mxu0 0.0
      %1167 = vmatprep.subr.mxu0 0.0
      %1168 = vmatpush1.msra.mxu0 0.0
      %1169 = vmatprep.subr.mxu0 0.0
      %1170 = vmatpush1.msra.mxu0 0.0
      %1171 = vmatprep.subr.mxu0 0.0
      %1172 = vmatpush1.msra.mxu0 0.0
      %1173 = vmatprep.subr.mxu0 0.0
      %1174 = vmatpush1.msra.mxu0 0.0
      %1175 = vmatprep.subr.mxu0 0.0
      %1176 = vmatpush1.msra.mxu0 0.0
      %1177 = vmatprep.subr.mxu0 0.0
      %1178 = vmatpush1.msra.mxu0 0.0
      %1179 = vmatprep.subr.mxu0 0.0
      %1180 = vmatpush1.msra.mxu0 0.0
      %1181 = vmatprep.mubr.f32.mxu0 0.0
      %1182 = vmatmul.mubr.f32.gmra.mrb[0].mxu0 %v1110
      %v1183 = vpop.f32.mrb[0].mxu0
      %v1184 = vadd.f32 0.0, %v1183
      %v1185 = vpop.f32.mrb[0].mxu0
      %1186 = vmatprep.mubr.f32.mxu0 0.0
      %1187 = vmatmul.mubr.f32.gmra.mrb[0].mxu0 %v1113
      %v1188 = vpop.f32.mrb[0].mxu0
      %v1189 = vadd.f32 0.0, %v1188
      %v1190 = vpop.f32.mrb[0].mxu0
      %1191 = vdwg.mxu0
      %1192 = vrot.lane.b32.xlu0 %v782, 112
      %v1193 = vpop.permute.xlu0 %1192
      %1194 = vrot.lane.b32.xlu0 %v785, 112
      %v1195 = vpop.permute.xlu0 %1194
      %1196 = vrot.lane.b32.xlu0 %v782, 80
      %v1197 = vpop.permute.xlu0 %1196
      %1198 = vrot.lane.b32.xlu0 %v785, 80
      %v1199 = vpop.permute.xlu0 %1198
      %v1200 = vsel %vm794, %v1193, 0
      %v1202 = vsel %vm794, %v1195, 0
      %v1204 = vsel %vm794, %v1197, 0
      %v1206 = vsel %vm794, %v1199, 0
      %1208 = vmatprep.subr.mxu0 0.0
      %1209 = vmatpush1.xpose.msra.mxu0 %v1204
      %1210 = vmatprep.subr.mxu0 0.0
      %1211 = vmatpush1.xpose.msra.mxu0 %v1206
      %1212 = vmatprep.subr.mxu0 0.0
      %1213 = vmatpush1.xpose.msra.mxu0 0.0
      %1214 = vmatprep.subr.mxu0 0.0
      %1215 = vmatpush1.xpose.msra.mxu0 0.0
      %1216 = vmatprep.subr.mxu0 0.0
      %1217 = vmatpush1.xpose.msra.mxu0 0.0
      %1218 = vmatprep.subr.mxu0 0.0
      %1219 = vmatpush1.xpose.msra.mxu0 0.0
      %1220 = vmatprep.subr.mxu0 0.0
      %1221 = vmatpush1.xpose.msra.mxu0 0.0
      %1222 = vmatprep.subr.mxu0 0.0
      %1223 = vmatpush1.xpose.msra.mxu0 0.0
      %1224 = vmatprep.subr.mxu0 0.0
      %1225 = vmatpush1.xpose.msra.mxu0 0.0
      %1226 = vmatprep.subr.mxu0 0.0
      %1227 = vmatpush1.xpose.msra.mxu0 0.0
      %1228 = vmatprep.subr.mxu0 0.0
      %1229 = vmatpush1.xpose.msra.mxu0 0.0
      %1230 = vmatprep.subr.mxu0 0.0
      %1231 = vmatpush1.xpose.msra.mxu0 0.0
      %1232 = vmatprep.subr.mxu0 0.0
      %1233 = vmatpush1.xpose.msra.mxu0 0.0
      %1234 = vmatprep.subr.mxu0 0.0
      %1235 = vmatpush1.xpose.msra.mxu0 0.0
      %1236 = vmatprep.subr.mxu0 0.0
      %1237 = vmatpush1.xpose.msra.mxu0 0.0
      %1238 = vmatprep.subr.mxu0 0.0
      %1239 = vmatpush1.xpose.msra.mxu0 0.0
      %1240 = vmatprep.subr.mxu0 0.0
      %1241 = vmatpush1.xpose.msra.mxu0 0.0
      %1242 = vmatprep.subr.mxu0 0.0
      %1243 = vmatpush1.xpose.msra.mxu0 0.0
      %1244 = vmatprep.subr.mxu0 0.0
      %1245 = vmatpush1.xpose.msra.mxu0 0.0
      %1246 = vmatprep.subr.mxu0 0.0
      %1247 = vmatpush1.xpose.msra.mxu0 0.0
      %1248 = vmatprep.subr.mxu0 0.0
      %1249 = vmatpush1.xpose.msra.mxu0 0.0
      %1250 = vmatprep.subr.mxu0 0.0
      %1251 = vmatpush1.xpose.msra.mxu0 0.0
      %1252 = vmatprep.subr.mxu0 0.0
      %1253 = vmatpush1.xpose.msra.mxu0 0.0
      %1254 = vmatprep.subr.mxu0 0.0
      %1255 = vmatpush1.xpose.msra.mxu0 0.0
      %1256 = vmatprep.subr.mxu0 0.0
      %1257 = vmatpush1.xpose.msra.mxu0 0.0
      %1258 = vmatprep.subr.mxu0 0.0
      %1259 = vmatpush1.xpose.msra.mxu0 0.0
      %1260 = vmatprep.subr.mxu0 0.0
      %1261 = vmatpush1.xpose.msra.mxu0 0.0
      %1262 = vmatprep.subr.mxu0 0.0
      %1263 = vmatpush1.xpose.msra.mxu0 0.0
      %1264 = vmatprep.subr.mxu0 0.0
      %1265 = vmatpush1.xpose.msra.mxu0 0.0
      %1266 = vmatprep.subr.mxu0 0.0
      %1267 = vmatpush1.xpose.msra.mxu0 0.0
      %1268 = vmatprep.subr.mxu0 0.0
      %1269 = vmatpush1.xpose.msra.mxu0 0.0
      %1270 = vmatprep.subr.mxu0 0.0
      %1271 = vmatpush1.xpose.msra.mxu0 0.0
      %1272 = vmatprep.mubr.f32.mxu0 0.0
      %1273 = vmatmul.mubr.f32.gmra.mrb[0].mxu0 %v1200
      %v1274 = vpop.f32.mrb[0].mxu0
      %v1275 = vadd.f32 %v671, %v1274
      %v1276 = vpop.f32.mrb[0].mxu0
      %1277 = vmatprep.mubr.f32.mxu0 0.0
      %1278 = vmatmul.mubr.f32.gmra.mrb[0].mxu0 %v1202
      %v1279 = vpop.f32.mrb[0].mxu0
      %v1280 = vadd.f32 %v672, %v1279
      %v1281 = vpop.f32.mrb[0].mxu0
      %1282 = vdwg.mxu0
      %v1283 = vsel %vm878, %v1275, -inf
      %1284 = vmax.xlane.f32.xlu0 %v1283
      %v1285 = vpop.xlane.xlu0 %1284
      %v1286 = vsel %vm882, %v1280, -inf
      %1287 = vmax.xlane.f32.xlu0 %v1286
      %v1288 = vpop.xlane.xlu0 %1287
      %v1289 = vsub.f32 %v1275, %v1285
      %v1290 = vsub.f32 %v1280, %v1288
      %v1291 = vmul.f32 %v1289, 1.442695
      %v1292 = vpow.pop %v1291
      %v1293 = vmul.f32 %v1290, 1.442695
      %v1294 = vpow.pop %v1293
      %v1295 = vsel %vm878, %v1292, 0.0
      %1296 = vadd.xlane.f32.xlu0 %v1295
      %v1297 = vpop.xlane.xlu0 %1296
      %v1298 = vsel %vm882, %v1294, 0.0
      %1299 = vadd.xlane.f32.xlu0 %v1298
      %v1300 = vpop.xlane.xlu0 %1299
      %v1301 = vrcp.pop %v1297
      %v1302 = vrcp.pop %v1300
      %v1303 = vmul.f32 %v1292, %v1301
      %v1304 = vmul.f32 %v1294, %v1302
      %1305 = vrot.lane.b32.xlu0 %v782, 48
      %v1306 = vpop.permute.xlu0 %1305
      %1307 = vrot.lane.b32.xlu0 %v785, 48
      %v1308 = vpop.permute.xlu0 %1307
      %v1311 = vsel %vm878, %v1303, 0
      %v1314 = vsel %vm878, %v1304, 0
      %v1316 = vsel %vm913, %v1308, 0
      %1318 = vmatprep.subr.mxu0 0.0
      %1319 = vmatpush1.msra.mxu0 %v1306
      %1320 = vmatprep.subr.mxu0 0.0
      %1321 = vmatpush1.msra.mxu0 %v1316
      %1322 = vmatprep.subr.mxu0 0.0
      %1323 = vmatpush1.msra.mxu0 0.0
      %1324 = vmatprep.subr.mxu0 0.0
      %1325 = vmatpush1.msra.mxu0 0.0
      %1326 = vmatprep.subr.mxu0 0.0
      %1327 = vmatpush1.msra.mxu0 0.0
      %1328 = vmatprep.subr.mxu0 0.0
      %1329 = vmatpush1.msra.mxu0 0.0
      %1330 = vmatprep.subr.mxu0 0.0
      %1331 = vmatpush1.msra.mxu0 0.0
      %1332 = vmatprep.subr.mxu0 0.0
      %1333 = vmatpush1.msra.mxu0 0.0
      %1334 = vmatprep.subr.mxu0 0.0
      %1335 = vmatpush1.msra.mxu0 0.0
      %1336 = vmatprep.subr.mxu0 0.0
      %1337 = vmatpush1.msra.mxu0 0.0
      %1338 = vmatprep.subr.mxu0 0.0
      %1339 = vmatpush1.msra.mxu0 0.0
      %1340 = vmatprep.subr.mxu0 0.0
      %1341 = vmatpush1.msra.mxu0 0.0
      %1342 = vmatprep.subr.mxu0 0.0
      %1343 = vmatpush1.msra.mxu0 0.0
      %1344 = vmatprep.subr.mxu0 0.0
      %1345 = vmatpush1.msra.mxu0 0.0
      %1346 = vmatprep.subr.mxu0 0.0
      %1347 = vmatpush1.msra.mxu0 0.0
      %1348 = vmatprep.subr.mxu0 0.0
      %1349 = vmatpush1.msra.mxu0 0.0
      %1350 = vmatprep.subr.mxu0 0.0
      %1351 = vmatpush1.msra.mxu0 0.0
      %1352 = vmatprep.subr.mxu0 0.0
      %1353 = vmatpush1.msra.mxu0 0.0
      %1354 = vmatprep.subr.mxu0 0.0
      %1355 = vmatpush1.msra.mxu0 0.0
      %1356 = vmatprep.subr.mxu0 0.0
      %1357 = vmatpush1.msra.mxu0 0.0
      %1358 = vmatprep.subr.mxu0 0.0
      %1359 = vmatpush1.msra.mxu0 0.0
      %1360 = vmatprep.subr.mxu0 0.0
      %1361 = vmatpush1.msra.mxu0 0.0
      %1362 = vmatprep.subr.mxu0 0.0
      %1363 = vmatpush1.msra.mxu0 0.0
      %1364 = vmatprep.subr.mxu0 0.0
      %1365 = vmatpush1.msra.mxu0 0.0
      %1366 = vmatprep.subr.mxu0 0.0
      %1367 = vmatpush1.msra.mxu0 0.0
      %1368 = vmatprep.subr.mxu0 0.0
      %1369 = vmatpush1.msra.mxu0 0.0
      %1370 = vmatprep.subr.mxu0 0.0
      %1371 = vmatpush1.msra.mxu0 0.0
      %1372 = vmatprep.subr.mxu0 0.0
      %1373 = vmatpush1.msra.mxu0 0.0
      %1374 = vmatprep.subr.mxu0 0.0
      %1375 = vmatpush1.msra.mxu0 0.0
      %1376 = vmatprep.subr.mxu0 0.0
      %1377 = vmatpush1.msra.mxu0 0.0
      %1378 = vmatprep.subr.mxu0 0.0
      %1379 = vmatpush1.msra.mxu0 0.0
      %1380 = vmatprep.subr.mxu0 0.0
      %1381 = vmatpush1.msra.mxu0 0.0
      %1382 = vmatprep.mubr.f32.mxu0 0.0
      %1383 = vmatmul.mubr.f32.gmra.mrb[0].mxu0 %v1311
      %v1384 = vpop.f32.mrb[0].mxu0
      %v1385 = vadd.f32 0.0, %v1384
      %v1386 = vpop.f32.mrb[0].mxu0
      %1387 = vmatprep.mubr.f32.mxu0 0.0
      %1388 = vmatmul.mubr.f32.gmra.mrb[0].mxu0 %v1314
      %v1389 = vpop.f32.mrb[0].mxu0
      %v1390 = vadd.f32 0.0, %v1389
      %v1391 = vpop.f32.mrb[0].mxu0
      %1392 = vdwg.mxu0
      %1393 = vrot.lane.b32.xlu0 %v782, 104
      %v1394 = vpop.permute.xlu0 %1393
      %1395 = vrot.lane.b32.xlu0 %v785, 104
      %v1396 = vpop.permute.xlu0 %1395
      %1397 = vrot.lane.b32.xlu0 %v782, 72
      %v1398 = vpop.permute.xlu0 %1397
      %1399 = vrot.lane.b32.xlu0 %v785, 72
      %v1400 = vpop.permute.xlu0 %1399
      %v1401 = vsel %vm794, %v1394, 0
      %v1403 = vsel %vm794, %v1396, 0
      %v1405 = vsel %vm794, %v1398, 0
      %v1407 = vsel %vm794, %v1400, 0
      %1409 = vmatprep.subr.mxu0 0.0
      %1410 = vmatpush1.xpose.msra.mxu0 %v1405
      %1411 = vmatprep.subr.mxu0 0.0
      %1412 = vmatpush1.xpose.msra.mxu0 %v1407
      %1413 = vmatprep.subr.mxu0 0.0
      %1414 = vmatpush1.xpose.msra.mxu0 0.0
      %1415 = vmatprep.subr.mxu0 0.0
      %1416 = vmatpush1.xpose.msra.mxu0 0.0
      %1417 = vmatprep.subr.mxu0 0.0
      %1418 = vmatpush1.xpose.msra.mxu0 0.0
      %1419 = vmatprep.subr.mxu0 0.0
      %1420 = vmatpush1.xpose.msra.mxu0 0.0
      %1421 = vmatprep.subr.mxu0 0.0
      %1422 = vmatpush1.xpose.msra.mxu0 0.0
      %1423 = vmatprep.subr.mxu0 0.0
      %1424 = vmatpush1.xpose.msra.mxu0 0.0
      %1425 = vmatprep.subr.mxu0 0.0
      %1426 = vmatpush1.xpose.msra.mxu0 0.0
      %1427 = vmatprep.subr.mxu0 0.0
      %1428 = vmatpush1.xpose.msra.mxu0 0.0
      %1429 = vmatprep.subr.mxu0 0.0
      %1430 = vmatpush1.xpose.msra.mxu0 0.0
      %1431 = vmatprep.subr.mxu0 0.0
      %1432 = vmatpush1.xpose.msra.mxu0 0.0
      %1433 = vmatprep.subr.mxu0 0.0
      %1434 = vmatpush1.xpose.msra.mxu0 0.0
      %1435 = vmatprep.subr.mxu0 0.0
      %1436 = vmatpush1.xpose.msra.mxu0 0.0
      %1437 = vmatprep.subr.mxu0 0.0
      %1438 = vmatpush1.xpose.msra.mxu0 0.0
      %1439 = vmatprep.subr.mxu0 0.0
      %1440 = vmatpush1.xpose.msra.mxu0 0.0
      %1441 = vmatprep.subr.mxu0 0.0
      %1442 = vmatpush1.xpose.msra.mxu0 0.0
      %1443 = vmatprep.subr.mxu0 0.0
      %1444 = vmatpush1.xpose.msra.mxu0 0.0
      %1445 = vmatprep.subr.mxu0 0.0
      %1446 = vmatpush1.xpose.msra.mxu0 0.0
      %1447 = vmatprep.subr.mxu0 0.0
      %1448 = vmatpush1.xpose.msra.mxu0 0.0
      %1449 = vmatprep.subr.mxu0 0.0
      %1450 = vmatpush1.xpose.msra.mxu0 0.0
      %1451 = vmatprep.subr.mxu0 0.0
      %1452 = vmatpush1.xpose.msra.mxu0 0.0
      %1453 = vmatprep.subr.mxu0 0.0
      %1454 = vmatpush1.xpose.msra.mxu0 0.0
      %1455 = vmatprep.subr.mxu0 0.0
      %1456 = vmatpush1.xpose.msra.mxu0 0.0
      %1457 = vmatprep.subr.mxu0 0.0
      %1458 = vmatpush1.xpose.msra.mxu0 0.0
      %1459 = vmatprep.subr.mxu0 0.0
      %1460 = vmatpush1.xpose.msra.mxu0 0.0
      %1461 = vmatprep.subr.mxu0 0.0
      %1462 = vmatpush1.xpose.msra.mxu0 0.0
      %1463 = vmatprep.subr.mxu0 0.0
      %1464 = vmatpush1.xpose.msra.mxu0 0.0
      %1465 = vmatprep.subr.mxu0 0.0
      %1466 = vmatpush1.xpose.msra.mxu0 0.0
      %1467 = vmatprep.subr.mxu0 0.0
      %1468 = vmatpush1.xpose.msra.mxu0 0.0
      %1469 = vmatprep.subr.mxu0 0.0
      %1470 = vmatpush1.xpose.msra.mxu0 0.0
      %1471 = vmatprep.subr.mxu0 0.0
      %1472 = vmatpush1.xpose.msra.mxu0 0.0
      %1473 = vmatprep.mubr.f32.mxu0 0.0
      %1474 = vmatmul.mubr.f32.gmra.mrb[0].mxu0 %v1401
      %v1475 = vpop.f32.mrb[0].mxu0
      %v1476 = vadd.f32 %v671, %v1475
      %v1477 = vpop.f32.mrb[0].mxu0
      %1478 = vmatprep.mubr.f32.mxu0 0.0
      %1479 = vmatmul.mubr.f32.gmra.mrb[0].mxu0 %v1403
      %v1480 = vpop.f32.mrb[0].mxu0
      %v1481 = vadd.f32 %v672, %v1480
      %v1482 = vpop.f32.mrb[0].mxu0
      %1483 = vdwg.mxu0
      %v1484 = vsel %vm878, %v1476, -inf
      %1485 = vmax.xlane.f32.xlu0 %v1484
      %v1486 = vpop.xlane.xlu0 %1485
      %v1487 = vsel %vm882, %v1481, -inf
      %1488 = vmax.xlane.f32.xlu0 %v1487
      %v1489 = vpop.xlane.xlu0 %1488
      %v1490 = vsub.f32 %v1476, %v1486
      %v1491 = vsub.f32 %v1481, %v1489
      %v1492 = vmul.f32 %v1490, 1.442695
      %v1493 = vpow.pop %v1492
      %v1494 = vmul.f32 %v1491, 1.442695
      %v1495 = vpow.pop %v1494
      %v1496 = vsel %vm878, %v1493, 0.0
      %1497 = vadd.xlane.f32.xlu0 %v1496
      %v1498 = vpop.xlane.xlu0 %1497
      %v1499 = vsel %vm882, %v1495, 0.0
      %1500 = vadd.xlane.f32.xlu0 %v1499
      %v1501 = vpop.xlane.xlu0 %1500
      %v1502 = vrcp.pop %v1498
      %v1503 = vrcp.pop %v1501
      %v1504 = vmul.f32 %v1493, %v1502
      %v1505 = vmul.f32 %v1495, %v1503
      %1506 = vrot.lane.b32.xlu0 %v782, 40
      %v1507 = vpop.permute.xlu0 %1506
      %1508 = vrot.lane.b32.xlu0 %v785, 40
      %v1509 = vpop.permute.xlu0 %1508
      %v1512 = vsel %vm878, %v1504, 0
      %v1515 = vsel %vm878, %v1505, 0
      %v1517 = vsel %vm913, %v1509, 0
      %1519 = vmatprep.subr.mxu0 0.0
      %1520 = vmatpush1.msra.mxu0 %v1507
      %1521 = vmatprep.subr.mxu0 0.0
      %1522 = vmatpush1.msra.mxu0 %v1517
      %1523 = vmatprep.subr.mxu0 0.0
      %1524 = vmatpush1.msra.mxu0 0.0
      %1525 = vmatprep.subr.mxu0 0.0
      %1526 = vmatpush1.msra.mxu0 0.0
      %1527 = vmatprep.subr.mxu0 0.0
      %1528 = vmatpush1.msra.mxu0 0.0
      %1529 = vmatprep.subr.mxu0 0.0
      %1530 = vmatpush1.msra.mxu0 0.0
      %1531 = vmatprep.subr.mxu0 0.0
      %1532 = vmatpush1.msra.mxu0 0.0
      %1533 = vmatprep.subr.mxu0 0.0
      %1534 = vmatpush1.msra.mxu0 0.0
      %1535 = vmatprep.subr.mxu0 0.0
      %1536 = vmatpush1.msra.mxu0 0.0
      %1537 = vmatprep.subr.mxu0 0.0
      %1538 = vmatpush1.msra.mxu0 0.0
      %1539 = vmatprep.subr.mxu0 0.0
      %1540 = vmatpush1.msra.mxu0 0.0
      %1541 = vmatprep.subr.mxu0 0.0
      %1542 = vmatpush1.msra.mxu0 0.0
      %1543 = vmatprep.subr.mxu0 0.0
      %1544 = vmatpush1.msra.mxu0 0.0
      %1545 = vmatprep.subr.mxu0 0.0
      %1546 = vmatpush1.msra.mxu0 0.0
      %1547 = vmatprep.subr.mxu0 0.0
      %1548 = vmatpush1.msra.mxu0 0.0
      %1549 = vmatprep.subr.mxu0 0.0
      %1550 = vmatpush1.msra.mxu0 0.0
      %1551 = vmatprep.subr.mxu0 0.0
      %1552 = vmatpush1.msra.mxu0 0.0
      %1553 = vmatprep.subr.mxu0 0.0
      %1554 = vmatpush1.msra.mxu0 0.0
      %1555 = vmatprep.subr.mxu0 0.0
      %1556 = vmatpush1.msra.mxu0 0.0
      %1557 = vmatprep.subr.mxu0 0.0
      %1558 = vmatpush1.msra.mxu0 0.0
      %1559 = vmatprep.subr.mxu0 0.0
      %1560 = vmatpush1.msra.mxu0 0.0
      %1561 = vmatprep.subr.mxu0 0.0
      %1562 = vmatpush1.msra.mxu0 0.0
      %1563 = vmatprep.subr.mxu0 0.0
      %1564 = vmatpush1.msra.mxu0 0.0
      %1565 = vmatprep.subr.mxu0 0.0
      %1566 = vmatpush1.msra.mxu0 0.0
      %1567 = vmatprep.subr.mxu0 0.0
      %1568 = vmatpush1.msra.mxu0 0.0
      %1569 = vmatprep.subr.mxu0 0.0
      %1570 = vmatpush1.msra.mxu0 0.0
      %1571 = vmatprep.subr.mxu0 0.0
      %1572 = vmatpush1.msra.mxu0 0.0
      %1573 = vmatprep.subr.mxu0 0.0
      %1574 = vmatpush1.msra.mxu0 0.0
      %1575 = vmatprep.subr.mxu0 0.0
      %1576 = vmatpush1.msra.mxu0 0.0
      %1577 = vmatprep.subr.mxu0 0.0
      %1578 = vmatpush1.msra.mxu0 0.0
      %1579 = vmatprep.subr.mxu0 0.0
      %1580 = vmatpush1.msra.mxu0 0.0
      %1581 = vmatprep.subr.mxu0 0.0
      %1582 = vmatpush1.msra.mxu0 0.0
      %1583 = vmatprep.mubr.f32.mxu0 0.0
      %1584 = vmatmul.mubr.f32.gmra.mrb[0].mxu0 %v1512
      %v1585 = vpop.f32.mrb[0].mxu0
      %v1586 = vadd.f32 0.0, %v1585
      %v1587 = vpop.f32.mrb[0].mxu0
      %1588 = vmatprep.mubr.f32.mxu0 0.0
      %1589 = vmatmul.mubr.f32.gmra.mrb[0].mxu0 %v1515
      %v1590 = vpop.f32.mrb[0].mxu0
      %v1591 = vadd.f32 0.0, %v1590
      %v1592 = vpop.f32.mrb[0].mxu0
      %1593 = vdwg.mxu0
      %1596 = vrot.lane.b32.xlu0 %v1184, 8
      %v1597 = vpop.permute.xlu0 %1596
      %1598 = vrot.lane.b32.xlu0 %v1189, 8
      %v1599 = vpop.permute.xlu0 %1598
      %1604 = vrot.lane.b32.xlu0 %v1385, 16
      %v1605 = vpop.permute.xlu0 %1604
      %1606 = vrot.lane.b32.xlu0 %v1390, 16
      %v1607 = vpop.permute.xlu0 %1606
      %1612 = vrot.lane.b32.xlu0 %v1586, 24
      %v1613 = vpop.permute.xlu0 %1612
      %1614 = vrot.lane.b32.xlu0 %v1591, 24
      %v1615 = vpop.permute.xlu0 %1614
      %v1618 = vsel %vm794, %v983, %v1597
      %v1619 = vsel %vm794, %v988, %v1599
      %vm1620 = vcmask 130048
      %v1621 = vsel %vm1620, %v1618, %v1605
      %v1622 = vsel %vm1620, %v1619, %v1607
      %vm1623 = vcmask 195584
      %v1624 = vsel %vm1623, %v1621, %v1613
      %v1625 = vsel %vm1623, %v1622, %v1615
      %v1626 = vpack.c.bf16 %v1625, %v1624
      %v1627 = vld [vmem:[%s614] sm:$0xf]
      %v1628 = vld [vmem:[%s614 + $0x4] sm:$0xf]
      %v1629 = vld [vmem:[%s614 + $0x8] sm:$0xf]
      %v1630 = vld [vmem:[%s614 + $0xc] sm:$0xf]
      %v1631 = vld [vmem:[%s617] sm:$0x1]
      %v1633 = vlaneseq
      %v1634 = vshrl.u32 %v1633, 7
      %v1635 = vsub.s32 0, %v1634
      %v1636 = vrot.slane %v1631, %v1635
      %v1642 = vunpack.c.l.b16 %v1627
      %v1643 = vunpack.c.l.b16 %v1628
      %v1644 = vunpack.c.l.b16 %v1629
      %v1645 = vunpack.c.l.b16 %v1630
      %v1646 = vpack.c.b16 %v1643, %v1642
      %v1647 = vpack.c.b16 %v1645, %v1644
      %v1651 = vsel %vm675, %v1626, 0
      %1653 = vmatprep.subr.bf16.mxu0 0
      %1654 = vmatpush1.bf16.msra.mxu0 %v1646
      %1655 = vmatprep.subr.bf16.mxu0 0
      %1656 = vmatpush1.bf16.msra.mxu0 %v1647
      %1657 = vmatprep.subr.bf16.mxu0 0
      %1658 = vmatpush1.bf16.msra.mxu0 0
      %1659 = vmatprep.subr.bf16.mxu0 0
      %1660 = vmatpush1.bf16.msra.mxu0 0
      %1661 = vmatprep.subr.bf16.mxu0 0
      %1662 = vmatpush1.bf16.msra.mxu0 0
      %1663 = vmatprep.subr.bf16.mxu0 0
      %1664 = vmatpush1.bf16.msra.mxu0 0
      %1665 = vmatprep.subr.bf16.mxu0 0
      %1666 = vmatpush1.bf16.msra.mxu0 0
      %1667 = vmatprep.subr.bf16.mxu0 0
      %1668 = vmatpush1.bf16.msra.mxu0 0
      %1669 = vmatprep.subr.bf16.mxu0 0
      %1670 = vmatpush1.bf16.msra.mxu0 0
      %1671 = vmatprep.subr.bf16.mxu0 0
      %1672 = vmatpush1.bf16.msra.mxu0 0
      %1673 = vmatprep.subr.bf16.mxu0 0
      %1674 = vmatpush1.bf16.msra.mxu0 0
      %1675 = vmatprep.subr.bf16.mxu0 0
      %1676 = vmatpush1.bf16.msra.mxu0 0
      %1677 = vmatprep.subr.bf16.mxu0 0
      %1678 = vmatpush1.bf16.msra.mxu0 0
      %1679 = vmatprep.subr.bf16.mxu0 0
      %1680 = vmatpush1.bf16.msra.mxu0 0
      %1681 = vmatprep.subr.bf16.mxu0 0
      %1682 = vmatpush1.bf16.msra.mxu0 0
      %1683 = vmatprep.subr.bf16.mxu0 0
      %1684 = vmatpush1.bf16.msra.mxu0 0
      %1685 = vmatprep.mubr.bf16.mxu0 0
      %1686 = vmatmul.mubr.bf16.gmra.mrb[0].mxu0 %v1651
      %v1687 = vpop.f32.mrb[0].mxu0
      %v1688 = vadd.f32 %v1636, %v1687
      %v1689 = vpop.f32.mrb[0].mxu0
      %v1690 = vpop.f32.mrb[0].mxu0
      %v1691 = vadd.f32 %v1636, %v1690
      %v1692 = vpop.f32.mrb[0].mxu0
      %1693 = vdwg.mxu0
      %v1694 = vadd.f32 %v669, %v1688
      %v1695 = vadd.f32 %v670, %v1691
      %v1696 = vld [vmem:[%s620] sm:$0x1]
      %v1697 = vld [vmem:[%s623] sm:$0x1]
      %v1698 = vsel %vm675, %v1694, 0.0
      %1699 = vadd.xlane.f32.xlu0 %v1698
      %v1700 = vpop.xlane.xlu0 %1699
      %v1701 = vsel %vm679, %v1695, 0.0
      %1702 = vadd.xlane.f32.xlu0 %v1701
      %v1703 = vpop.xlane.xlu0 %1702
      %v1704 = vmul.f32 %v1700, %v683
      %v1705 = vmul.f32 %v1703, %v683
      %v1706 = vsub.f32 %v1694, %v1704
      %v1707 = vsub.f32 %v1695, %v1705
      %v1708 = vmul.f32 %v1706, %v1706
      %v1709 = vmul.f32 %v1707, %v1707
      %v1710 = vsel %vm675, %v1708, 0.0
      %1711 = vadd.xlane.f32.xlu0 %v1710
      %v1712 = vpop.xlane.xlu0 %1711
      %v1713 = vsel %vm679, %v1709, 0.0
      %1714 = vadd.xlane.f32.xlu0 %v1713
      %v1715 = vpop.xlane.xlu0 %1714
      %v1716 = vmul.f32 %v1712, %v683
      %v1717 = vmul.f32 %v1715, %v683
      %v1718 = vadd.f32 %v1716, 1e-05
      %v1719 = vadd.f32 %v1717, 1e-05
      %v1720 = vrsqrt.pop %v1718
      %v1721 = vrsqrt.pop %v1719
      %v1722 = vmul.f32 %v1706, %v1720
      %v1723 = vmul.f32 %v1707, %v1721
      %v1725 = vlaneseq
      %v1726 = vshrl.u32 %v1725, 7
      %v1727 = vsub.s32 0, %v1726
      %v1728 = vrot.slane %v1696, %v1727
      %v1730 = vmul.f32 %v1722, %v1728
      %v1731 = vmul.f32 %v1723, %v1728
      %v1733 = vlaneseq
      %v1734 = vshrl.u32 %v1733, 7
      %v1735 = vsub.s32 0, %v1734
      %v1736 = vrot.slane %v1697, %v1735
      %v1738 = vadd.f32 %v1730, %v1736
      %v1739 = vadd.f32 %v1731, %v1736
      %v1740 = vpack.c.bf16 %v1739, %v1738
      %v1741 = vld [vmem:[%s628] sm:$0xf]
      %v1742 = vld [vmem:[%s628 + $0x4] sm:$0xf]
      %v1743 = vld [vmem:[%s628 + $0x8] sm:$0xf]
      %v1744 = vld [vmem:[%s628 + $0xc] sm:$0xf]
      %v1745 = vld [vmem:[%s631] sm:$0x1]
      %v1747 = vlaneseq
      %v1748 = vshrl.u32 %v1747, 7
      %v1749 = vsub.s32 0, %v1748
      %v1750 = vrot.slane %v1745, %v1749
      %v1756 = vunpack.c.l.b16 %v1741
      %v1757 = vunpack.c.l.b16 %v1742
      %v1758 = vunpack.c.l.b16 %v1743
      %v1759 = vunpack.c.l.b16 %v1744
      %v1760 = vpack.c.b16 %v1757, %v1756
      %v1761 = vpack.c.b16 %v1759, %v1758
      %v1765 = vsel %vm675, %v1740, 0
      %1767 = vmatprep.subr.bf16.mxu0 0
      %1768 = vmatpush1.bf16.msra.mxu0 %v1760
      %1769 = vmatprep.subr.bf16.mxu0 0
      %1770 = vmatpush1.bf16.msra.mxu0 %v1761
      %1771 = vmatprep.subr.bf16.mxu0 0
      %1772 = vmatpush1.bf16.msra.mxu0 0
      %1773 = vmatprep.subr.bf16.mxu0 0
      %1774 = vmatpush1.bf16.msra.mxu0 0
      %1775 = vmatprep.subr.bf16.mxu0 0
      %1776 = vmatpush1.bf16.msra.mxu0 0
      %1777 = vmatprep.subr.bf16.mxu0 0
      %1778 = vmatpush1.bf16.msra.mxu0 0
      %1779 = vmatprep.subr.bf16.mxu0 0
      %1780 = vmatpush1.bf16.msra.mxu0 0
      %1781 = vmatprep.subr.bf16.mxu0 0
      %1782 = vmatpush1.bf16.msra.mxu0 0
      %1783 = vmatprep.subr.bf16.mxu0 0
      %1784 = vmatpush1.bf16.msra.mxu0 0
      %1785 = vmatprep.subr.bf16.mxu0 0
      %1786 = vmatpush1.bf16.msra.mxu0 0
      %1787 = vmatprep.subr.bf16.mxu0 0
      %1788 = vmatpush1.bf16.msra.mxu0 0
      %1789 = vmatprep.subr.bf16.mxu0 0
      %1790 = vmatpush1.bf16.msra.mxu0 0
      %1791 = vmatprep.subr.bf16.mxu0 0
      %1792 = vmatpush1.bf16.msra.mxu0 0
      %1793 = vmatprep.subr.bf16.mxu0 0
      %1794 = vmatpush1.bf16.msra.mxu0 0
      %1795 = vmatprep.subr.bf16.mxu0 0
      %1796 = vmatpush1.bf16.msra.mxu0 0
      %1797 = vmatprep.subr.bf16.mxu0 0
      %1798 = vmatpush1.bf16.msra.mxu0 0
      %1799 = vmatprep.mubr.bf16.mxu0 0
      %1800 = vmatmul.mubr.bf16.gmra.mrb[0].mxu0 %v1765
      %v1801 = vpop.f32.mrb[0].mxu0
      %v1802 = vadd.f32 %v1750, %v1801
      %v1803 = vpop.f32.mrb[0].mxu0
      %v1804 = vpop.f32.mrb[0].mxu0
      %v1805 = vadd.f32 %v1750, %v1804
      %v1806 = vpop.f32.mrb[0].mxu0
      %1807 = vdwg.mxu0
      %v1808 = vmax.f32 %v1802, 0.0
      %v1809 = vmax.f32 %v1805, 0.0
      %v1810 = vpack.c.bf16 %v1809, %v1808
      %v1811 = vld [vmem:[%s636] sm:$0xf]
      %v1812 = vld [vmem:[%s636 + $0x4] sm:$0xf]
      %v1813 = vld [vmem:[%s636 + $0x8] sm:$0xf]
      %v1814 = vld [vmem:[%s636 + $0xc] sm:$0xf]
      %v1815 = vld [vmem:[%s636 + $0x10] sm:$0xf]
      %v1816 = vld [vmem:[%s636 + $0x14] sm:$0xf]
      %v1817 = vld [vmem:[%s636 + $0x18] sm:$0xf]
      %v1818 = vld [vmem:[%s636 + $0x1c] sm:$0xf]
      %v1819 = vld [vmem:[%s636 + $0x20] sm:$0xf]
      %v1820 = vld [vmem:[%s636 + $0x24] sm:$0xf]
      %v1821 = vld [vmem:[%s636 + $0x28] sm:$0xf]
      %v1822 = vld [vmem:[%s636 + $0x2c] sm:$0xf]
      %v1823 = vld [vmem:[%s636 + $0x30] sm:$0xf]
      %v1824 = vld [vmem:[%s636 + $0x34] sm:$0xf]
      %v1825 = vld [vmem:[%s636 + $0x38] sm:$0xf]
      %v1826 = vld [vmem:[%s636 + $0x3c] sm:$0xf]
      %v1827 = vld [vmem:[%s639] sm:$0x1]
      %v1829 = vlaneseq
      %v1830 = vshrl.u32 %v1829, 7
      %v1831 = vsub.s32 0, %v1830
      %v1832 = vrot.slane %v1827, %v1831
      %v1850 = vunpack.c.l.b16 %v1811
      %v1851 = vunpack.c.l.b16 %v1812
      %v1852 = vunpack.c.l.b16 %v1813
      %v1853 = vunpack.c.l.b16 %v1814
      %v1854 = vunpack.c.l.b16 %v1815
      %v1855 = vunpack.c.l.b16 %v1816
      %v1856 = vunpack.c.l.b16 %v1817
      %v1857 = vunpack.c.l.b16 %v1818
      %v1858 = vunpack.c.l.b16 %v1819
      %v1859 = vunpack.c.l.b16 %v1820
      %v1860 = vunpack.c.l.b16 %v1821
      %v1861 = vunpack.c.l.b16 %v1822
      %v1862 = vunpack.c.l.b16 %v1823
      %v1863 = vunpack.c.l.b16 %v1824
      %v1864 = vunpack.c.l.b16 %v1825
      %v1865 = vunpack.c.l.b16 %v1826
      %v1866 = vpack.c.b16 %v1851, %v1850
      %v1867 = vpack.c.b16 %v1853, %v1852
      %v1868 = vpack.c.b16 %v1855, %v1854
      %v1869 = vpack.c.b16 %v1857, %v1856
      %v1870 = vpack.c.b16 %v1859, %v1858
      %v1871 = vpack.c.b16 %v1861, %v1860
      %v1872 = vpack.c.b16 %v1863, %v1862
      %v1873 = vpack.c.b16 %v1865, %v1864
      %1882 = vmatprep.subr.bf16.mxu0 0
      %1883 = vmatpush1.bf16.msra.mxu0 %v1866
      %1884 = vmatprep.subr.bf16.mxu0 0
      %1885 = vmatpush1.bf16.msra.mxu0 %v1867
      %1886 = vmatprep.subr.bf16.mxu0 0
      %1887 = vmatpush1.bf16.msra.mxu0 %v1868
      %1888 = vmatprep.subr.bf16.mxu0 0
      %1889 = vmatpush1.bf16.msra.mxu0 %v1869
      %1890 = vmatprep.subr.bf16.mxu0 0
      %1891 = vmatpush1.bf16.msra.mxu0 %v1870
      %1892 = vmatprep.subr.bf16.mxu0 0
      %1893 = vmatpush1.bf16.msra.mxu0 %v1871
      %1894 = vmatprep.subr.bf16.mxu0 0
      %1895 = vmatpush1.bf16.msra.mxu0 %v1872
      %1896 = vmatprep.subr.bf16.mxu0 0
      %1897 = vmatpush1.bf16.msra.mxu0 %v1873
      %1898 = vmatprep.subr.bf16.mxu0 0
      %1899 = vmatpush1.bf16.msra.mxu0 0
      %1900 = vmatprep.subr.bf16.mxu0 0
      %1901 = vmatpush1.bf16.msra.mxu0 0
      %1902 = vmatprep.subr.bf16.mxu0 0
      %1903 = vmatpush1.bf16.msra.mxu0 0
      %1904 = vmatprep.subr.bf16.mxu0 0
      %1905 = vmatpush1.bf16.msra.mxu0 0
      %1906 = vmatprep.subr.bf16.mxu0 0
      %1907 = vmatpush1.bf16.msra.mxu0 0
      %1908 = vmatprep.subr.bf16.mxu0 0
      %1909 = vmatpush1.bf16.msra.mxu0 0
      %1910 = vmatprep.subr.bf16.mxu0 0
      %1911 = vmatpush1.bf16.msra.mxu0 0
      %1912 = vmatprep.subr.bf16.mxu0 0
      %1913 = vmatpush1.bf16.msra.mxu0 0
      %1914 = vmatprep.mubr.bf16.mxu0 0
      %1915 = vmatmul.mubr.bf16.gmra.mrb[0].mxu0 %v1810
      %v1916 = vpop.f32.mrb[0].mxu0
      %v1917 = vadd.f32 %v1832, %v1916
      %v1918 = vpop.f32.mrb[0].mxu0
      %v1919 = vpop.f32.mrb[0].mxu0
      %v1920 = vadd.f32 %v1832, %v1919
      %v1921 = vpop.f32.mrb[0].mxu0
      %1922 = vdwg.mxu0
      %v1923 = vadd.f32 %v1694, %v1917
      %v1924 = vadd.f32 %v1695, %v1920
      %1925 = vst.msk [vmem:[#allocation2] sm:$0xff] %vm675, %v1923
      %1926 = vst.msk [vmem:[#allocation2 + $0x8] sm:$0x1] %vm679, %v1924
      %p1927 = scmp.eq.s32.totalorder %s29, 1
      // Predicated region
      $region77: #{gpt_forward.2} parent=71 // pred_check
        %p1928 = pneg %p1927
      $region78: #{gpt_forward.2} parent=71 // pred_check_branch
        %1930 = sbr.rel (%p1928) target = $region80
      $region79: #{gpt_forward.2} parent=71 // pred_region
        %v1931 = vpack.c.bf16 %v1924, %v1923
        %v1933 = vunpack.c.l.b16 %v1931
        %v1934 = vunpack.c.h.b16 %v1931
        %v1935 = vpack.c.b16 %v1933, %v1933
        %v1936 = vpack.c.b16 %v1934, %v1934
        %vm1939 = vcmask 257024
        %1940 = vst.msk [vmem:[%s644] sm:$0xf] %vm1939, %v1935
        %vm1941 = vcmask 253952
        %vm1942 = vsmask.f32 256
        %vm1943 = vmand %vm1941, %vm1942
        %v1944 = vld [vmem:[%s644 + $0x4] sm:$0x1]
        %v1945 = vsel %vm1943, %v1936, %v1944
        %1946 = vst [vmem:[%s644 + $0x4] sm:$0x1] %v1945
      $region80: #{gpt_forward.2} parent=71 // pred_fallthru
        _
      %p1947 = scmp.lt.s32.totalorder %s28, 1
      %s1948 = scalar_select %p1947, %s28, 1
      %s1949 = smul.addr %s1948, 2
      %s1950 = smul.addr %s1949, 4
      %s1951 = scalar_lea.vmem %s13, %s1950
      // Predicated region
      $region81: #{gpt_forward.2} parent=71 // pred_check
        %p1952 = pneg %p392
      $region82: #{gpt_forward.2} parent=71 // pred_check_branch
        %1954 = sbr.rel (%p1952) target = $region84
      $region83: #{gpt_forward.2} parent=71 // pred_region
        _
      $region84: #{gpt_forward.2} parent=71 // pred_fallthru
        _
    $region72: #{gpt_forward.2} parent=5 // pred_fallthru
      _
    %p1955 = scmp.le.s32.totalorder 2, %s19
    // Predicated region
    $region85: #{gpt_forward.2} parent=5 // pred_check
      %p1956 = pneg %p1955
    $region86: #{gpt_forward.2} parent=5 // pred_check_branch
      %1958 = sbr.rel (%p1956) target = $region88
    $region87: #{gpt_forward.2} parent=5 // pred_region
      %s1959 = ssub.s32 %s19, 2
      // Predicated region
      $region89: #{gpt_forward.2} parent=87 // pred_check
        %p1960 = pneg %p398
      $region90: #{gpt_forward.2} parent=87 // pred_check_branch
        %1962 = sbr.rel (%p1960) target = $region92
      $region91: #{gpt_forward.2} parent=87 // pred_region
        %p1963 = scmp.lt.s32.totalorder %s30, 1
        %s1964 = scalar_select %p1963, %s30, 1
        %s1965 = smul.addr %s1964, 2
        %s1966 = smul.addr %s1965, 4
        %s1967 = scalar_lea.vmem %s13, %s1966
      $region92: #{gpt_forward.2} parent=87 // pred_fallthru
        _
    $region88: #{gpt_forward.2} parent=5 // pred_fallthru
      _
  $region6: #{gpt_forward.2} parent=0 // loop_footer
    %s23 = sadd.s32 1, %s19
  $region7: #{gpt_forward.2} parent=0 // loop_footer_branch
    %18 = sbr.rel target = $region3
  $region8: #{gpt_forward.2} parent=0 // loop_exit
    _

</llo_original>
